<compile_context>
chip_gen: v5e
topology: v5e:2x2
jax: 0.10.0
libtpu: 0.0.40
codegen_flags: <defaults>
</compile_context>

<pallas_src>
import jax
import jax.numpy as jnp
from jax import lax
from jax.experimental import pallas as pl
from jax.experimental.pallas import tpu as pltpu


# ------------------------------ Pallas kernel -------------------------------

def _shufflev2_down_kernel(xm_ref, xh_ref, wdl_ref, wr1_ref, br1_ref, wdr_ref,
                           wlT_ref, wrT_ref, bT_ref, o_ref, xs_ref, r_ref):
    """Fused ShuffleV2DownSampling for TH output rows of one image.

    xm_ref : [1, 2, TH, 2, Wp2p, Cin]  parity-split padded input (main pairs)
    xh_ref : [1, 2, 1,  2, Wp2p, Cin]  +1 row-pair halo (3x3 overlap)
    wdl_ref: [9, Cin]   left depthwise taps (BN scale folded)
    wr1_ref: [Cin, r_ch], br1_ref: [1, r_ch]   right 1x1 (+BN folded)
    wdr_ref: [9, r_ch]  right depthwise taps (BN scale folded)
    wlT_ref: [Cout, Cin], wrT_ref: [Cout, r_ch], bT_ref: [Cout, 1]
             final pointwise convs, pre-permuted to shuffled channel order
    o_ref  : [1, Cout, TH*Wo]  channel-major output tile (NCHW, HW flattened)
    xs_ref : VMEM scratch [2, TH+1, 2, Wp2p, Cin]
    r_ref  : VMEM scratch [2, TH+1, 2, Wp2p, r_ch]
    """
    f32 = jnp.float32
    TH = xm_ref.shape[2]
    Wp2p = xm_ref.shape[4]
    Cin = xm_ref.shape[5]
    r_ch = r_ref.shape[4]
    Wo = o_ref.shape[2] // TH

    # Assemble the (TH+1) row-pair padded tile (main + halo) once in VMEM.
    xs_ref[:, 0:TH, :, :, :] = xm_ref[0].astype(f32)
    xs_ref[:, TH:TH + 1, :, :, :] = xh_ref[0].astype(f32)

    def dw3x3_s2(src_ref, w_ref):
        # 3x3 stride-2 depthwise conv on the parity-split padded tile.
        # src_ref[pr, i, pc, j, c] == padded(2*i + pr, 2*j + pc, c), so every
        # tap is a contiguous static slice (no strided loads, no relayout).
        C = src_ref.shape[-1]
        w = w_ref[...].astype(f32)                       # (9, C)
        acc = jnp.zeros((TH, Wo, C), f32)
        for kh in range(3):
            dh, pr = divmod(kh, 2)
            for kw in range(3):
                dc, pc = divmod(kw, 2)
                tap = src_ref[pr, dh:dh + TH, pc, dc:dc + Wo, :]
                wk = w[kh * 3 + kw:kh * 3 + kw + 1, :].reshape(1, 1, C)
                acc = acc + tap * wk
        return acc.reshape(TH * Wo, C)

    # ---------------- left branch: depthwise 3x3 s2 (BN folded) --------------
    h_l = dw3x3_s2(xs_ref, wdl_ref)                      # (TH*Wo, Cin)

    # ------- right branch: 1x1 conv + BN + hswish on the padded tile ---------
    n_pos = 2 * (TH + 1) * 2 * Wp2p
    xf = xs_ref[...].reshape(n_pos, Cin)
    rf = jnp.dot(xf, wr1_ref[...].astype(f32), preferred_element_type=f32)
    rf = rf + br1_ref[...].astype(f32)
    rf = rf * jnp.clip(rf + 3.0, 0.0, 6.0) * (1.0 / 6.0)       # Hardswish
    r_ref[...] = rf.reshape(2, TH + 1, 2, Wp2p, r_ch)
    # Re-establish the zero padding of r that the 3x3 taps actually read:
    #   padded column 0 == (pc=0, j=0)
    r_ref[:, :, 0:1, 0:1, :] = jnp.zeros((2, TH + 1, 1, 1, r_ch), f32)
    #   padded row 0 == (pr=0, pair 0), only present in the first row tile
    @pl.when(pl.program_id(1) == 0)
    def _():
        r_ref[0:1, 0:1, :, :, :] = jnp.zeros((1, 1, 2, Wp2p, r_ch), f32)

    h_r = dw3x3_s2(r_ref, wdr_ref)                       # (TH*Wo, r_ch)

    # --- both pointwise convs + concat + channel shuffle as two MXU matmuls --
    # Contract lhs dim 1 with rhs dim 1 -> result is already channel-major.
    dn = (((1,), (1,)), ((), ()))
    y = lax.dot_general(wlT_ref[...].astype(f32), h_l, dn,
                        preferred_element_type=f32)
    y = y + lax.dot_general(wrT_ref[...].astype(f32), h_r, dn,
                            preferred_element_type=f32)
    y = y + bT_ref[...].astype(f32)                      # (Cout, 1) broadcast
    y = y * jnp.clip(y + 3.0, 0.0, 6.0) * (1.0 / 6.0)    # Hardswish
    o_ref[0] = y.astype(o_ref.dtype)                     # (Cout, TH*Wo)


# -------------------------------- wrapper -----------------------------------

def _pick_row_tile(Ho, Wo):
    # Row tile keeps per-step VMEM bounded (important on v7x) while keeping the
    # flattened HW store dim lane-dense (multiple of 128) or the full extent.
    for th in (8, 16, 32):
        if th < Ho and Ho % th == 0 and (th * Wo) % 128 == 0:
            return th
    return Ho


def shuffle_v2_downsampling(x_nchw, p):
    """ShuffleV2DownSampling forward. x: [B, Cin, H, W] -> [B, Cout, H/2, W/2]."""
    B, Cin, H, W = x_nchw.shape
    assert H % 2 == 0 and W % 2 == 0, "stride-2 kernel expects even H, W"
    Cout = p["wlT"].shape[0]
    r_ch = p["wr1"].shape[1]
    assert p["wr1"].shape[0] == Cin

    Ho, Wo = H // 2, W // 2
    HP2 = Ho + 1                          # padded row pairs
    Wp2p = ((Wo + 1 + 7) // 8) * 8        # padded col pairs, rounded to 8
    TH = _pick_row_tile(Ho, Wo)
    NT = Ho // TH

    # Layout glue (one XLA copy of the input): NCHW -> NHWC, zero pad, and
    # split row/col parity:  x_ps[b, pr, i, pc, j, c] = xpad[b, 2i+pr, 2j+pc, c]
    x = jnp.transpose(x_nchw, (0, 2, 3, 1))
    xp = jnp.pad(x, ((0, 0), (1, 1), (1, 2 * Wp2p - W - 1), (0, 0)))
    x_ps = xp.reshape(B, HP2, 2, Wp2p, 2, Cin).transpose(0, 2, 1, 4, 3, 5)

    out = pl.pallas_call(
        _shufflev2_down_kernel,
        out_shape=jax.ShapeDtypeStruct((B, Cout, Ho * Wo), x_nchw.dtype),
        grid=(B, NT),
        in_specs=[
            # main row-pair tile + 1-pair halo of the same array (3x3 overlap)
            pl.BlockSpec((1, 2, TH, 2, Wp2p, Cin),
                         lambda b, t: (b, 0, t, 0, 0, 0)),
            pl.BlockSpec((1, 2, 1, 2, Wp2p, Cin),
                         lambda b, t: (b, 0, t * TH + TH, 0, 0, 0)),
            pl.BlockSpec((9, Cin), lambda b, t: (0, 0)),
            pl.BlockSpec((Cin, r_ch), lambda b, t: (0, 0)),
            pl.BlockSpec((1, r_ch), lambda b, t: (0, 0)),
            pl.BlockSpec((9, r_ch), lambda b, t: (0, 0)),
            pl.BlockSpec((Cout, Cin), lambda b, t: (0, 0)),
            pl.BlockSpec((Cout, r_ch), lambda b, t: (0, 0)),
            pl.BlockSpec((Cout, 1), lambda b, t: (0, 0)),
        ],
        out_specs=pl.BlockSpec((1, Cout, TH * Wo), lambda b, t: (b, 0, t)),
        scratch_shapes=[
            pltpu.VMEM((2, TH + 1, 2, Wp2p, Cin), jnp.float32),
            pltpu.VMEM((2, TH + 1, 2, Wp2p, r_ch), jnp.float32),
        ],
        compiler_params=pltpu.CompilerParams(
            dimension_semantics=("parallel", "parallel")),
    )(x_ps, x_ps, p["dwl"], p["wr1"], p["br1"], p["dwr"],
      p["wlT"], p["wrT"], p["bT"])

    # Kernel already wrote shuffled NCHW with HW flattened -> free reshape.
    return out.reshape(B, Cout, Ho, Wo)


# -------------------- parameters (raw) + BN / shuffle folding ----------------

def init_raw_params(key, in_channels, out_channels, c_ratio=0.5):
    l_ch = int(in_channels * c_ratio)
    r_ch = in_channels - l_ch
    o_r_ch = out_channels - l_ch
    ks = jax.random.split(key, 10)

    def bn(k, c):
        k1, k2, k3, k4 = jax.random.split(k, 4)
        gamma = 1.0 + 0.1 * jax.random.normal(k1, (c,), jnp.float32)
        beta = 0.1 * jax.random.normal(k2, (c,), jnp.float32)
        mean = 0.1 * jax.random.normal(k3, (c,), jnp.float32)
        var = jax.random.uniform(k4, (c,), jnp.float32, 0.5, 1.5)
        return (gamma, beta, mean, var)

    return {
        "dl_w": 0.1 * jax.random.normal(ks[0], (9, in_channels), jnp.float32),
        "dl_bn": bn(ks[1], in_channels),
        "pl_w": 0.1 * jax.random.normal(ks[2], (in_channels, l_ch), jnp.float32),
        "pl_bn": bn(ks[3], l_ch),
        "r1_w": 0.1 * jax.random.normal(ks[4], (in_channels, r_ch), jnp.float32),
        "r1_bn": bn(ks[5], r_ch),
        "dr_w": 0.1 * jax.random.normal(ks[6], (9, r_ch), jnp.float32),
        "dr_bn": bn(ks[7], r_ch),
        "pr_w": 0.1 * jax.random.normal(ks[8], (r_ch, o_r_ch), jnp.float32),
        "pr_bn": bn(ks[9], o_r_ch),
    }


def fold_params(rp, out_channels, groups=2, eps=1e-5):
    """Fold eval-mode BN into conv weights and bake concat + channel shuffle
    into the final pointwise weights/bias (pre-transposed, channel-major)."""
    def bn_fold(bn):
        gamma, beta, mean, var = bn
        s = gamma / jnp.sqrt(var + eps)
        return s, beta - mean * s

    s_dl, b_dl = bn_fold(rp["dl_bn"])
    s_pl, b_pl = bn_fold(rp["pl_bn"])
    s_r1, b_r1 = bn_fold(rp["r1_bn"])
    s_dr, b_dr = bn_fold(rp["dr_bn"])
    s_pr, b_pr = bn_fold(rp["pr_bn"])

    dwl = rp["dl_w"] * s_dl[None, :]             # left dw taps, BN scale folded
    wl1 = rp["pl_w"] * s_pl[None, :]             # (Cin, l_ch)
    bl1 = b_pl + b_dl @ wl1                      # dw-BN bias folded downstream

    wr1 = rp["r1_w"] * s_r1[None, :]             # (Cin, r_ch)
    br1 = b_r1

    dwr = rp["dr_w"] * s_dr[None, :]             # right dw taps
    wr2 = rp["pr_w"] * s_pr[None, :]             # (r_ch, o_r_ch)
    br2 = b_pr + b_dr @ wr2

    # channel shuffle: shuffled channel k <- concat channel src[k]
    C = out_channels
    l_ch = wl1.shape[1]
    o_r_ch = wr2.shape[1]
    cpg = C // groups
    k = jnp.arange(C)
    src = (k % groups) * cpg + (k // groups)
    is_left = src < l_ch
    li = jnp.clip(src, 0, l_ch - 1)
    ri = jnp.clip(src - l_ch, 0, o_r_ch - 1)
    wl_full = jnp.where(is_left[None, :], wl1[:, li], 0.0)   # (Cin, C)
    wr_full = jnp.where(is_left[None, :], 0.0, wr2[:, ri])   # (r_ch, C)
    b_full = jnp.where(is_left, bl1[li], br2[ri])            # (C,)

    return {
        "dwl": dwl,
        "wr1": wr1,
        "br1": br1.reshape(1, -1),
        "dwr": dwr,
        "wlT": wl_full.T,                # (C, Cin)
        "wrT": wr_full.T,                # (C, r_ch)
        "bT": b_full.reshape(-1, 1),     # (C, 1)
    }


# ---------------------------- pure-JAX reference -----------------------------

def _ref_forward(x_nchw, rp, groups=2, eps=1e-5):
    hp = jax.lax.Precision.HIGHEST

    def bn(y, bnp):
        gamma, beta, mean, var = bnp
        s = gamma / jnp.sqrt(var + eps)
        return y * s + (beta - mean * s)

    def hswish(y):
        return y * jnp.clip(y + 3.0, 0.0, 6.0) / 6.0

    def dw(xx, w9):
        C = xx.shape[-1]
        w = w9.reshape(3, 3, C)[:, :, None, :]              # HWIO, I=1
        return jax.lax.conv_general_dilated(
            xx, w, window_strides=(2, 2), padding=((1, 1), (1, 1)),
            dimension_numbers=("NHWC", "HWIO", "NHWC"),
            feature_group_count=C, precision=hp)

    def pw(xx, w):
        return jnp.einsum("bhwc,cd->bhwd", xx, w, precision=hp)

    x = jnp.transpose(x_nchw, (0, 2, 3, 1))
    out_l = hswish(bn(pw(bn(dw(x, rp["dl_w"]), rp["dl_bn"]), rp["pl_w"]),
                      rp["pl_bn"]))
    r = hswish(bn(pw(x, rp["r1_w"]), rp["r1_bn"]))
    out_r = hswish(bn(pw(bn(dw(r, rp["dr_w"]), rp["dr_bn"]), rp["pr_w"]),
                      rp["pr_bn"]))
    y = jnp.concatenate([out_l, out_r], axis=-1)
    B, Ho, Wo, C = y.shape
    cpg = C // groups
    y = y.reshape(B, Ho, Wo, groups, cpg)
    y = jnp.transpose(y, (0, 1, 2, 4, 3)).reshape(B, Ho, Wo, C)
    return jnp.transpose(y, (0, 3, 1, 2))


if __name__ == "__main__":
    key = jax.random.PRNGKey(0)
    kx, kp = jax.random.split(key)
    B, Cin, H, W = 2, 8, 16, 16
    Cout = 16
    x = jax.random.normal(kx, (B, Cin, H, W), jnp.float32)    # NCHW, like PyTorch
    raw = init_raw_params(kp, Cin, Cout)
    params = fold_params(raw, Cout)

    fwd = jax.jit(shuffle_v2_downsampling)
    out = jax.block_until_ready(fwd(x, params))
    assert out.shape == (B, Cout, H // 2, W // 2), out.shape

    ref = _ref_forward(x, raw)
    err = float(jnp.max(jnp.abs(out - ref)))
    assert jnp.allclose(out, ref, atol=2e-3, rtol=2e-3), f"max abs err {err}"
    print("KERNEL_OK")
</pallas_src>

<mosaic_0001>
module attributes {stable_mosaic.version = 11 : i64} {
  func.func @_shufflev2_down_kernel(%arg0: i32, %arg1: i32, %arg2: memref<1x2x8x2x16x8xf32, #tpu.memory_space<vmem>>, %arg3: memref<1x2x1x2x16x8xf32, #tpu.memory_space<vmem>>, %arg4: memref<9x8xf32, #tpu.memory_space<vmem>>, %arg5: memref<8x4xf32, #tpu.memory_space<vmem>>, %arg6: memref<1x4xf32, #tpu.memory_space<vmem>>, %arg7: memref<9x4xf32, #tpu.memory_space<vmem>>, %arg8: memref<16x8xf32, #tpu.memory_space<vmem>>, %arg9: memref<16x4xf32, #tpu.memory_space<vmem>>, %arg10: memref<16x1xf32, #tpu.memory_space<vmem>>, %arg11: memref<1x16x64xf32, #tpu.memory_space<vmem>>, %arg12: memref<2x9x2x16x8xf32, #tpu.memory_space<vmem>>, %arg13: memref<2x9x2x16x4xf32, #tpu.memory_space<vmem>>) attributes {dimension_semantics = [#tpu.dimension_semantics<parallel>, #tpu.dimension_semantics<parallel>], iteration_bounds = array<i64: 2, 1>, scalar_prefetch = 0 : i64, scratch_operands = 2 : i64, tpu.core_type = #tpu.core_type<tc>, window_params = [{transform_indices = @transform_0, window_bounds = array<i64: 1, 2, 8, 2, 16, 8>}, {transform_indices = @transform_1, window_bounds = array<i64: 1, 2, 1, 2, 16, 8>}, {pipeline_mode = #tpu.pipeline_mode<synchronous>, transform_indices = @transform_2, window_bounds = array<i64: 9, 8>}, {pipeline_mode = #tpu.pipeline_mode<synchronous>, transform_indices = @transform_3, window_bounds = array<i64: 8, 4>}, {pipeline_mode = #tpu.pipeline_mode<synchronous>, transform_indices = @transform_4, window_bounds = array<i64: 1, 4>}, {pipeline_mode = #tpu.pipeline_mode<synchronous>, transform_indices = @transform_5, window_bounds = array<i64: 9, 4>}, {pipeline_mode = #tpu.pipeline_mode<synchronous>, transform_indices = @transform_6, window_bounds = array<i64: 16, 8>}, {pipeline_mode = #tpu.pipeline_mode<synchronous>, transform_indices = @transform_7, window_bounds = array<i64: 16, 4>}, {pipeline_mode = #tpu.pipeline_mode<synchronous>, transform_indices = @transform_8, window_bounds = array<i64: 16, 1>}, {transform_indices = @transform_9, window_bounds = array<i64: 1, 16, 64>}]} {
    %c0 = arith.constant 0 : index
    %c0_0 = arith.constant 0 : index
    %c0_1 = arith.constant 0 : index
    %c0_2 = arith.constant 0 : index
    %c0_3 = arith.constant 0 : index
    %c0_4 = arith.constant 0 : index
    %0 = vector.load %arg2[%c0, %c0_0, %c0_1, %c0_2, %c0_3, %c0_4] : memref<1x2x8x2x16x8xf32, #tpu.memory_space<vmem>>, vector<1x2x8x2x16x8xf32>
    %1 = vector.shape_cast %0 : vector<1x2x8x2x16x8xf32> to vector<2x8x2x16x8xf32>
    %c0_5 = arith.constant 0 : index
    %c0_6 = arith.constant 0 : index
    %c0_7 = arith.constant 0 : index
    %c0_8 = arith.constant 0 : index
    %c0_9 = arith.constant 0 : index
    %2 = vector.load %arg12[%c0_5, %c0_6, %c0_7, %c0_8, %c0_9] : memref<2x9x2x16x8xf32, #tpu.memory_space<vmem>>, vector<2x8x2x16x8xf32>
    tpu.vector_store %arg12[%c0_5, %c0_6, %c0_7, %c0_8, %c0_9], %1 {strides = array<i32>} : memref<2x9x2x16x8xf32, #tpu.memory_space<vmem>>, vector<2x8x2x16x8xf32>,
    %c0_10 = arith.constant 0 : index
    %c0_11 = arith.constant 0 : index
    %c0_12 = arith.constant 0 : index
    %c0_13 = arith.constant 0 : index
    %c0_14 = arith.constant 0 : index
    %c0_15 = arith.constant 0 : index
    %3 = vector.load %arg3[%c0_10, %c0_11, %c0_12, %c0_13, %c0_14, %c0_15] : memref<1x2x1x2x16x8xf32, #tpu.memory_space<vmem>>, vector<1x2x1x2x16x8xf32>
    %4 = vector.shape_cast %3 : vector<1x2x1x2x16x8xf32> to vector<2x1x2x16x8xf32>
    %c0_16 = arith.constant 0 : index
    %c8 = arith.constant 8 : index
    %c0_17 = arith.constant 0 : index
    %c0_18 = arith.constant 0 : index
    %c0_19 = arith.constant 0 : index
    %5 = vector.load %arg12[%c0_16, %c8, %c0_17, %c0_18, %c0_19] : memref<2x9x2x16x8xf32, #tpu.memory_space<vmem>>, vector<2x1x2x16x8xf32>
    tpu.vector_store %arg12[%c0_16, %c8, %c0_17, %c0_18, %c0_19], %4 {strides = array<i32>} : memref<2x9x2x16x8xf32, #tpu.memory_space<vmem>>, vector<2x1x2x16x8xf32>,
    %c0_20 = arith.constant 0 : index
    %c0_21 = arith.constant 0 : index
    %6 = vector.load %arg4[%c0_20, %c0_21] : memref<9x8xf32, #tpu.memory_space<vmem>>, vector<9x8xf32>
    %cst = arith.constant 0.000000e+00 : f32
    %7 = vector.broadcast %cst : f32 to vector<8x8x8xf32>
    %c0_22 = arith.constant 0 : index
    %c0_23 = arith.constant 0 : index
    %c0_24 = arith.constant 0 : index
    %c0_25 = arith.constant 0 : index
    %c0_26 = arith.constant 0 : index
    %8 = vector.load %arg12[%c0_22, %c0_23, %c0_24, %c0_25, %c0_26] : memref<2x9x2x16x8xf32, #tpu.memory_space<vmem>>, vector<1x8x1x8x8xf32>
    %9 = vector.shape_cast %8 : vector<1x8x1x8x8xf32> to vector<8x8x8xf32>
    %10 = vector.extract_strided_slice %6 {offsets = [0, 0], sizes = [1, 8], strides = [1, 1]} : vector<9x8xf32> to vector<1x8xf32>
    %11 = vector.shape_cast %10 : vector<1x8xf32> to vector<1x1x8xf32>
    %12 = vector.broadcast %11 : vector<1x1x8xf32> to vector<8x8x8xf32>
    %13 = arith.mulf %9, %12 : vector<8x8x8xf32>
    %14 = arith.addf %7, %13 : vector<8x8x8xf32>
    %c0_27 = arith.constant 0 : index
    %c0_28 = arith.constant 0 : index
    %c1 = arith.constant 1 : index
    %c0_29 = arith.constant 0 : index
    %c0_30 = arith.constant 0 : index
    %15 = vector.load %arg12[%c0_27, %c0_28, %c1, %c0_29, %c0_30] : memref<2x9x2x16x8xf32, #tpu.memory_space<vmem>>, vector<1x8x1x8x8xf32>
    %16 = vector.shape_cast %15 : vector<1x8x1x8x8xf32> to vector<8x8x8xf32>
    %17 = vector.extract_strided_slice %6 {offsets = [1, 0], sizes = [1, 8], strides = [1, 1]} : vector<9x8xf32> to vector<1x8xf32>
    %18 = vector.shape_cast %17 : vector<1x8xf32> to vector<1x1x8xf32>
    %19 = vector.broadcast %18 : vector<1x1x8xf32> to vector<8x8x8xf32>
    %20 = arith.mulf %16, %19 : vector<8x8x8xf32>
    %21 = arith.addf %14, %20 : vector<8x8x8xf32>
    %c0_31 = arith.constant 0 : index
    %c0_32 = arith.constant 0 : index
    %c0_33 = arith.constant 0 : index
    %c1_34 = arith.constant 1 : index
    %c0_35 = arith.constant 0 : index
    %22 = vector.load %arg12[%c0_31, %c0_32, %c0_33, %c1_34, %c0_35] : memref<2x9x2x16x8xf32, #tpu.memory_space<vmem>>, vector<1x8x1x8x8xf32>
    %23 = vector.shape_cast %22 : vector<1x8x1x8x8xf32> to vector<8x8x8xf32>
    %24 = vector.extract_strided_slice %6 {offsets = [2, 0], sizes = [1, 8], strides = [1, 1]} : vector<9x8xf32> to vector<1x8xf32>
    %25 = vector.shape_cast %24 : vector<1x8xf32> to vector<1x1x8xf32>
    %26 = vector.broadcast %25 : vector<1x1x8xf32> to vector<8x8x8xf32>
    %27 = arith.mulf %23, %26 : vector<8x8x8xf32>
    %28 = arith.addf %21, %27 : vector<8x8x8xf32>
    %c1_36 = arith.constant 1 : index
    %c0_37 = arith.constant 0 : index
    %c0_38 = arith.constant 0 : index
    %c0_39 = arith.constant 0 : index
    %c0_40 = arith.constant 0 : index
    %29 = vector.load %arg12[%c1_36, %c0_37, %c0_38, %c0_39, %c0_40] : memref<2x9x2x16x8xf32, #tpu.memory_space<vmem>>, vector<1x8x1x8x8xf32>
    %30 = vector.shape_cast %29 : vector<1x8x1x8x8xf32> to vector<8x8x8xf32>
    %31 = vector.extract_strided_slice %6 {offsets = [3, 0], sizes = [1, 8], strides = [1, 1]} : vector<9x8xf32> to vector<1x8xf32>
    %32 = vector.shape_cast %31 : vector<1x8xf32> to vector<1x1x8xf32>
    %33 = vector.broadcast %32 : vector<1x1x8xf32> to vector<8x8x8xf32>
    %34 = arith.mulf %30, %33 : vector<8x8x8xf32>
    %35 = arith.addf %28, %34 : vector<8x8x8xf32>
    %c1_41 = arith.constant 1 : index
    %c0_42 = arith.constant 0 : index
    %c1_43 = arith.constant 1 : index
    %c0_44 = arith.constant 0 : index
    %c0_45 = arith.constant 0 : index
    %36 = vector.load %arg12[%c1_41, %c0_42, %c1_43, %c0_44, %c0_45] : memref<2x9x2x16x8xf32, #tpu.memory_space<vmem>>, vector<1x8x1x8x8xf32>
    %37 = vector.shape_cast %36 : vector<1x8x1x8x8xf32> to vector<8x8x8xf32>
    %38 = vector.extract_strided_slice %6 {offsets = [4, 0], sizes = [1, 8], strides = [1, 1]} : vector<9x8xf32> to vector<1x8xf32>
    %39 = vector.shape_cast %38 : vector<1x8xf32> to vector<1x1x8xf32>
    %40 = vector.broadcast %39 : vector<1x1x8xf32> to vector<8x8x8xf32>
    %41 = arith.mulf %37, %40 : vector<8x8x8xf32>
    %42 = arith.addf %35, %41 : vector<8x8x8xf32>
    %c1_46 = arith.constant 1 : index
    %c0_47 = arith.constant 0 : index
    %c0_48 = arith.constant 0 : index
    %c1_49 = arith.constant 1 : index
    %c0_50 = arith.constant 0 : index
    %43 = vector.load %arg12[%c1_46, %c0_47, %c0_48, %c1_49, %c0_50] : memref<2x9x2x16x8xf32, #tpu.memory_space<vmem>>, vector<1x8x1x8x8xf32>
    %44 = vector.shape_cast %43 : vector<1x8x1x8x8xf32> to vector<8x8x8xf32>
    %45 = vector.extract_strided_slice %6 {offsets = [5, 0], sizes = [1, 8], strides = [1, 1]} : vector<9x8xf32> to vector<1x8xf32>
    %46 = vector.shape_cast %45 : vector<1x8xf32> to vector<1x1x8xf32>
    %47 = vector.broadcast %46 : vector<1x1x8xf32> to vector<8x8x8xf32>
    %48 = arith.mulf %44, %47 : vector<8x8x8xf32>
    %49 = arith.addf %42, %48 : vector<8x8x8xf32>
    %c0_51 = arith.constant 0 : index
    %c1_52 = arith.constant 1 : index
    %c0_53 = arith.constant 0 : index
    %c0_54 = arith.constant 0 : index
    %c0_55 = arith.constant 0 : index
    %50 = vector.load %arg12[%c0_51, %c1_52, %c0_53, %c0_54, %c0_55] : memref<2x9x2x16x8xf32, #tpu.memory_space<vmem>>, vector<1x8x1x8x8xf32>
    %51 = vector.shape_cast %50 : vector<1x8x1x8x8xf32> to vector<8x8x8xf32>
    %52 = vector.extract_strided_slice %6 {offsets = [6, 0], sizes = [1, 8], strides = [1, 1]} : vector<9x8xf32> to vector<1x8xf32>
    %53 = vector.shape_cast %52 : vector<1x8xf32> to vector<1x1x8xf32>
    %54 = vector.broadcast %53 : vector<1x1x8xf32> to vector<8x8x8xf32>
    %55 = arith.mulf %51, %54 : vector<8x8x8xf32>
    %56 = arith.addf %49, %55 : vector<8x8x8xf32>
    %c0_56 = arith.constant 0 : index
    %c1_57 = arith.constant 1 : index
    %c1_58 = arith.constant 1 : index
    %c0_59 = arith.constant 0 : index
    %c0_60 = arith.constant 0 : index
    %57 = vector.load %arg12[%c0_56, %c1_57, %c1_58, %c0_59, %c0_60] : memref<2x9x2x16x8xf32, #tpu.memory_space<vmem>>, vector<1x8x1x8x8xf32>
    %58 = vector.shape_cast %57 : vector<1x8x1x8x8xf32> to vector<8x8x8xf32>
    %59 = vector.extract_strided_slice %6 {offsets = [7, 0], sizes = [1, 8], strides = [1, 1]} : vector<9x8xf32> to vector<1x8xf32>
    %60 = vector.shape_cast %59 : vector<1x8xf32> to vector<1x1x8xf32>
    %61 = vector.broadcast %60 : vector<1x1x8xf32> to vector<8x8x8xf32>
    %62 = arith.mulf %58, %61 : vector<8x8x8xf32>
    %63 = arith.addf %56, %62 : vector<8x8x8xf32>
    %c0_61 = arith.constant 0 : index
    %c1_62 = arith.constant 1 : index
    %c0_63 = arith.constant 0 : index
    %c1_64 = arith.constant 1 : index
    %c0_65 = arith.constant 0 : index
    %64 = vector.load %arg12[%c0_61, %c1_62, %c0_63, %c1_64, %c0_65] : memref<2x9x2x16x8xf32, #tpu.memory_space<vmem>>, vector<1x8x1x8x8xf32>
    %65 = vector.shape_cast %64 : vector<1x8x1x8x8xf32> to vector<8x8x8xf32>
    %66 = vector.extract_strided_slice %6 {offsets = [8, 0], sizes = [1, 8], strides = [1, 1]} : vector<9x8xf32> to vector<1x8xf32>
    %67 = vector.shape_cast %66 : vector<1x8xf32> to vector<1x1x8xf32>
    %68 = vector.broadcast %67 : vector<1x1x8xf32> to vector<8x8x8xf32>
    %69 = arith.mulf %65, %68 : vector<8x8x8xf32>
    %70 = arith.addf %63, %69 : vector<8x8x8xf32>
    %71 = vector.shape_cast %70 : vector<8x8x8xf32> to vector<64x8xf32>
    %c0_66 = arith.constant 0 : index
    %c0_67 = arith.constant 0 : index
    %c0_68 = arith.constant 0 : index
    %c0_69 = arith.constant 0 : index
    %c0_70 = arith.constant 0 : index
    %72 = vector.load %arg12[%c0_66, %c0_67, %c0_68, %c0_69, %c0_70] : memref<2x9x2x16x8xf32, #tpu.memory_space<vmem>>, vector<2x9x2x16x8xf32>
    %73 = vector.shape_cast %72 : vector<2x9x2x16x8xf32> to vector<576x8xf32>
    %c0_71 = arith.constant 0 : index
    %c0_72 = arith.constant 0 : index
    %74 = vector.load %arg5[%c0_71, %c0_72] : memref<8x4xf32, #tpu.memory_space<vmem>>, vector<8x4xf32>
    %cst_73 = arith.constant dense<0.000000e+00> : vector<576x4xf32>
    %75 = tpu.matmul %73, %74, %cst_73 {dimension_numbers = #tpu.dot_dimension_numbers<[1], [0], [0], [1], [0, 0, 1, 1], [], []>} : vector<576x8xf32>, vector<8x4xf32>, vector<576x4xf32> -> vector<576x4xf32>
    %c0_74 = arith.constant 0 : index
    %c0_75 = arith.constant 0 : index
    %76 = vector.load %arg6[%c0_74, %c0_75] : memref<1x4xf32, #tpu.memory_space<vmem>>, vector<1x4xf32>
    %77 = vector.broadcast %76 : vector<1x4xf32> to vector<576x4xf32>
    %78 = arith.addf %75, %77 : vector<576x4xf32>
    %cst_76 = arith.constant 3.000000e+00 : f32
    %79 = vector.broadcast %cst_76 : f32 to vector<576x4xf32>
    %80 = arith.addf %78, %79 : vector<576x4xf32>
    %cst_77 = arith.constant 0.000000e+00 : f32
    %cst_78 = arith.constant 6.000000e+00 : f32
    %81 = vector.broadcast %cst_77 : f32 to vector<576x4xf32>
    %82 = arith.maximumf %81, %80 : vector<576x4xf32>
    %83 = vector.broadcast %cst_78 : f32 to vector<576x4xf32>
    %84 = arith.minimumf %83, %82 : vector<576x4xf32>
    %85 = arith.mulf %78, %84 : vector<576x4xf32>
    %cst_79 = arith.constant 0.166666672 : f32
    %86 = vector.broadcast %cst_79 : f32 to vector<576x4xf32>
    %87 = arith.mulf %85, %86 : vector<576x4xf32>
    %88 = vector.shape_cast %87 : vector<576x4xf32> to vector<2x9x2x16x4xf32>
    %c0_80 = arith.constant 0 : index
    %c0_81 = arith.constant 0 : index
    %c0_82 = arith.constant 0 : index
    %c0_83 = arith.constant 0 : index
    %c0_84 = arith.constant 0 : index
    %89 = vector.load %arg13[%c0_80, %c0_81, %c0_82, %c0_83, %c0_84] : memref<2x9x2x16x4xf32, #tpu.memory_space<vmem>>, vector<2x9x2x16x4xf32>
    tpu.vector_store %arg13[%c0_80, %c0_81, %c0_82, %c0_83, %c0_84], %88 {strides = array<i32>} : memref<2x9x2x16x4xf32, #tpu.memory_space<vmem>>, vector<2x9x2x16x4xf32>,
    %cst_85 = arith.constant 0.000000e+00 : f32
    %90 = vector.broadcast %cst_85 : f32 to vector<2x9x1x1x4xf32>
    %c0_86 = arith.constant 0 : index
    %c0_87 = arith.constant 0 : index
    %c0_88 = arith.constant 0 : index
    %c0_89 = arith.constant 0 : index
    %c0_90 = arith.constant 0 : index
    %91 = vector.load %arg13[%c0_86, %c0_87, %c0_88, %c0_89, %c0_90] : memref<2x9x2x16x4xf32, #tpu.memory_space<vmem>>, vector<2x9x1x1x4xf32>
    tpu.vector_store %arg13[%c0_86, %c0_87, %c0_88, %c0_89, %c0_90], %90 {strides = array<i32>} : memref<2x9x2x16x4xf32, #tpu.memory_space<vmem>>, vector<2x9x1x1x4xf32>,
    %c0_i32 = arith.constant 0 : i32
    %92 = arith.cmpi eq, %arg1, %c0_i32 : i32
    %93 = arith.extui %92 : i1 to i32
    %c0_i32_91 = arith.constant 0 : i32
    %94 = arith.cmpi ne, %93, %c0_i32_91 : i32
    scf.if %94 {
      %cst_155 = arith.constant 0.000000e+00 : f32
      %181 = vector.broadcast %cst_155 : f32 to vector<1x1x2x16x4xf32>
      %c0_156 = arith.constant 0 : index
      %c0_157 = arith.constant 0 : index
      %c0_158 = arith.constant 0 : index
      %c0_159 = arith.constant 0 : index
      %c0_160 = arith.constant 0 : index
      %182 = vector.load %arg13[%c0_156, %c0_157, %c0_158, %c0_159, %c0_160] : memref<2x9x2x16x4xf32, #tpu.memory_space<vmem>>, vector<1x1x2x16x4xf32>
      tpu.vector_store %arg13[%c0_156, %c0_157, %c0_158, %c0_159, %c0_160], %181 {strides = array<i32>} : memref<2x9x2x16x4xf32, #tpu.memory_space<vmem>>, vector<1x1x2x16x4xf32>,
    } else {
    }
    %c0_92 = arith.constant 0 : index
    %c0_93 = arith.constant 0 : index
    %95 = vector.load %arg7[%c0_92, %c0_93] : memref<9x4xf32, #tpu.memory_space<vmem>>, vector<9x4xf32>
    %cst_94 = arith.constant 0.000000e+00 : f32
    %96 = vector.broadcast %cst_94 : f32 to vector<8x8x4xf32>
    %c0_95 = arith.constant 0 : index
    %c0_96 = arith.constant 0 : index
    %c0_97 = arith.constant 0 : index
    %c0_98 = arith.constant 0 : index
    %c0_99 = arith.constant 0 : index
    %97 = vector.load %arg13[%c0_95, %c0_96, %c0_97, %c0_98, %c0_99] : memref<2x9x2x16x4xf32, #tpu.memory_space<vmem>>, vector<1x8x1x8x4xf32>
    %98 = vector.shape_cast %97 : vector<1x8x1x8x4xf32> to vector<8x8x4xf32>
    %99 = vector.extract_strided_slice %95 {offsets = [0, 0], sizes = [1, 4], strides = [1, 1]} : vector<9x4xf32> to vector<1x4xf32>
    %100 = vector.shape_cast %99 : vector<1x4xf32> to vector<1x1x4xf32>
    %101 = vector.broadcast %100 : vector<1x1x4xf32> to vector<8x8x4xf32>
    %102 = arith.mulf %98, %101 : vector<8x8x4xf32>
    %103 = arith.addf %96, %102 : vector<8x8x4xf32>
    %c0_100 = arith.constant 0 : index
    %c0_101 = arith.constant 0 : index
    %c1_102 = arith.constant 1 : index
    %c0_103 = arith.constant 0 : index
    %c0_104 = arith.constant 0 : index
    %104 = vector.load %arg13[%c0_100, %c0_101, %c1_102, %c0_103, %c0_104] : memref<2x9x2x16x4xf32, #tpu.memory_space<vmem>>, vector<1x8x1x8x4xf32>
    %105 = vector.shape_cast %104 : vector<1x8x1x8x4xf32> to vector<8x8x4xf32>
    %106 = vector.extract_strided_slice %95 {offsets = [1, 0], sizes = [1, 4], strides = [1, 1]} : vector<9x4xf32> to vector<1x4xf32>
    %107 = vector.shape_cast %106 : vector<1x4xf32> to vector<1x1x4xf32>
    %108 = vector.broadcast %107 : vector<1x1x4xf32> to vector<8x8x4xf32>
    %109 = arith.mulf %105, %108 : vector<8x8x4xf32>
    %110 = arith.addf %103, %109 : vector<8x8x4xf32>
    %c0_105 = arith.constant 0 : index
    %c0_106 = arith.constant 0 : index
    %c0_107 = arith.constant 0 : index
    %c1_108 = arith.constant 1 : index
    %c0_109 = arith.constant 0 : index
    %111 = vector.load %arg13[%c0_105, %c0_106, %c0_107, %c1_108, %c0_109] : memref<2x9x2x16x4xf32, #tpu.memory_space<vmem>>, vector<1x8x1x8x4xf32>
    %112 = vector.shape_cast %111 : vector<1x8x1x8x4xf32> to vector<8x8x4xf32>
    %113 = vector.extract_strided_slice %95 {offsets = [2, 0], sizes = [1, 4], strides = [1, 1]} : vector<9x4xf32> to vector<1x4xf32>
    %114 = vector.shape_cast %113 : vector<1x4xf32> to vector<1x1x4xf32>
    %115 = vector.broadcast %114 : vector<1x1x4xf32> to vector<8x8x4xf32>
    %116 = arith.mulf %112, %115 : vector<8x8x4xf32>
    %117 = arith.addf %110, %116 : vector<8x8x4xf32>
    %c1_110 = arith.constant 1 : index
    %c0_111 = arith.constant 0 : index
    %c0_112 = arith.constant 0 : index
    %c0_113 = arith.constant 0 : index
    %c0_114 = arith.constant 0 : index
    %118 = vector.load %arg13[%c1_110, %c0_111, %c0_112, %c0_113, %c0_114] : memref<2x9x2x16x4xf32, #tpu.memory_space<vmem>>, vector<1x8x1x8x4xf32>
    %119 = vector.shape_cast %118 : vector<1x8x1x8x4xf32> to vector<8x8x4xf32>
    %120 = vector.extract_strided_slice %95 {offsets = [3, 0], sizes = [1, 4], strides = [1, 1]} : vector<9x4xf32> to vector<1x4xf32>
    %121 = vector.shape_cast %120 : vector<1x4xf32> to vector<1x1x4xf32>
    %122 = vector.broadcast %121 : vector<1x1x4xf32> to vector<8x8x4xf32>
    %123 = arith.mulf %119, %122 : vector<8x8x4xf32>
    %124 = arith.addf %117, %123 : vector<8x8x4xf32>
    %c1_115 = arith.constant 1 : index
    %c0_116 = arith.constant 0 : index
    %c1_117 = arith.constant 1 : index
    %c0_118 = arith.constant 0 : index
    %c0_119 = arith.constant 0 : index
    %125 = vector.load %arg13[%c1_115, %c0_116, %c1_117, %c0_118, %c0_119] : memref<2x9x2x16x4xf32, #tpu.memory_space<vmem>>, vector<1x8x1x8x4xf32>
    %126 = vector.shape_cast %125 : vector<1x8x1x8x4xf32> to vector<8x8x4xf32>
    %127 = vector.extract_strided_slice %95 {offsets = [4, 0], sizes = [1, 4], strides = [1, 1]} : vector<9x4xf32> to vector<1x4xf32>
    %128 = vector.shape_cast %127 : vector<1x4xf32> to vector<1x1x4xf32>
    %129 = vector.broadcast %128 : vector<1x1x4xf32> to vector<8x8x4xf32>
    %130 = arith.mulf %126, %129 : vector<8x8x4xf32>
    %131 = arith.addf %124, %130 : vector<8x8x4xf32>
    %c1_120 = arith.constant 1 : index
    %c0_121 = arith.constant 0 : index
    %c0_122 = arith.constant 0 : index
    %c1_123 = arith.constant 1 : index
    %c0_124 = arith.constant 0 : index
    %132 = vector.load %arg13[%c1_120, %c0_121, %c0_122, %c1_123, %c0_124] : memref<2x9x2x16x4xf32, #tpu.memory_space<vmem>>, vector<1x8x1x8x4xf32>
    %133 = vector.shape_cast %132 : vector<1x8x1x8x4xf32> to vector<8x8x4xf32>
    %134 = vector.extract_strided_slice %95 {offsets = [5, 0], sizes = [1, 4], strides = [1, 1]} : vector<9x4xf32> to vector<1x4xf32>
    %135 = vector.shape_cast %134 : vector<1x4xf32> to vector<1x1x4xf32>
    %136 = vector.broadcast %135 : vector<1x1x4xf32> to vector<8x8x4xf32>
    %137 = arith.mulf %133, %136 : vector<8x8x4xf32>
    %138 = arith.addf %131, %137 : vector<8x8x4xf32>
    %c0_125 = arith.constant 0 : index
    %c1_126 = arith.constant 1 : index
    %c0_127 = arith.constant 0 : index
    %c0_128 = arith.constant 0 : index
    %c0_129 = arith.constant 0 : index
    %139 = vector.load %arg13[%c0_125, %c1_126, %c0_127, %c0_128, %c0_129] : memref<2x9x2x16x4xf32, #tpu.memory_space<vmem>>, vector<1x8x1x8x4xf32>
    %140 = vector.shape_cast %139 : vector<1x8x1x8x4xf32> to vector<8x8x4xf32>
    %141 = vector.extract_strided_slice %95 {offsets = [6, 0], sizes = [1, 4], strides = [1, 1]} : vector<9x4xf32> to vector<1x4xf32>
    %142 = vector.shape_cast %141 : vector<1x4xf32> to vector<1x1x4xf32>
    %143 = vector.broadcast %142 : vector<1x1x4xf32> to vector<8x8x4xf32>
    %144 = arith.mulf %140, %143 : vector<8x8x4xf32>
    %145 = arith.addf %138, %144 : vector<8x8x4xf32>
    %c0_130 = arith.constant 0 : index
    %c1_131 = arith.constant 1 : index
    %c1_132 = arith.constant 1 : index
    %c0_133 = arith.constant 0 : index
    %c0_134 = arith.constant 0 : index
    %146 = vector.load %arg13[%c0_130, %c1_131, %c1_132, %c0_133, %c0_134] : memref<2x9x2x16x4xf32, #tpu.memory_space<vmem>>, vector<1x8x1x8x4xf32>
    %147 = vector.shape_cast %146 : vector<1x8x1x8x4xf32> to vector<8x8x4xf32>
    %148 = vector.extract_strided_slice %95 {offsets = [7, 0], sizes = [1, 4], strides = [1, 1]} : vector<9x4xf32> to vector<1x4xf32>
    %149 = vector.shape_cast %148 : vector<1x4xf32> to vector<1x1x4xf32>
    %150 = vector.broadcast %149 : vector<1x1x4xf32> to vector<8x8x4xf32>
    %151 = arith.mulf %147, %150 : vector<8x8x4xf32>
    %152 = arith.addf %145, %151 : vector<8x8x4xf32>
    %c0_135 = arith.constant 0 : index
    %c1_136 = arith.constant 1 : index
    %c0_137 = arith.constant 0 : index
    %c1_138 = arith.constant 1 : index
    %c0_139 = arith.constant 0 : index
    %153 = vector.load %arg13[%c0_135, %c1_136, %c0_137, %c1_138, %c0_139] : memref<2x9x2x16x4xf32, #tpu.memory_space<vmem>>, vector<1x8x1x8x4xf32>
    %154 = vector.shape_cast %153 : vector<1x8x1x8x4xf32> to vector<8x8x4xf32>
    %155 = vector.extract_strided_slice %95 {offsets = [8, 0], sizes = [1, 4], strides = [1, 1]} : vector<9x4xf32> to vector<1x4xf32>
    %156 = vector.shape_cast %155 : vector<1x4xf32> to vector<1x1x4xf32>
    %157 = vector.broadcast %156 : vector<1x1x4xf32> to vector<8x8x4xf32>
    %158 = arith.mulf %154, %157 : vector<8x8x4xf32>
    %159 = arith.addf %152, %158 : vector<8x8x4xf32>
    %160 = vector.shape_cast %159 : vector<8x8x4xf32> to vector<64x4xf32>
    %c0_140 = arith.constant 0 : index
    %c0_141 = arith.constant 0 : index
    %161 = vector.load %arg8[%c0_140, %c0_141] : memref<16x8xf32, #tpu.memory_space<vmem>>, vector<16x8xf32>
    %cst_142 = arith.constant dense<0.000000e+00> : vector<16x64xf32>
    %162 = tpu.matmul %161, %71, %cst_142 {dimension_numbers = #tpu.dot_dimension_numbers<[1], [1], [0], [0], [0, 0, 1, 0], [], []>} : vector<16x8xf32>, vector<64x8xf32>, vector<16x64xf32> -> vector<16x64xf32>
    %c0_143 = arith.constant 0 : index
    %c0_144 = arith.constant 0 : index
    %163 = vector.load %arg9[%c0_143, %c0_144] : memref<16x4xf32, #tpu.memory_space<vmem>>, vector<16x4xf32>
    %cst_145 = arith.constant dense<0.000000e+00> : vector<16x64xf32>
    %164 = tpu.matmul %163, %160, %cst_145 {dimension_numbers = #tpu.dot_dimension_numbers<[1], [1], [0], [0], [0, 0, 1, 0], [], []>} : vector<16x4xf32>, vector<64x4xf32>, vector<16x64xf32> -> vector<16x64xf32>
    %165 = arith.addf %162, %164 : vector<16x64xf32>
    %c0_146 = arith.constant 0 : index
    %c0_147 = arith.constant 0 : index
    %166 = vector.load %arg10[%c0_146, %c0_147] : memref<16x1xf32, #tpu.memory_space<vmem>>, vector<16x1xf32>
    %167 = vector.broadcast %166 : vector<16x1xf32> to vector<16x64xf32>
    %168 = arith.addf %165, %167 : vector<16x64xf32>
    %cst_148 = arith.constant 3.000000e+00 : f32
    %169 = vector.broadcast %cst_148 : f32 to vector<16x64xf32>
    %170 = arith.addf %168, %169 : vector<16x64xf32>
    %cst_149 = arith.constant 0.000000e+00 : f32
    %cst_150 = arith.constant 6.000000e+00 : f32
    %171 = vector.broadcast %cst_149 : f32 to vector<16x64xf32>
    %172 = arith.maximumf %171, %170 : vector<16x64xf32>
    %173 = vector.broadcast %cst_150 : f32 to vector<16x64xf32>
    %174 = arith.minimumf %173, %172 : vector<16x64xf32>
    %175 = arith.mulf %168, %174 : vector<16x64xf32>
    %cst_151 = arith.constant 0.166666672 : f32
    %176 = vector.broadcast %cst_151 : f32 to vector<16x64xf32>
    %177 = arith.mulf %175, %176 : vector<16x64xf32>
    %c0_152 = arith.constant 0 : index
    %c0_153 = arith.constant 0 : index
    %c0_154 = arith.constant 0 : index
    %178 = vector.load %arg11[%c0_152, %c0_153, %c0_154] : memref<1x16x64xf32, #tpu.memory_space<vmem>>, vector<1x16x64xf32>
    %179 = vector.shape_cast %178 : vector<1x16x64xf32> to vector<16x64xf32>
    %180 = vector.shape_cast %177 : vector<16x64xf32> to vector<1x16x64xf32>
    tpu.vector_store %arg11[%c0_152, %c0_153, %c0_154], %180 {strides = array<i32>} : memref<1x16x64xf32, #tpu.memory_space<vmem>>, vector<1x16x64xf32>,
    return
  }
  func.func @transform_0(%arg0: i32, %arg1: i32) -> (i32, i32, i32, i32, i32, i32) {
    %c0_i32 = arith.constant 0 : i32
    %c0_i32_0 = arith.constant 0 : i32
    %c0_i32_1 = arith.constant 0 : i32
    %c0_i32_2 = arith.constant 0 : i32
    %c0_i32_3 = arith.constant 0 : i32
    return %arg0, %c0_i32, %arg1, %c0_i32_0, %c0_i32_1, %c0_i32_2 : i32, i32, i32, i32, i32, i32
  }
  func.func @transform_1(%arg0: i32, %arg1: i32) -> (i32, i32, i32, i32, i32, i32) {
    %c8_i32 = arith.constant 8 : i32
    %0 = arith.muli %arg1, %c8_i32 : i32
    %c8_i32_0 = arith.constant 8 : i32
    %1 = arith.addi %0, %c8_i32_0 : i32
    %c0_i32 = arith.constant 0 : i32
    %c0_i32_1 = arith.constant 0 : i32
    %c0_i32_2 = arith.constant 0 : i32
    %c0_i32_3 = arith.constant 0 : i32
    %c0_i32_4 = arith.constant 0 : i32
    return %arg0, %c0_i32, %1, %c0_i32_1, %c0_i32_2, %c0_i32_3 : i32, i32, i32, i32, i32, i32
  }
  func.func @transform_2(%arg0: i32, %arg1: i32) -> (i32, i32) {
    %c0_i32 = arith.constant 0 : i32
    %c0_i32_0 = arith.constant 0 : i32
    %c0_i32_1 = arith.constant 0 : i32
    return %c0_i32, %c0_i32_0 : i32, i32
  }
  func.func @transform_3(%arg0: i32, %arg1: i32) -> (i32, i32) {
    %c0_i32 = arith.constant 0 : i32
    %c0_i32_0 = arith.constant 0 : i32
    %c0_i32_1 = arith.constant 0 : i32
    return %c0_i32, %c0_i32_0 : i32, i32
  }
  func.func @transform_4(%arg0: i32, %arg1: i32) -> (i32, i32) {
    %c0_i32 = arith.constant 0 : i32
    %c0_i32_0 = arith.constant 0 : i32
    %c0_i32_1 = arith.constant 0 : i32
    return %c0_i32, %c0_i32_0 : i32, i32
  }
  func.func @transform_5(%arg0: i32, %arg1: i32) -> (i32, i32) {
    %c0_i32 = arith.constant 0 : i32
    %c0_i32_0 = arith.constant 0 : i32
    %c0_i32_1 = arith.constant 0 : i32
    return %c0_i32, %c0_i32_0 : i32, i32
  }
  func.func @transform_6(%arg0: i32, %arg1: i32) -> (i32, i32) {
    %c0_i32 = arith.constant 0 : i32
    %c0_i32_0 = arith.constant 0 : i32
    %c0_i32_1 = arith.constant 0 : i32
    return %c0_i32, %c0_i32_0 : i32, i32
  }
  func.func @transform_7(%arg0: i32, %arg1: i32) -> (i32, i32) {
    %c0_i32 = arith.constant 0 : i32
    %c0_i32_0 = arith.constant 0 : i32
    %c0_i32_1 = arith.constant 0 : i32
    return %c0_i32, %c0_i32_0 : i32, i32
  }
  func.func @transform_8(%arg0: i32, %arg1: i32) -> (i32, i32) {
    %c0_i32 = arith.constant 0 : i32
    %c0_i32_0 = arith.constant 0 : i32
    %c0_i32_1 = arith.constant 0 : i32
    return %c0_i32, %c0_i32_0 : i32, i32
  }
  func.func @transform_9(%arg0: i32, %arg1: i32) -> (i32, i32, i32) {
    %c0_i32 = arith.constant 0 : i32
    %c0_i32_0 = arith.constant 0 : i32
    return %arg0, %c0_i32, %arg1 : i32, i32, i32
  }
}

</mosaic_0001>

<llo_original>
// kernel: shuffle_v2_downsampling.1
$region0: #{shuffle_v2_downsampling.1}
  #allocation0 [shape = 'u32[]', space=smem, size = 0x4, offset = 0x4, fixed_abs, tag = 'smem constant byte address 0x4 - core index']
  #allocation1 [shape = 'u32[72,128]{1,0:T(1,128)}', space=vmem, size = 0x9000, scoped, tag = 'internal scratch']
  #allocation2 [shape = 'f32[2,9,2,16,8]{4,3,2,1,0:T(8,128)}', space=vmem, size = 0x48000, scoped, tag = 'scratch operand']
  #allocation3 [shape = 'f32[2,9,2,16,4]{4,3,2,1,0:T(8,128)}', space=vmem, size = 0x48000, scoped, tag = 'scratch operand']
  %s0 = inlined_call_operand.vmem [shape: f32[2,2,9,2,16,8], index: 0, kind: input, shape index: {}, may-alias: {0,1}]
  %s1 = inlined_call_operand.vmem [shape: f32[2,2,9,2,16,8], index: 1, kind: input, shape index: {}, may-alias: {0,1}]
  %s2 = inlined_call_operand.vmem [shape: f32[9,8], index: 2, kind: input, shape index: {}]
  %s3 = inlined_call_operand.vmem [shape: f32[8,4], index: 3, kind: input, shape index: {}]
  %s4 = inlined_call_operand.vmem [shape: f32[1,4], index: 4, kind: input, shape index: {}]
  %s5 = inlined_call_operand.vmem [shape: f32[9,4], index: 5, kind: input, shape index: {}]
  %s6 = inlined_call_operand.vmem [shape: f32[16,8], index: 6, kind: input, shape index: {}]
  %s7 = inlined_call_operand.vmem [shape: f32[16,4], index: 7, kind: input, shape index: {}]
  %s8 = inlined_call_operand.vmem [shape: f32[16,1], index: 8, kind: input, shape index: {}]
  %s9 = inlined_call_operand.vmem [shape: f32[2,16,64], index: 9, kind: output, shape index: {}]
  %s10 = sld [smem:[#allocation0]]
  $region163: #{shuffle_v2_downsampling.1} parent=0
    _
  %s12 = ssub.s32 1, %s10
  %s13 = scalar_select 0, %s12, %s10
  $region1: #{shuffle_v2_downsampling.1} parent=0
    #allocation4 [shape = 'u8[524288]{0}', space=vmem, size = 0x80000, scoped, tag = 'input window, operand 0']
    #allocation5 [shape = 'u8[65536]{0}', space=vmem, size = 0x10000, scoped, tag = 'input window, operand 1']
    loop: start=0, step=1, limit=4
    $region2: #{shuffle_v2_downsampling.1} parent=1 // loop_pre_header
      _
    $region3: #{shuffle_v2_downsampling.1} parent=1 // loop_header
      %s15 = sphi 0, %s19
      %p16 = scmp.ge.s32.totalorder %s15, 4
      %s22 = sphi 0, %s34
      %s23 = sphi 0, %s30
      %s24 = sphi 0, %s22
      %s25 = sphi 0, %s23
      %s26 = sphi 0, %s24
      %s27 = sphi 0, %s25
      %s39 = sphi 0, %s41
      %s42 = sphi 0, %s39
      %s43 = sphi 0, %s42
      %s59 = sphi 0, %s43
      %s71 = sphi 0, %s73
      %s74 = sphi 0, %s71
      %s75 = sphi 0, %s74
      %s91 = sphi 0, %s75
      %s95 = sphi 0, %s95
      %s97 = sphi 0, %s95
      %s98 = sphi 0, %s97
      %s112 = sphi 0, %s98
      %s116 = sphi 0, %s116
      %s118 = sphi 0, %s116
      %s119 = sphi 0, %s118
      %s133 = sphi 0, %s119
      %s137 = sphi 0, %s137
      %s139 = sphi 0, %s137
      %s140 = sphi 0, %s139
      %s154 = sphi 0, %s140
      %s158 = sphi 0, %s158
      %s160 = sphi 0, %s158
      %s161 = sphi 0, %s160
      %s175 = sphi 0, %s161
      %s179 = sphi 0, %s179
      %s181 = sphi 0, %s179
      %s182 = sphi 0, %s181
      %s196 = sphi 0, %s182
      %s200 = sphi 0, %s200
      %s202 = sphi 0, %s200
      %s203 = sphi 0, %s202
      %s217 = sphi 0, %s203
      %s221 = sphi 0, %s221
      %s223 = sphi 0, %s221
      %s224 = sphi 0, %s223
      %s238 = sphi 0, %s224
      %s246 = sphi 0, %s248
      %s249 = sphi 0, %s246
      %s250 = sphi 0, %s249
      %s266 = sphi 0, %s250
    $region4: #{shuffle_v2_downsampling.1} parent=1 // loop_header_branch
      %18 = sbr.rel (%p16) target = $region8
    $region5: #{shuffle_v2_downsampling.1} parent=1 // loop_body
      %s20 = ssub.s32 %s15, 1
      %s21 = ssub.s32 %s15, 2
      %s28 = sadd.s32 1, %s23
      %p29 = scmp.ge.s32.totalorder %s28, 1
      %s30 = scalar_select %p29, 0, %s28
      %s31 = sadd.s32 1, %s22
      %s32 = scalar_select %p29, %s31, %s22
      %p33 = scmp.ge.s32.totalorder %s32, 2
      %s34 = scalar_select %p33, 0, %s32
      %s35 = ssub.s32 %s22, %s34
      %s36 = ssub.s32 %s23, %s30
      %s37 = sor.u32 %s35, %s36
      %p38 = scmp.eq.s32.totalorder %s37, 0
      %s40 = sadd.s32 %s39, 1
      %s41 = scalar_select %p38, %s39, %s40
      %p44 = pneg %p38
      %p45 = scmp.eq.s32.totalorder %s15, 1
      %p46 = por %p44, %p45
      %p47 = scmp.ne.s32.totalorder %s39, %s42
      %p48 = scmp.eq.s32.totalorder %s15, 0
      %p49 = por %p47, %p48
      %p50 = scmp.ne.s32.totalorder %s39, %s42
      %p51 = scmp.eq.s32.totalorder %s20, 1
      %p52 = por %p50, %p51
      %p53 = scmp.ne.s32.totalorder %s42, %s43
      %p54 = scmp.eq.s32.totalorder %s20, 0
      %p55 = por %p53, %p54
      %p56 = scmp.ne.s32.totalorder %s42, %s43
      %p57 = scmp.eq.s32.totalorder %s21, 1
      %p58 = por %p56, %p57
      %p60 = scmp.ne.s32.totalorder %s43, %s59
      %p61 = scmp.eq.s32.totalorder %s21, 0
      %p62 = por %p60, %p61
      %s63 = smul.u32 %s23, 8
      %s64 = sadd.s32 %s63, 8
      %s65 = smul.u32 %s30, 8
      %s66 = sadd.s32 %s65, 8
      %s67 = ssub.s32 %s22, %s34
      %s68 = ssub.s32 %s64, %s66
      %s69 = sor.u32 %s67, %s68
      %p70 = scmp.eq.s32.totalorder %s69, 0
      %s72 = sadd.s32 %s71, 1
      %s73 = scalar_select %p70, %s71, %s72
      %p76 = pneg %p70
      %p77 = scmp.eq.s32.totalorder %s15, 1
      %p78 = por %p76, %p77
      %p79 = scmp.ne.s32.totalorder %s71, %s74
      %p80 = scmp.eq.s32.totalorder %s15, 0
      %p81 = por %p79, %p80
      %p82 = scmp.ne.s32.totalorder %s71, %s74
      %p83 = scmp.eq.s32.totalorder %s20, 1
      %p84 = por %p82, %p83
      %p85 = scmp.ne.s32.totalorder %s74, %s75
      %p86 = scmp.eq.s32.totalorder %s20, 0
      %p87 = por %p85, %p86
      %p88 = scmp.ne.s32.totalorder %s74, %s75
      %p89 = scmp.eq.s32.totalorder %s21, 1
      %p90 = por %p88, %p89
      %p92 = scmp.ne.s32.totalorder %s75, %s91
      %p93 = scmp.eq.s32.totalorder %s21, 0
      %p94 = por %p92, %p93
      %s96 = sadd.s32 %s95, 1
      %p99 = scmp.eq.s32.totalorder %s15, 1
      %p100 = scmp.ne.s32.totalorder %s95, %s97
      %p101 = scmp.eq.s32.totalorder %s15, 0
      %p102 = por %p100, %p101
      %p103 = scmp.ne.s32.totalorder %s95, %s97
      %p104 = scmp.eq.s32.totalorder %s20, 1
      %p105 = por %p103, %p104
      %p106 = scmp.ne.s32.totalorder %s97, %s98
      %p107 = scmp.eq.s32.totalorder %s20, 0
      %p108 = por %p106, %p107
      %p109 = scmp.ne.s32.totalorder %s97, %s98
      %p110 = scmp.eq.s32.totalorder %s21, 1
      %p111 = por %p109, %p110
      %p113 = scmp.ne.s32.totalorder %s98, %s112
      %p114 = scmp.eq.s32.totalorder %s21, 0
      %p115 = por %p113, %p114
      %s117 = sadd.s32 %s116, 1
      %p120 = scmp.eq.s32.totalorder %s15, 1
      %p121 = scmp.ne.s32.totalorder %s116, %s118
      %p122 = scmp.eq.s32.totalorder %s15, 0
      %p123 = por %p121, %p122
      %p124 = scmp.ne.s32.totalorder %s116, %s118
      %p125 = scmp.eq.s32.totalorder %s20, 1
      %p126 = por %p124, %p125
      %p127 = scmp.ne.s32.totalorder %s118, %s119
      %p128 = scmp.eq.s32.totalorder %s20, 0
      %p129 = por %p127, %p128
      %p130 = scmp.ne.s32.totalorder %s118, %s119
      %p131 = scmp.eq.s32.totalorder %s21, 1
      %p132 = por %p130, %p131
      %p134 = scmp.ne.s32.totalorder %s119, %s133
      %p135 = scmp.eq.s32.totalorder %s21, 0
      %p136 = por %p134, %p135
      %s138 = sadd.s32 %s137, 1
      %p141 = scmp.eq.s32.totalorder %s15, 1
      %p142 = scmp.ne.s32.totalorder %s137, %s139
      %p143 = scmp.eq.s32.totalorder %s15, 0
      %p144 = por %p142, %p143
      %p145 = scmp.ne.s32.totalorder %s137, %s139
      %p146 = scmp.eq.s32.totalorder %s20, 1
      %p147 = por %p145, %p146
      %p148 = scmp.ne.s32.totalorder %s139, %s140
      %p149 = scmp.eq.s32.totalorder %s20, 0
      %p150 = por %p148, %p149
      %p151 = scmp.ne.s32.totalorder %s139, %s140
      %p152 = scmp.eq.s32.totalorder %s21, 1
      %p153 = por %p151, %p152
      %p155 = scmp.ne.s32.totalorder %s140, %s154
      %p156 = scmp.eq.s32.totalorder %s21, 0
      %p157 = por %p155, %p156
      %s159 = sadd.s32 %s158, 1
      %p162 = scmp.eq.s32.totalorder %s15, 1
      %p163 = scmp.ne.s32.totalorder %s158, %s160
      %p164 = scmp.eq.s32.totalorder %s15, 0
      %p165 = por %p163, %p164
      %p166 = scmp.ne.s32.totalorder %s158, %s160
      %p167 = scmp.eq.s32.totalorder %s20, 1
      %p168 = por %p166, %p167
      %p169 = scmp.ne.s32.totalorder %s160, %s161
      %p170 = scmp.eq.s32.totalorder %s20, 0
      %p171 = por %p169, %p170
      %p172 = scmp.ne.s32.totalorder %s160, %s161
      %p173 = scmp.eq.s32.totalorder %s21, 1
      %p174 = por %p172, %p173
      %p176 = scmp.ne.s32.totalorder %s161, %s175
      %p177 = scmp.eq.s32.totalorder %s21, 0
      %p178 = por %p176, %p177
      %s180 = sadd.s32 %s179, 1
      %p183 = scmp.eq.s32.totalorder %s15, 1
      %p184 = scmp.ne.s32.totalorder %s179, %s181
      %p185 = scmp.eq.s32.totalorder %s15, 0
      %p186 = por %p184, %p185
      %p187 = scmp.ne.s32.totalorder %s179, %s181
      %p188 = scmp.eq.s32.totalorder %s20, 1
      %p189 = por %p187, %p188
      %p190 = scmp.ne.s32.totalorder %s181, %s182
      %p191 = scmp.eq.s32.totalorder %s20, 0
      %p192 = por %p190, %p191
      %p193 = scmp.ne.s32.totalorder %s181, %s182
      %p194 = scmp.eq.s32.totalorder %s21, 1
      %p195 = por %p193, %p194
      %p197 = scmp.ne.s32.totalorder %s182, %s196
      %p198 = scmp.eq.s32.totalorder %s21, 0
      %p199 = por %p197, %p198
      %s201 = sadd.s32 %s200, 1
      %p204 = scmp.eq.s32.totalorder %s15, 1
      %p205 = scmp.ne.s32.totalorder %s200, %s202
      %p206 = scmp.eq.s32.totalorder %s15, 0
      %p207 = por %p205, %p206
      %p208 = scmp.ne.s32.totalorder %s200, %s202
      %p209 = scmp.eq.s32.totalorder %s20, 1
      %p210 = por %p208, %p209
      %p211 = scmp.ne.s32.totalorder %s202, %s203
      %p212 = scmp.eq.s32.totalorder %s20, 0
      %p213 = por %p211, %p212
      %p214 = scmp.ne.s32.totalorder %s202, %s203
      %p215 = scmp.eq.s32.totalorder %s21, 1
      %p216 = por %p214, %p215
      %p218 = scmp.ne.s32.totalorder %s203, %s217
      %p219 = scmp.eq.s32.totalorder %s21, 0
      %p220 = por %p218, %p219
      %s222 = sadd.s32 %s221, 1
      %p225 = scmp.eq.s32.totalorder %s15, 1
      %p226 = scmp.ne.s32.totalorder %s221, %s223
      %p227 = scmp.eq.s32.totalorder %s15, 0
      %p228 = por %p226, %p227
      %p229 = scmp.ne.s32.totalorder %s221, %s223
      %p230 = scmp.eq.s32.totalorder %s20, 1
      %p231 = por %p229, %p230
      %p232 = scmp.ne.s32.totalorder %s223, %s224
      %p233 = scmp.eq.s32.totalorder %s20, 0
      %p234 = por %p232, %p233
      %p235 = scmp.ne.s32.totalorder %s223, %s224
      %p236 = scmp.eq.s32.totalorder %s21, 1
      %p237 = por %p235, %p236
      %p239 = scmp.ne.s32.totalorder %s224, %s238
      %p240 = scmp.eq.s32.totalorder %s21, 0
      %p241 = por %p239, %p240
      %s242 = ssub.s32 %s22, %s34
      %s243 = ssub.s32 %s23, %s30
      %s244 = sor.u32 %s242, %s243
      %p245 = scmp.eq.s32.totalorder %s244, 0
      %s247 = sadd.s32 %s246, 1
      %s248 = scalar_select %p245, %s246, %s247
      %p251 = pneg %p245
      %p252 = scmp.eq.s32.totalorder %s15, 1
      %p253 = por %p251, %p252
      %p254 = scmp.ne.s32.totalorder %s246, %s249
      %p255 = scmp.eq.s32.totalorder %s15, 0
      %p256 = por %p254, %p255
      %p257 = scmp.ne.s32.totalorder %s246, %s249
      %p258 = scmp.eq.s32.totalorder %s20, 1
      %p259 = por %p257, %p258
      %p260 = scmp.ne.s32.totalorder %s249, %s250
      %p261 = scmp.eq.s32.totalorder %s20, 0
      %p262 = por %p260, %p261
      %p263 = scmp.ne.s32.totalorder %s249, %s250
      %p264 = scmp.eq.s32.totalorder %s21, 1
      %p265 = por %p263, %p264
      %p267 = scmp.ne.s32.totalorder %s250, %s266
      %p268 = scmp.eq.s32.totalorder %s21, 0
      %p269 = por %p267, %p268
      %p270 = scmp.le.s32.totalorder 1, %s15
      %p271 = scmp.lt.s32.totalorder %s15, 3
      %p272 = pnand %p270, %p271
      %p273 = pneg %p272
      // Predicated region
      $region9: #{shuffle_v2_downsampling.1} parent=5 // pred_check
        _
      $region10: #{shuffle_v2_downsampling.1} parent=5 // pred_check_branch
        %275 = sbr.rel (%p272) target = $region12
      $region11: #{shuffle_v2_downsampling.1} parent=5 // pred_region
        %s276 = ssub.s32 %s15, 1
        // Predicated region
        $region13: #{shuffle_v2_downsampling.1} parent=11 // pred_check
          %p277 = pneg %p108
        $region14: #{shuffle_v2_downsampling.1} parent=11 // pred_check_branch
          %279 = sbr.rel (%p277) target = $region16
        $region15: #{shuffle_v2_downsampling.1} parent=11 // pred_region
          _
        $region16: #{shuffle_v2_downsampling.1} parent=11 // pred_fallthru
          _
        // Predicated region
        $region17: #{shuffle_v2_downsampling.1} parent=11 // pred_check
          %p280 = pneg %p129
        $region18: #{shuffle_v2_downsampling.1} parent=11 // pred_check_branch
          %282 = sbr.rel (%p280) target = $region20
        $region19: #{shuffle_v2_downsampling.1} parent=11 // pred_region
          _
        $region20: #{shuffle_v2_downsampling.1} parent=11 // pred_fallthru
          _
        // Predicated region
        $region21: #{shuffle_v2_downsampling.1} parent=11 // pred_check
          %p283 = pneg %p150
        $region22: #{shuffle_v2_downsampling.1} parent=11 // pred_check_branch
          %285 = sbr.rel (%p283) target = $region24
        $region23: #{shuffle_v2_downsampling.1} parent=11 // pred_region
          _
        $region24: #{shuffle_v2_downsampling.1} parent=11 // pred_fallthru
          _
        // Predicated region
        $region25: #{shuffle_v2_downsampling.1} parent=11 // pred_check
          %p286 = pneg %p171
        $region26: #{shuffle_v2_downsampling.1} parent=11 // pred_check_branch
          %288 = sbr.rel (%p286) target = $region28
        $region27: #{shuffle_v2_downsampling.1} parent=11 // pred_region
          _
        $region28: #{shuffle_v2_downsampling.1} parent=11 // pred_fallthru
          _
        // Predicated region
        $region29: #{shuffle_v2_downsampling.1} parent=11 // pred_check
          %p289 = pneg %p192
        $region30: #{shuffle_v2_downsampling.1} parent=11 // pred_check_branch
          %291 = sbr.rel (%p289) target = $region32
        $region31: #{shuffle_v2_downsampling.1} parent=11 // pred_region
          _
        $region32: #{shuffle_v2_downsampling.1} parent=11 // pred_fallthru
          _
        // Predicated region
        $region33: #{shuffle_v2_downsampling.1} parent=11 // pred_check
          %p292 = pneg %p213
        $region34: #{shuffle_v2_downsampling.1} parent=11 // pred_check_branch
          %294 = sbr.rel (%p292) target = $region36
        $region35: #{shuffle_v2_downsampling.1} parent=11 // pred_region
          _
        $region36: #{shuffle_v2_downsampling.1} parent=11 // pred_fallthru
          _
        // Predicated region
        $region37: #{shuffle_v2_downsampling.1} parent=11 // pred_check
          %p295 = pneg %p234
        $region38: #{shuffle_v2_downsampling.1} parent=11 // pred_check_branch
          %297 = sbr.rel (%p295) target = $region40
        $region39: #{shuffle_v2_downsampling.1} parent=11 // pred_region
          _
        $region40: #{shuffle_v2_downsampling.1} parent=11 // pred_fallthru
          _
      $region12: #{shuffle_v2_downsampling.1} parent=5 // pred_fallthru
        _
      %p298 = scmp.lt.s32.totalorder %s15, 2
      // Predicated region
      $region41: #{shuffle_v2_downsampling.1} parent=5 // pred_check
        %p299 = pneg %p298
      $region42: #{shuffle_v2_downsampling.1} parent=5 // pred_check_branch
        %301 = sbr.rel (%p299) target = $region44
      $region43: #{shuffle_v2_downsampling.1} parent=5 // pred_region
        // Predicated region
        $region45: #{shuffle_v2_downsampling.1} parent=43 // pred_check
          %p302 = pneg %p49
        $region46: #{shuffle_v2_downsampling.1} parent=43 // pred_check_branch
          %304 = sbr.rel (%p302) target = $region48
        $region47: #{shuffle_v2_downsampling.1} parent=43 // pred_region
          %s305 = sand.u32 %s39, 1
          %s306 = sand.u32 %s39, 1
          %s307 = smul.addr %s306, 512
          %s308 = scalar_lea.vmem [#allocation4], %s307
          %s309 = smul.u32 8, %s23
          %s310 = ssub.s32 9, %s309
          %p311 = scmp.lt.s32.totalorder %s310, 8
          %s312 = scalar_select %p311, %s310, 8
          %s313 = smul.u32 16, %s312
          %s314 = smul.u32 %s313, 2
          %s315 = smul.u32 %s314, 2
          %p316 = scmp.ne.s32.totalorder 0, %s315
          %s317 = smul.addr %s309, 4
          %s318 = smul.addr %s22, 72
          %s319 = sadd.s32 %s317, %s318
          %s320 = smul.addr %s319, 8
          %s321 = scalar_lea.vmem %s0, %s320
          %s322 = smul.u32 %s312, 4
          // Predicated region
          $region49: #{shuffle_v2_downsampling.1} parent=47 // pred_check
            %p323 = pneg %p316
          $region50: #{shuffle_v2_downsampling.1} parent=47 // pred_check_branch
            %325 = sbr.rel (%p323) target = $region52
          $region51: #{shuffle_v2_downsampling.1} parent=47 // pred_region
            // Predicated region
            $region53: #{shuffle_v2_downsampling.1} parent=51 // pred_check
              _
            $region54: #{shuffle_v2_downsampling.1} parent=51 // pred_check_branch
              %327 = sbr.rel (0) target = $region56
            $region55: #{shuffle_v2_downsampling.1} parent=51 // pred_region
              // Predicated region
              $region75: #{shuffle_v2_downsampling.1} parent=55 // pred_check
                _
              $region76: #{shuffle_v2_downsampling.1} parent=55 // pred_check_branch
                %441 = sbr.rel (0) target = $region78
              $region77: #{shuffle_v2_downsampling.1} parent=55 // pred_region
                %s442 = sshrl.u32 %s322, 4
                // While loop
                $region79: #{shuffle_v2_downsampling.1} parent=77 // loop_pre_header
                  _
                $region80: #{shuffle_v2_downsampling.1} parent=77 // loop_header
                  %s444 = sphi 0, %s446
                  %p445 = scmp.ge.s32.totalorder %s444, %s442
                  %s449 = sphi 0, %s518
                  %s450 = sphi %s321, %s521
                  %s451 = sphi %s308, %s522
                $region81: #{shuffle_v2_downsampling.1} parent=77 // loop_header_branch
                  %448 = sbr.rel (%p445) target = $region85
                $region82: #{shuffle_v2_downsampling.1} parent=77 // loop_body
                  %v452 = vld [vmem:[%s450] sm:$0xff]
                  %453 = vst [vmem:[%s451] sm:$0xff] %v452
                  %v454 = vld [vmem:[%s450 + $0x8] sm:$0xff]
                  %455 = vst [vmem:[%s451 + $0x8] sm:$0xff] %v454
                  %v456 = vld [vmem:[%s450 + $0x10] sm:$0xff]
                  %457 = vst [vmem:[%s451 + $0x10] sm:$0xff] %v456
                  %v458 = vld [vmem:[%s450 + $0x18] sm:$0xff]
                  %459 = vst [vmem:[%s451 + $0x18] sm:$0xff] %v458
                  %v460 = vld [vmem:[%s450 + $0x20] sm:$0xff]
                  %461 = vst [vmem:[%s451 + $0x20] sm:$0xff] %v460
                  %v462 = vld [vmem:[%s450 + $0x28] sm:$0xff]
                  %463 = vst [vmem:[%s451 + $0x28] sm:$0xff] %v462
                  %v464 = vld [vmem:[%s450 + $0x30] sm:$0xff]
                  %465 = vst [vmem:[%s451 + $0x30] sm:$0xff] %v464
                  %v466 = vld [vmem:[%s450 + $0x38] sm:$0xff]
                  %467 = vst [vmem:[%s451 + $0x38] sm:$0xff] %v466
                  %v468 = vld [vmem:[%s450 + $0x40] sm:$0xff]
                  %469 = vst [vmem:[%s451 + $0x40] sm:$0xff] %v468
                  %v470 = vld [vmem:[%s450 + $0x48] sm:$0xff]
                  %471 = vst [vmem:[%s451 + $0x48] sm:$0xff] %v470
                  %v472 = vld [vmem:[%s450 + $0x50] sm:$0xff]
                  %473 = vst [vmem:[%s451 + $0x50] sm:$0xff] %v472
                  %v474 = vld [vmem:[%s450 + $0x58] sm:$0xff]
                  %475 = vst [vmem:[%s451 + $0x58] sm:$0xff] %v474
                  %v476 = vld [vmem:[%s450 + $0x60] sm:$0xff]
                  %477 = vst [vmem:[%s451 + $0x60] sm:$0xff] %v476
                  %v478 = vld [vmem:[%s450 + $0x68] sm:$0xff]
                  %479 = vst [vmem:[%s451 + $0x68] sm:$0xff] %v478
                  %v480 = vld [vmem:[%s450 + $0x70] sm:$0xff]
                  %481 = vst [vmem:[%s451 + $0x70] sm:$0xff] %v480
                  %v482 = vld [vmem:[%s450 + $0x78] sm:$0xff]
                  %483 = vst [vmem:[%s451 + $0x78] sm:$0xff] %v482
                  %v484 = vld [vmem:[%s450 + $0x120] sm:$0xff]
                  %485 = vst [vmem:[%s451 + $0x100] sm:$0xff] %v484
                  %v486 = vld [vmem:[%s450 + $0x128] sm:$0xff]
                  %487 = vst [vmem:[%s451 + $0x108] sm:$0xff] %v486
                  %v488 = vld [vmem:[%s450 + $0x130] sm:$0xff]
                  %489 = vst [vmem:[%s451 + $0x110] sm:$0xff] %v488
                  %v490 = vld [vmem:[%s450 + $0x138] sm:$0xff]
                  %491 = vst [vmem:[%s451 + $0x118] sm:$0xff] %v490
                  %v492 = vld [vmem:[%s450 + $0x140] sm:$0xff]
                  %493 = vst [vmem:[%s451 + $0x120] sm:$0xff] %v492
                  %v494 = vld [vmem:[%s450 + $0x148] sm:$0xff]
                  %495 = vst [vmem:[%s451 + $0x128] sm:$0xff] %v494
                  %v496 = vld [vmem:[%s450 + $0x150] sm:$0xff]
                  %497 = vst [vmem:[%s451 + $0x130] sm:$0xff] %v496
                  %v498 = vld [vmem:[%s450 + $0x158] sm:$0xff]
                  %499 = vst [vmem:[%s451 + $0x138] sm:$0xff] %v498
                  %v500 = vld [vmem:[%s450 + $0x160] sm:$0xff]
                  %501 = vst [vmem:[%s451 + $0x140] sm:$0xff] %v500
                  %v502 = vld [vmem:[%s450 + $0x168] sm:$0xff]
                  %503 = vst [vmem:[%s451 + $0x148] sm:$0xff] %v502
                  %v504 = vld [vmem:[%s450 + $0x170] sm:$0xff]
                  %505 = vst [vmem:[%s451 + $0x150] sm:$0xff] %v504
                  %v506 = vld [vmem:[%s450 + $0x178] sm:$0xff]
                  %507 = vst [vmem:[%s451 + $0x158] sm:$0xff] %v506
                  %v508 = vld [vmem:[%s450 + $0x180] sm:$0xff]
                  %509 = vst [vmem:[%s451 + $0x160] sm:$0xff] %v508
                  %v510 = vld [vmem:[%s450 + $0x188] sm:$0xff]
                  %511 = vst [vmem:[%s451 + $0x168] sm:$0xff] %v510
                  %v512 = vld [vmem:[%s450 + $0x190] sm:$0xff]
                  %513 = vst [vmem:[%s451 + $0x170] sm:$0xff] %v512
                  %v514 = vld [vmem:[%s450 + $0x198] sm:$0xff]
                  %515 = vst [vmem:[%s451 + $0x178] sm:$0xff] %v514
                  %s516 = sadd.s32 1, %s449
                  %p517 = scmp.ge.s32.totalorder %s516, %s442
                  %s518 = scalar_select %p517, 0, %s516
                  %s519 = smul.u32 %s518, 128
                  %s520 = smul.u32 %s518, 128
                  %s521 = scalar_lea.vmem %s321, %s519
                  %s522 = scalar_lea.vmem %s308, %s520 [#allocation4]
                $region83: #{shuffle_v2_downsampling.1} parent=77 // loop_footer
                  %s446 = sadd.s32 %s444, 1
                $region84: #{shuffle_v2_downsampling.1} parent=77 // loop_footer_branch
                  %443 = sbr.rel target = $region80
                $region85: #{shuffle_v2_downsampling.1} parent=77 // loop_exit
                  _
                %s523 = sshrl.u32 %s322, 4
                %s524 = sand.u32 %s322, 15
                %s525 = smul.u32 %s523, 16
                %s526 = smul.u32 8, %s525
                %s527 = scalar_lea.vmem %s321, %s526
                %s528 = smul.u32 8, %s525
                %s529 = scalar_lea.vmem %s308, %s528 [#allocation4]
                // While loop
                $region86: #{shuffle_v2_downsampling.1} parent=77 // loop_pre_header
                  _
                $region87: #{shuffle_v2_downsampling.1} parent=77 // loop_header
                  %s531 = sphi 0, %s533
                  %p532 = scmp.ge.s32.totalorder %s531, %s524
                  %s536 = sphi 0, %s545
                  %s537 = sphi %s527, %s548
                  %s538 = sphi %s529, %s549
                $region88: #{shuffle_v2_downsampling.1} parent=77 // loop_header_branch
                  %535 = sbr.rel (%p532) target = $region92
                $region89: #{shuffle_v2_downsampling.1} parent=77 // loop_body
                  %v539 = vld [vmem:[%s537] sm:$0xff]
                  %540 = vst [vmem:[%s538] sm:$0xff] %v539
                  %v541 = vld [vmem:[%s537 + $0x120] sm:$0xff]
                  %542 = vst [vmem:[%s538 + $0x100] sm:$0xff] %v541
                  %s543 = sadd.s32 1, %s536
                  %p544 = scmp.ge.s32.totalorder %s543, %s524
                  %s545 = scalar_select %p544, 0, %s543
                  %s546 = smul.u32 %s545, 8
                  %s547 = smul.u32 %s545, 8
                  %s548 = scalar_lea.vmem %s527, %s546
                  %s549 = scalar_lea.vmem %s529, %s547 [#allocation4]
                $region90: #{shuffle_v2_downsampling.1} parent=77 // loop_footer
                  %s533 = sadd.s32 %s531, 1
                $region91: #{shuffle_v2_downsampling.1} parent=77 // loop_footer_branch
                  %530 = sbr.rel target = $region87
                $region92: #{shuffle_v2_downsampling.1} parent=77 // loop_exit
                  _
              $region78: #{shuffle_v2_downsampling.1} parent=55 // pred_fallthru
                _
              // Predicated region
              $region93: #{shuffle_v2_downsampling.1} parent=55 // pred_check
                _
              $region94: #{shuffle_v2_downsampling.1} parent=55 // pred_check_branch
                %551 = sbr.rel target = $region96
              $region95: #{shuffle_v2_downsampling.1} parent=55 // pred_region
                _
              $region96: #{shuffle_v2_downsampling.1} parent=55 // pred_fallthru
                _
            $region56: #{shuffle_v2_downsampling.1} parent=51 // pred_fallthru
              _
            // Predicated region
            $region57: #{shuffle_v2_downsampling.1} parent=51 // pred_check
              _
            $region58: #{shuffle_v2_downsampling.1} parent=51 // pred_check_branch
              %329 = sbr.rel target = $region60
            $region59: #{shuffle_v2_downsampling.1} parent=51 // pred_region
              %s331 = ssub.s32 256, 1
              %s332 = sshrl.u32 %s322, 4
              // While loop
              $region61: #{shuffle_v2_downsampling.1} parent=59 // loop_pre_header
                _
              $region62: #{shuffle_v2_downsampling.1} parent=59 // loop_header
                %s334 = sphi 0, %s336
                %p335 = scmp.ge.s32.totalorder %s334, %s332
                %s339 = sphi 0, %s408
                %s340 = sphi %s321, %s411
                %s341 = sphi %s308, %s412
              $region63: #{shuffle_v2_downsampling.1} parent=59 // loop_header_branch
                %338 = sbr.rel (%p335) target = $region67
              $region64: #{shuffle_v2_downsampling.1} parent=59 // loop_body
                %v342 = vld [vmem:[%s340] sm:%s331]
                %343 = vst [vmem:[%s341] sm:%s331] %v342
                %v344 = vld [vmem:[%s340 + $0x8] sm:%s331]
                %345 = vst [vmem:[%s341 + $0x8] sm:%s331] %v344
                %v346 = vld [vmem:[%s340 + $0x10] sm:%s331]
                %347 = vst [vmem:[%s341 + $0x10] sm:%s331] %v346
                %v348 = vld [vmem:[%s340 + $0x18] sm:%s331]
                %349 = vst [vmem:[%s341 + $0x18] sm:%s331] %v348
                %v350 = vld [vmem:[%s340 + $0x20] sm:%s331]
                %351 = vst [vmem:[%s341 + $0x20] sm:%s331] %v350
                %v352 = vld [vmem:[%s340 + $0x28] sm:%s331]
                %353 = vst [vmem:[%s341 + $0x28] sm:%s331] %v352
                %v354 = vld [vmem:[%s340 + $0x30] sm:%s331]
                %355 = vst [vmem:[%s341 + $0x30] sm:%s331] %v354
                %v356 = vld [vmem:[%s340 + $0x38] sm:%s331]
                %357 = vst [vmem:[%s341 + $0x38] sm:%s331] %v356
                %v358 = vld [vmem:[%s340 + $0x40] sm:%s331]
                %359 = vst [vmem:[%s341 + $0x40] sm:%s331] %v358
                %v360 = vld [vmem:[%s340 + $0x48] sm:%s331]
                %361 = vst [vmem:[%s341 + $0x48] sm:%s331] %v360
                %v362 = vld [vmem:[%s340 + $0x50] sm:%s331]
                %363 = vst [vmem:[%s341 + $0x50] sm:%s331] %v362
                %v364 = vld [vmem:[%s340 + $0x58] sm:%s331]
                %365 = vst [vmem:[%s341 + $0x58] sm:%s331] %v364
                %v366 = vld [vmem:[%s340 + $0x60] sm:%s331]
                %367 = vst [vmem:[%s341 + $0x60] sm:%s331] %v366
                %v368 = vld [vmem:[%s340 + $0x68] sm:%s331]
                %369 = vst [vmem:[%s341 + $0x68] sm:%s331] %v368
                %v370 = vld [vmem:[%s340 + $0x70] sm:%s331]
                %371 = vst [vmem:[%s341 + $0x70] sm:%s331] %v370
                %v372 = vld [vmem:[%s340 + $0x78] sm:%s331]
                %373 = vst [vmem:[%s341 + $0x78] sm:%s331] %v372
                %v374 = vld [vmem:[%s340 + $0x120] sm:%s331]
                %375 = vst [vmem:[%s341 + $0x100] sm:%s331] %v374
                %v376 = vld [vmem:[%s340 + $0x128] sm:%s331]
                %377 = vst [vmem:[%s341 + $0x108] sm:%s331] %v376
                %v378 = vld [vmem:[%s340 + $0x130] sm:%s331]
                %379 = vst [vmem:[%s341 + $0x110] sm:%s331] %v378
                %v380 = vld [vmem:[%s340 + $0x138] sm:%s331]
                %381 = vst [vmem:[%s341 + $0x118] sm:%s331] %v380
                %v382 = vld [vmem:[%s340 + $0x140] sm:%s331]
                %383 = vst [vmem:[%s341 + $0x120] sm:%s331] %v382
                %v384 = vld [vmem:[%s340 + $0x148] sm:%s331]
                %385 = vst [vmem:[%s341 + $0x128] sm:%s331] %v384
                %v386 = vld [vmem:[%s340 + $0x150] sm:%s331]
                %387 = vst [vmem:[%s341 + $0x130] sm:%s331] %v386
                %v388 = vld [vmem:[%s340 + $0x158] sm:%s331]
                %389 = vst [vmem:[%s341 + $0x138] sm:%s331] %v388
                %v390 = vld [vmem:[%s340 + $0x160] sm:%s331]
                %391 = vst [vmem:[%s341 + $0x140] sm:%s331] %v390
                %v392 = vld [vmem:[%s340 + $0x168] sm:%s331]
                %393 = vst [vmem:[%s341 + $0x148] sm:%s331] %v392
                %v394 = vld [vmem:[%s340 + $0x170] sm:%s331]
                %395 = vst [vmem:[%s341 + $0x150] sm:%s331] %v394
                %v396 = vld [vmem:[%s340 + $0x178] sm:%s331]
                %397 = vst [vmem:[%s341 + $0x158] sm:%s331] %v396
                %v398 = vld [vmem:[%s340 + $0x180] sm:%s331]
                %399 = vst [vmem:[%s341 + $0x160] sm:%s331] %v398
                %v400 = vld [vmem:[%s340 + $0x188] sm:%s331]
                %401 = vst [vmem:[%s341 + $0x168] sm:%s331] %v400
                %v402 = vld [vmem:[%s340 + $0x190] sm:%s331]
                %403 = vst [vmem:[%s341 + $0x170] sm:%s331] %v402
                %v404 = vld [vmem:[%s340 + $0x198] sm:%s331]
                %405 = vst [vmem:[%s341 + $0x178] sm:%s331] %v404
                %s406 = sadd.s32 1, %s339
                %p407 = scmp.ge.s32.totalorder %s406, %s332
                %s408 = scalar_select %p407, 0, %s406
                %s409 = smul.u32 %s408, 128
                %s410 = smul.u32 %s408, 128
                %s411 = scalar_lea.vmem %s321, %s409
                %s412 = scalar_lea.vmem %s308, %s410 [#allocation4]
              $region65: #{shuffle_v2_downsampling.1} parent=59 // loop_footer
                %s336 = sadd.s32 %s334, 1
              $region66: #{shuffle_v2_downsampling.1} parent=59 // loop_footer_branch
                %333 = sbr.rel target = $region62
              $region67: #{shuffle_v2_downsampling.1} parent=59 // loop_exit
                _
              %s413 = sshrl.u32 %s322, 4
              %s414 = sand.u32 %s322, 15
              %s415 = smul.u32 %s413, 16
              %s416 = smul.u32 8, %s415
              %s417 = scalar_lea.vmem %s321, %s416
              %s418 = smul.u32 8, %s415
              %s419 = scalar_lea.vmem %s308, %s418 [#allocation4]
              // While loop
              $region68: #{shuffle_v2_downsampling.1} parent=59 // loop_pre_header
                _
              $region69: #{shuffle_v2_downsampling.1} parent=59 // loop_header
                %s421 = sphi 0, %s423
                %p422 = scmp.ge.s32.totalorder %s421, %s414
                %s426 = sphi 0, %s435
                %s427 = sphi %s417, %s438
                %s428 = sphi %s419, %s439
              $region70: #{shuffle_v2_downsampling.1} parent=59 // loop_header_branch
                %425 = sbr.rel (%p422) target = $region74
              $region71: #{shuffle_v2_downsampling.1} parent=59 // loop_body
                %v429 = vld [vmem:[%s427] sm:%s331]
                %430 = vst [vmem:[%s428] sm:%s331] %v429
                %v431 = vld [vmem:[%s427 + $0x120] sm:%s331]
                %432 = vst [vmem:[%s428 + $0x100] sm:%s331] %v431
                %s433 = sadd.s32 1, %s426
                %p434 = scmp.ge.s32.totalorder %s433, %s414
                %s435 = scalar_select %p434, 0, %s433
                %s436 = smul.u32 %s435, 8
                %s437 = smul.u32 %s435, 8
                %s438 = scalar_lea.vmem %s417, %s436
                %s439 = scalar_lea.vmem %s419, %s437 [#allocation4]
              $region72: #{shuffle_v2_downsampling.1} parent=59 // loop_footer
                %s423 = sadd.s32 %s421, 1
              $region73: #{shuffle_v2_downsampling.1} parent=59 // loop_footer_branch
                %420 = sbr.rel target = $region69
              $region74: #{shuffle_v2_downsampling.1} parent=59 // loop_exit
                _
            $region60: #{shuffle_v2_downsampling.1} parent=51 // pred_fallthru
              _
          $region52: #{shuffle_v2_downsampling.1} parent=47 // pred_fallthru
            _
          %552 = vnop
        $region48: #{shuffle_v2_downsampling.1} parent=43 // pred_fallthru
          _
        // Predicated region
        $region97: #{shuffle_v2_downsampling.1} parent=43 // pred_check
          %p553 = pneg %p81
        $region98: #{shuffle_v2_downsampling.1} parent=43 // pred_check_branch
          %555 = sbr.rel (%p553) target = $region100
        $region99: #{shuffle_v2_downsampling.1} parent=43 // pred_region
          %s556 = sand.u32 %s71, 1
          %s557 = sand.u32 %s71, 1
          %s558 = smul.addr %s557, 64
          %s559 = scalar_lea.vmem [#allocation5], %s558
          %s560 = smul.u32 %s23, 8
          %s561 = sadd.s32 %s560, 8
          %s562 = smul.addr %s561, 4
          %s563 = smul.addr %s22, 72
          %s564 = sadd.s32 %s562, %s563
          %s565 = smul.addr %s564, 8
          %s566 = scalar_lea.vmem %s1, %s565
          // Predicated region
          $region101: #{shuffle_v2_downsampling.1} parent=99 // pred_check
            _
          $region102: #{shuffle_v2_downsampling.1} parent=99 // pred_check_branch
            %568 = sbr.rel (0) target = $region104
          $region103: #{shuffle_v2_downsampling.1} parent=99 // pred_region
            // Predicated region
            $region105: #{shuffle_v2_downsampling.1} parent=103 // pred_check
              _
            $region106: #{shuffle_v2_downsampling.1} parent=103 // pred_check_branch
              %570 = sbr.rel (0) target = $region108
            $region107: #{shuffle_v2_downsampling.1} parent=103 // pred_region
              // Predicated region
              $region120: #{shuffle_v2_downsampling.1} parent=107 // pred_check
                _
              $region121: #{shuffle_v2_downsampling.1} parent=107 // pred_check_branch
                %600 = sbr.rel (0) target = $region123
              $region122: #{shuffle_v2_downsampling.1} parent=107 // pred_region
                loop: start=0, step=1, limit=1
                $region124: #{shuffle_v2_downsampling.1} parent=122 // loop_pre_header
                  _
                $region125: #{shuffle_v2_downsampling.1} parent=122 // loop_header
                  %s602 = sphi 0, %s606
                  %p603 = scmp.ge.s32.totalorder %s602, 1
                  %s607 = sphi %s566, %s566
                  %s608 = sphi %s559, %s559
                $region126: #{shuffle_v2_downsampling.1} parent=122 // loop_header_branch
                  %605 = sbr.rel (%p603) target = $region130
                $region127: #{shuffle_v2_downsampling.1} parent=122 // loop_body
                  %v609 = vld [vmem:[%s607] sm:$0xff]
                  %610 = vst [vmem:[%s608] sm:$0xff] %v609
                  %v611 = vld [vmem:[%s607 + $0x8] sm:$0xff]
                  %612 = vst [vmem:[%s608 + $0x8] sm:$0xff] %v611
                  %v613 = vld [vmem:[%s607 + $0x10] sm:$0xff]
                  %614 = vst [vmem:[%s608 + $0x10] sm:$0xff] %v613
                  %v615 = vld [vmem:[%s607 + $0x18] sm:$0xff]
                  %616 = vst [vmem:[%s608 + $0x18] sm:$0xff] %v615
                  %v617 = vld [vmem:[%s607 + $0x120] sm:$0xff]
                  %618 = vst [vmem:[%s608 + $0x20] sm:$0xff] %v617
                  %v619 = vld [vmem:[%s607 + $0x128] sm:$0xff]
                  %620 = vst [vmem:[%s608 + $0x28] sm:$0xff] %v619
                  %v621 = vld [vmem:[%s607 + $0x130] sm:$0xff]
                  %622 = vst [vmem:[%s608 + $0x30] sm:$0xff] %v621
                  %v623 = vld [vmem:[%s607 + $0x138] sm:$0xff]
                  %624 = vst [vmem:[%s608 + $0x38] sm:$0xff] %v623
                $region128: #{shuffle_v2_downsampling.1} parent=122 // loop_footer
                  %s606 = sadd.s32 1, %s602
                $region129: #{shuffle_v2_downsampling.1} parent=122 // loop_footer_branch
                  %601 = sbr.rel target = $region125
                $region130: #{shuffle_v2_downsampling.1} parent=122 // loop_exit
                  _
              $region123: #{shuffle_v2_downsampling.1} parent=107 // pred_fallthru
                _
              // Predicated region
              $region131: #{shuffle_v2_downsampling.1} parent=107 // pred_check
                _
              $region132: #{shuffle_v2_downsampling.1} parent=107 // pred_check_branch
                %626 = sbr.rel target = $region134
              $region133: #{shuffle_v2_downsampling.1} parent=107 // pred_region
                _
              $region134: #{shuffle_v2_downsampling.1} parent=107 // pred_fallthru
                _
            $region108: #{shuffle_v2_downsampling.1} parent=103 // pred_fallthru
              _
            // Predicated region
            $region109: #{shuffle_v2_downsampling.1} parent=103 // pred_check
              _
            $region110: #{shuffle_v2_downsampling.1} parent=103 // pred_check_branch
              %572 = sbr.rel target = $region112
            $region111: #{shuffle_v2_downsampling.1} parent=103 // pred_region
              %s574 = ssub.s32 256, 1
              loop: start=0, step=1, limit=1
              $region113: #{shuffle_v2_downsampling.1} parent=111 // loop_pre_header
                _
              $region114: #{shuffle_v2_downsampling.1} parent=111 // loop_header
                %s576 = sphi 0, %s580
                %p577 = scmp.ge.s32.totalorder %s576, 1
                %s581 = sphi %s566, %s566
                %s582 = sphi %s559, %s559
              $region115: #{shuffle_v2_downsampling.1} parent=111 // loop_header_branch
                %579 = sbr.rel (%p577) target = $region119
              $region116: #{shuffle_v2_downsampling.1} parent=111 // loop_body
                %v583 = vld [vmem:[%s581] sm:%s574]
                %584 = vst [vmem:[%s582] sm:%s574] %v583
                %v585 = vld [vmem:[%s581 + $0x8] sm:%s574]
                %586 = vst [vmem:[%s582 + $0x8] sm:%s574] %v585
                %v587 = vld [vmem:[%s581 + $0x10] sm:%s574]
                %588 = vst [vmem:[%s582 + $0x10] sm:%s574] %v587
                %v589 = vld [vmem:[%s581 + $0x18] sm:%s574]
                %590 = vst [vmem:[%s582 + $0x18] sm:%s574] %v589
                %v591 = vld [vmem:[%s581 + $0x120] sm:%s574]
                %592 = vst [vmem:[%s582 + $0x20] sm:%s574] %v591
                %v593 = vld [vmem:[%s581 + $0x128] sm:%s574]
                %594 = vst [vmem:[%s582 + $0x28] sm:%s574] %v593
                %v595 = vld [vmem:[%s581 + $0x130] sm:%s574]
                %596 = vst [vmem:[%s582 + $0x30] sm:%s574] %v595
                %v597 = vld [vmem:[%s581 + $0x138] sm:%s574]
                %598 = vst [vmem:[%s582 + $0x38] sm:%s574] %v597
              $region117: #{shuffle_v2_downsampling.1} parent=111 // loop_footer
                %s580 = sadd.s32 1, %s576
              $region118: #{shuffle_v2_downsampling.1} parent=111 // loop_footer_branch
                %575 = sbr.rel target = $region114
              $region119: #{shuffle_v2_downsampling.1} parent=111 // loop_exit
                _
            $region112: #{shuffle_v2_downsampling.1} parent=103 // pred_fallthru
              _
          $region104: #{shuffle_v2_downsampling.1} parent=99 // pred_fallthru
            _
          %627 = vnop
        $region100: #{shuffle_v2_downsampling.1} parent=43 // pred_fallthru
          _
      $region44: #{shuffle_v2_downsampling.1} parent=5 // pred_fallthru
        _
      %p628 = scmp.le.s32.totalorder 1, %s15
      %p629 = scmp.lt.s32.totalorder %s15, 3
      %p630 = pnand %p628, %p629
      %p631 = pneg %p630
      // Predicated region
      $region135: #{shuffle_v2_downsampling.1} parent=5 // pred_check
        _
      $region136: #{shuffle_v2_downsampling.1} parent=5 // pred_check_branch
        %633 = sbr.rel (%p630) target = $region138
      $region137: #{shuffle_v2_downsampling.1} parent=5 // pred_region
        %s634 = ssub.s32 %s15, 1
        %s635 = sand.u32 %s42, 1
        %s636 = sand.u32 %s42, 1
        %s637 = smul.addr %s636, 512
        %s638 = scalar_lea.vmem [#allocation4], %s637
        // Predicated region
        $region139: #{shuffle_v2_downsampling.1} parent=137 // pred_check
          %p639 = pneg %p55
        $region140: #{shuffle_v2_downsampling.1} parent=137 // pred_check_branch
          %641 = sbr.rel (%p639) target = $region142
        $region141: #{shuffle_v2_downsampling.1} parent=137 // pred_region
          _
        $region142: #{shuffle_v2_downsampling.1} parent=137 // pred_fallthru
          _
        %s642 = sand.u32 %s74, 1
        %s643 = sand.u32 %s74, 1
        %s644 = smul.addr %s643, 64
        %s645 = scalar_lea.vmem [#allocation5], %s644
        // Predicated region
        $region143: #{shuffle_v2_downsampling.1} parent=137 // pred_check
          %p646 = pneg %p87
        $region144: #{shuffle_v2_downsampling.1} parent=137 // pred_check_branch
          %648 = sbr.rel (%p646) target = $region146
        $region145: #{shuffle_v2_downsampling.1} parent=137 // pred_region
          _
        $region146: #{shuffle_v2_downsampling.1} parent=137 // pred_fallthru
          _
        %s649 = sand.u32 %s42, 1
        %s650 = sand.u32 %s42, 1
        %s651 = smul.addr %s650, 512
        %s652 = scalar_lea.vmem [#allocation4], %s651
        %p653 = pneg %p55
        %p654 = pneg %p52
        %s655 = sand.u32 %s74, 1
        %s656 = sand.u32 %s74, 1
        %s657 = smul.addr %s656, 64
        %s658 = scalar_lea.vmem [#allocation5], %s657
        %p659 = pneg %p87
        %p660 = pneg %p84
        %p661 = pneg %p108
        %p662 = pneg %p105
        %p663 = pneg %p129
        %p664 = pneg %p126
        %p665 = pneg %p150
        %p666 = pneg %p147
        %p667 = pneg %p171
        %p668 = pneg %p168
        %p669 = pneg %p192
        %p670 = pneg %p189
        %p671 = pneg %p213
        %p672 = pneg %p210
        %p673 = pneg %p234
        %p674 = pneg %p231
        %p675 = pneg %p262
        %p676 = pneg %p259
        %p677 = scmp.lt.s32.totalorder %s24, 1
        %s678 = scalar_select %p677, %s24, 1
        %p679 = scmp.lt.s32.totalorder %s25, 0
        %s680 = scalar_select %p679, %s25, 0
        %s681 = smul.addr %s678, 2
        %s682 = sadd.s32 %s680, %s681
        %s683 = smul.addr %s682, 8
        %s684 = scalar_lea.vmem %s9, %s683
        %s685 = smul.u32 8, %s25
        %s686 = ssub.s32 9, %s685
        %p687 = scmp.lt.s32.totalorder %s686, 8
        %s688 = scalar_select %p687, %s686, 8
        %s689 = smul.u32 16, %s688
        %s690 = smul.u32 %s689, 2
        %s691 = smul.u32 %s690, 2
        %s692 = smul.u32 %s25, 8
        %s693 = sadd.s32 %s692, 8
        %p694 = scmp.lt.s32.totalorder %s24, 1
        %s695 = scalar_select %p694, %s24, 1
        %p696 = scmp.lt.s32.totalorder %s25, 0
        %s697 = scalar_select %p696, %s25, 0
        %s698 = smul.addr %s695, 2
        %s699 = sadd.s32 %s697, %s698
        %s700 = smul.addr %s699, 8
        %s701 = scalar_lea.vmem %s9, %s700
        %v702 = vld [vmem:[%s638] sm:$0xff]
        %v703 = vld [vmem:[%s638 + $0x8] sm:$0xff]
        %v704 = vld [vmem:[%s638 + $0x10] sm:$0xff]
        %v705 = vld [vmem:[%s638 + $0x18] sm:$0xff]
        %v706 = vld [vmem:[%s638 + $0x20] sm:$0xff]
        %v707 = vld [vmem:[%s638 + $0x28] sm:$0xff]
        %v708 = vld [vmem:[%s638 + $0x30] sm:$0xff]
        %v709 = vld [vmem:[%s638 + $0x38] sm:$0xff]
        %v710 = vld [vmem:[%s638 + $0x40] sm:$0xff]
        %v711 = vld [vmem:[%s638 + $0x48] sm:$0xff]
        %v712 = vld [vmem:[%s638 + $0x50] sm:$0xff]
        %v713 = vld [vmem:[%s638 + $0x58] sm:$0xff]
        %v714 = vld [vmem:[%s638 + $0x60] sm:$0xff]
        %v715 = vld [vmem:[%s638 + $0x68] sm:$0xff]
        %v716 = vld [vmem:[%s638 + $0x70] sm:$0xff]
        %v717 = vld [vmem:[%s638 + $0x78] sm:$0xff]
        %v718 = vld [vmem:[%s638 + $0x80] sm:$0xff]
        %v719 = vld [vmem:[%s638 + $0x88] sm:$0xff]
        %v720 = vld [vmem:[%s638 + $0x90] sm:$0xff]
        %v721 = vld [vmem:[%s638 + $0x98] sm:$0xff]
        %v722 = vld [vmem:[%s638 + $0xa0] sm:$0xff]
        %v723 = vld [vmem:[%s638 + $0xa8] sm:$0xff]
        %v724 = vld [vmem:[%s638 + $0xb0] sm:$0xff]
        %v725 = vld [vmem:[%s638 + $0xb8] sm:$0xff]
        %v726 = vld [vmem:[%s638 + $0xc0] sm:$0xff]
        %v727 = vld [vmem:[%s638 + $0xc8] sm:$0xff]
        %v728 = vld [vmem:[%s638 + $0xd0] sm:$0xff]
        %v729 = vld [vmem:[%s638 + $0xd8] sm:$0xff]
        %v730 = vld [vmem:[%s638 + $0xe0] sm:$0xff]
        %v731 = vld [vmem:[%s638 + $0xe8] sm:$0xff]
        %v732 = vld [vmem:[%s638 + $0xf0] sm:$0xff]
        %v733 = vld [vmem:[%s638 + $0xf8] sm:$0xff]
        %v734 = vld [vmem:[%s638 + $0x100] sm:$0xff]
        %v735 = vld [vmem:[%s638 + $0x108] sm:$0xff]
        %v736 = vld [vmem:[%s638 + $0x110] sm:$0xff]
        %v737 = vld [vmem:[%s638 + $0x118] sm:$0xff]
        %v738 = vld [vmem:[%s638 + $0x120] sm:$0xff]
        %v739 = vld [vmem:[%s638 + $0x128] sm:$0xff]
        %v740 = vld [vmem:[%s638 + $0x130] sm:$0xff]
        %v741 = vld [vmem:[%s638 + $0x138] sm:$0xff]
        %v742 = vld [vmem:[%s638 + $0x140] sm:$0xff]
        %v743 = vld [vmem:[%s638 + $0x148] sm:$0xff]
        %v744 = vld [vmem:[%s638 + $0x150] sm:$0xff]
        %v745 = vld [vmem:[%s638 + $0x158] sm:$0xff]
        %v746 = vld [vmem:[%s638 + $0x160] sm:$0xff]
        %v747 = vld [vmem:[%s638 + $0x168] sm:$0xff]
        %v748 = vld [vmem:[%s638 + $0x170] sm:$0xff]
        %v749 = vld [vmem:[%s638 + $0x178] sm:$0xff]
        %v750 = vld [vmem:[%s638 + $0x180] sm:$0xff]
        %v751 = vld [vmem:[%s638 + $0x188] sm:$0xff]
        %v752 = vld [vmem:[%s638 + $0x190] sm:$0xff]
        %v753 = vld [vmem:[%s638 + $0x198] sm:$0xff]
        %v754 = vld [vmem:[%s638 + $0x1a0] sm:$0xff]
        %v755 = vld [vmem:[%s638 + $0x1a8] sm:$0xff]
        %v756 = vld [vmem:[%s638 + $0x1b0] sm:$0xff]
        %v757 = vld [vmem:[%s638 + $0x1b8] sm:$0xff]
        %v758 = vld [vmem:[%s638 + $0x1c0] sm:$0xff]
        %v759 = vld [vmem:[%s638 + $0x1c8] sm:$0xff]
        %v760 = vld [vmem:[%s638 + $0x1d0] sm:$0xff]
        %v761 = vld [vmem:[%s638 + $0x1d8] sm:$0xff]
        %v762 = vld [vmem:[%s638 + $0x1e0] sm:$0xff]
        %v763 = vld [vmem:[%s638 + $0x1e8] sm:$0xff]
        %v764 = vld [vmem:[%s638 + $0x1f0] sm:$0xff]
        %v765 = vld [vmem:[%s638 + $0x1f8] sm:$0xff]
        %vm766 = vcmask 64512
        %767 = vst.msk [vmem:[#allocation2] sm:$0xff] %vm766, %v702
        %768 = vst.msk [vmem:[#allocation2 + $0x8] sm:$0xff] %vm766, %v703
        %769 = vst.msk [vmem:[#allocation2 + $0x10] sm:$0xff] %vm766, %v704
        %770 = vst.msk [vmem:[#allocation2 + $0x18] sm:$0xff] %vm766, %v705
        %771 = vst.msk [vmem:[#allocation2 + $0x20] sm:$0xff] %vm766, %v706
        %772 = vst.msk [vmem:[#allocation2 + $0x28] sm:$0xff] %vm766, %v707
        %773 = vst.msk [vmem:[#allocation2 + $0x30] sm:$0xff] %vm766, %v708
        %774 = vst.msk [vmem:[#allocation2 + $0x38] sm:$0xff] %vm766, %v709
        %775 = vst.msk [vmem:[#allocation2 + $0x40] sm:$0xff] %vm766, %v710
        %776 = vst.msk [vmem:[#allocation2 + $0x48] sm:$0xff] %vm766, %v711
        %777 = vst.msk [vmem:[#allocation2 + $0x50] sm:$0xff] %vm766, %v712
        %778 = vst.msk [vmem:[#allocation2 + $0x58] sm:$0xff] %vm766, %v713
        %779 = vst.msk [vmem:[#allocation2 + $0x60] sm:$0xff] %vm766, %v714
        %780 = vst.msk [vmem:[#allocation2 + $0x68] sm:$0xff] %vm766, %v715
        %781 = vst.msk [vmem:[#allocation2 + $0x70] sm:$0xff] %vm766, %v716
        %782 = vst.msk [vmem:[#allocation2 + $0x78] sm:$0xff] %vm766, %v717
        %783 = vst.msk [vmem:[#allocation2 + $0x80] sm:$0xff] %vm766, %v718
        %784 = vst.msk [vmem:[#allocation2 + $0x88] sm:$0xff] %vm766, %v719
        %785 = vst.msk [vmem:[#allocation2 + $0x90] sm:$0xff] %vm766, %v720
        %786 = vst.msk [vmem:[#allocation2 + $0x98] sm:$0xff] %vm766, %v721
        %787 = vst.msk [vmem:[#allocation2 + $0xa0] sm:$0xff] %vm766, %v722
        %788 = vst.msk [vmem:[#allocation2 + $0xa8] sm:$0xff] %vm766, %v723
        %789 = vst.msk [vmem:[#allocation2 + $0xb0] sm:$0xff] %vm766, %v724
        %790 = vst.msk [vmem:[#allocation2 + $0xb8] sm:$0xff] %vm766, %v725
        %791 = vst.msk [vmem:[#allocation2 + $0xc0] sm:$0xff] %vm766, %v726
        %792 = vst.msk [vmem:[#allocation2 + $0xc8] sm:$0xff] %vm766, %v727
        %793 = vst.msk [vmem:[#allocation2 + $0xd0] sm:$0xff] %vm766, %v728
        %794 = vst.msk [vmem:[#allocation2 + $0xd8] sm:$0xff] %vm766, %v729
        %795 = vst.msk [vmem:[#allocation2 + $0xe0] sm:$0xff] %vm766, %v730
        %796 = vst.msk [vmem:[#allocation2 + $0xe8] sm:$0xff] %vm766, %v731
        %797 = vst.msk [vmem:[#allocation2 + $0xf0] sm:$0xff] %vm766, %v732
        %798 = vst.msk [vmem:[#allocation2 + $0xf8] sm:$0xff] %vm766, %v733
        %799 = vst.msk [vmem:[#allocation2 + $0x120] sm:$0xff] %vm766, %v734
        %800 = vst.msk [vmem:[#allocation2 + $0x128] sm:$0xff] %vm766, %v735
        %801 = vst.msk [vmem:[#allocation2 + $0x130] sm:$0xff] %vm766, %v736
        %802 = vst.msk [vmem:[#allocation2 + $0x138] sm:$0xff] %vm766, %v737
        %803 = vst.msk [vmem:[#allocation2 + $0x140] sm:$0xff] %vm766, %v738
        %804 = vst.msk [vmem:[#allocation2 + $0x148] sm:$0xff] %vm766, %v739
        %805 = vst.msk [vmem:[#allocation2 + $0x150] sm:$0xff] %vm766, %v740
        %806 = vst.msk [vmem:[#allocation2 + $0x158] sm:$0xff] %vm766, %v741
        %807 = vst.msk [vmem:[#allocation2 + $0x160] sm:$0xff] %vm766, %v742
        %808 = vst.msk [vmem:[#allocation2 + $0x168] sm:$0xff] %vm766, %v743
        %809 = vst.msk [vmem:[#allocation2 + $0x170] sm:$0xff] %vm766, %v744
        %810 = vst.msk [vmem:[#allocation2 + $0x178] sm:$0xff] %vm766, %v745
        %811 = vst.msk [vmem:[#allocation2 + $0x180] sm:$0xff] %vm766, %v746
        %812 = vst.msk [vmem:[#allocation2 + $0x188] sm:$0xff] %vm766, %v747
        %813 = vst.msk [vmem:[#allocation2 + $0x190] sm:$0xff] %vm766, %v748
        %814 = vst.msk [vmem:[#allocation2 + $0x198] sm:$0xff] %vm766, %v749
        %815 = vst.msk [vmem:[#allocation2 + $0x1a0] sm:$0xff] %vm766, %v750
        %816 = vst.msk [vmem:[#allocation2 + $0x1a8] sm:$0xff] %vm766, %v751
        %817 = vst.msk [vmem:[#allocation2 + $0x1b0] sm:$0xff] %vm766, %v752
        %818 = vst.msk [vmem:[#allocation2 + $0x1b8] sm:$0xff] %vm766, %v753
        %819 = vst.msk [vmem:[#allocation2 + $0x1c0] sm:$0xff] %vm766, %v754
        %820 = vst.msk [vmem:[#allocation2 + $0x1c8] sm:$0xff] %vm766, %v755
        %821 = vst.msk [vmem:[#allocation2 + $0x1d0] sm:$0xff] %vm766, %v756
        %822 = vst.msk [vmem:[#allocation2 + $0x1d8] sm:$0xff] %vm766, %v757
        %823 = vst.msk [vmem:[#allocation2 + $0x1e0] sm:$0xff] %vm766, %v758
        %824 = vst.msk [vmem:[#allocation2 + $0x1e8] sm:$0xff] %vm766, %v759
        %825 = vst.msk [vmem:[#allocation2 + $0x1f0] sm:$0xff] %vm766, %v760
        %826 = vst.msk [vmem:[#allocation2 + $0x1f8] sm:$0xff] %vm766, %v761
        %827 = vst.msk [vmem:[#allocation2 + $0x200] sm:$0xff] %vm766, %v762
        %828 = vst.msk [vmem:[#allocation2 + $0x208] sm:$0xff] %vm766, %v763
        %829 = vst.msk [vmem:[#allocation2 + $0x210] sm:$0xff] %vm766, %v764
        %830 = vst.msk [vmem:[#allocation2 + $0x218] sm:$0xff] %vm766, %v765
        %v831 = vld [vmem:[%s645] sm:$0xff]
        %v832 = vld [vmem:[%s645 + $0x8] sm:$0xff]
        %v833 = vld [vmem:[%s645 + $0x10] sm:$0xff]
        %v834 = vld [vmem:[%s645 + $0x18] sm:$0xff]
        %v835 = vld [vmem:[%s645 + $0x20] sm:$0xff]
        %v836 = vld [vmem:[%s645 + $0x28] sm:$0xff]
        %v837 = vld [vmem:[%s645 + $0x30] sm:$0xff]
        %v838 = vld [vmem:[%s645 + $0x38] sm:$0xff]
        %s839 = scalar_lea.vmem [#allocation2], 256
        %840 = vst.msk [vmem:[%s839] sm:$0xff] %vm766, %v831
        %841 = vst.msk [vmem:[%s839 + $0x8] sm:$0xff] %vm766, %v832
        %842 = vst.msk [vmem:[%s839 + $0x10] sm:$0xff] %vm766, %v833
        %843 = vst.msk [vmem:[%s839 + $0x18] sm:$0xff] %vm766, %v834
        %844 = vst.msk [vmem:[%s839 + $0x120] sm:$0xff] %vm766, %v835
        %845 = vst.msk [vmem:[%s839 + $0x128] sm:$0xff] %vm766, %v836
        %846 = vst.msk [vmem:[%s839 + $0x130] sm:$0xff] %vm766, %v837
        %847 = vst.msk [vmem:[%s839 + $0x138] sm:$0xff] %vm766, %v838
        %v848 = vld [vmem:[%s2] sm:$0xff]
        %v849 = vld [vmem:[%s2 + $0x8] sm:$0x1]
        %v850 = vld [vmem:[#allocation2] sm:$0xff]
        %v851 = vld [vmem:[#allocation2 + $0x20] sm:$0xff]
        %v852 = vld [vmem:[#allocation2 + $0x40] sm:$0xff]
        %v853 = vld [vmem:[#allocation2 + $0x60] sm:$0xff]
        %v854 = vld [vmem:[#allocation2 + $0x80] sm:$0xff]
        %v855 = vld [vmem:[#allocation2 + $0xa0] sm:$0xff]
        %v856 = vld [vmem:[#allocation2 + $0xc0] sm:$0xff]
        %v857 = vld [vmem:[#allocation2 + $0xe0] sm:$0xff]
        %v858 = vperm.slane %v848, 0
        %v859 = vmul.f32 %v850, %v858
        %v860 = vmul.f32 %v851, %v858
        %v861 = vmul.f32 %v852, %v858
        %v862 = vmul.f32 %v853, %v858
        %v863 = vmul.f32 %v854, %v858
        %v864 = vmul.f32 %v855, %v858
        %v865 = vmul.f32 %v856, %v858
        %v866 = vmul.f32 %v857, %v858
        %v867 = vadd.f32 %v859, 0.0
        %v868 = vadd.f32 %v860, 0.0
        %v869 = vadd.f32 %v861, 0.0
        %v870 = vadd.f32 %v862, 0.0
        %v871 = vadd.f32 %v863, 0.0
        %v872 = vadd.f32 %v864, 0.0
        %v873 = vadd.f32 %v865, 0.0
        %v874 = vadd.f32 %v866, 0.0
        %s875 = scalar_lea.vmem [#allocation2], 16
        %v876 = vld [vmem:[%s875] sm:$0xff]
        %v877 = vld [vmem:[%s875 + $0x20] sm:$0xff]
        %v878 = vld [vmem:[%s875 + $0x40] sm:$0xff]
        %v879 = vld [vmem:[%s875 + $0x60] sm:$0xff]
        %v880 = vld [vmem:[%s875 + $0x80] sm:$0xff]
        %v881 = vld [vmem:[%s875 + $0xa0] sm:$0xff]
        %v882 = vld [vmem:[%s875 + $0xc0] sm:$0xff]
        %v883 = vld [vmem:[%s875 + $0xe0] sm:$0xff]
        %v884 = vperm.slane %v848, 1
        %v885 = vmul.f32 %v876, %v884
        %v886 = vmul.f32 %v877, %v884
        %v887 = vmul.f32 %v878, %v884
        %v888 = vmul.f32 %v879, %v884
        %v889 = vmul.f32 %v880, %v884
        %v890 = vmul.f32 %v881, %v884
        %v891 = vmul.f32 %v882, %v884
        %v892 = vmul.f32 %v883, %v884
        %v893 = vadd.f32 %v867, %v885
        %v894 = vadd.f32 %v868, %v886
        %v895 = vadd.f32 %v869, %v887
        %v896 = vadd.f32 %v870, %v888
        %v897 = vadd.f32 %v871, %v889
        %v898 = vadd.f32 %v872, %v890
        %v899 = vadd.f32 %v873, %v891
        %v900 = vadd.f32 %v874, %v892
        %v901 = vld [vmem:[#allocation2 + $0x1] sm:$0xff]
        %v902 = vld [vmem:[#allocation2 + $0x21] sm:$0xff]
        %v903 = vld [vmem:[#allocation2 + $0x41] sm:$0xff]
        %v904 = vld [vmem:[#allocation2 + $0x61] sm:$0xff]
        %v905 = vld [vmem:[#allocation2 + $0x81] sm:$0xff]
        %v906 = vld [vmem:[#allocation2 + $0xa1] sm:$0xff]
        %v907 = vld [vmem:[#allocation2 + $0xc1] sm:$0xff]
        %v908 = vld [vmem:[#allocation2 + $0xe1] sm:$0xff]
        %v909 = vperm.slane %v848, 2
        %v910 = vmul.f32 %v901, %v909
        %v911 = vmul.f32 %v902, %v909
        %v912 = vmul.f32 %v903, %v909
        %v913 = vmul.f32 %v904, %v909
        %v914 = vmul.f32 %v905, %v909
        %v915 = vmul.f32 %v906, %v909
        %v916 = vmul.f32 %v907, %v909
        %v917 = vmul.f32 %v908, %v909
        %v918 = vadd.f32 %v893, %v910
        %v919 = vadd.f32 %v894, %v911
        %v920 = vadd.f32 %v895, %v912
        %v921 = vadd.f32 %v896, %v913
        %v922 = vadd.f32 %v897, %v914
        %v923 = vadd.f32 %v898, %v915
        %v924 = vadd.f32 %v899, %v916
        %v925 = vadd.f32 %v900, %v917
        %s926 = scalar_lea.vmem [#allocation2], 288
        %v927 = vld [vmem:[%s926] sm:$0xff]
        %v928 = vld [vmem:[%s926 + $0x20] sm:$0xff]
        %v929 = vld [vmem:[%s926 + $0x40] sm:$0xff]
        %v930 = vld [vmem:[%s926 + $0x60] sm:$0xff]
        %v931 = vld [vmem:[%s926 + $0x80] sm:$0xff]
        %v932 = vld [vmem:[%s926 + $0xa0] sm:$0xff]
        %v933 = vld [vmem:[%s926 + $0xc0] sm:$0xff]
        %v934 = vld [vmem:[%s926 + $0xe0] sm:$0xff]
        %v935 = vperm.slane %v848, 3
        %v936 = vmul.f32 %v927, %v935
        %v937 = vmul.f32 %v928, %v935
        %v938 = vmul.f32 %v929, %v935
        %v939 = vmul.f32 %v930, %v935
        %v940 = vmul.f32 %v931, %v935
        %v941 = vmul.f32 %v932, %v935
        %v942 = vmul.f32 %v933, %v935
        %v943 = vmul.f32 %v934, %v935
        %v944 = vadd.f32 %v918, %v936
        %v945 = vadd.f32 %v919, %v937
        %v946 = vadd.f32 %v920, %v938
        %v947 = vadd.f32 %v921, %v939
        %v948 = vadd.f32 %v922, %v940
        %v949 = vadd.f32 %v923, %v941
        %v950 = vadd.f32 %v924, %v942
        %v951 = vadd.f32 %v925, %v943
        %s952 = scalar_lea.vmem [#allocation2], 304
        %v953 = vld [vmem:[%s952] sm:$0xff]
        %v954 = vld [vmem:[%s952 + $0x20] sm:$0xff]
        %v955 = vld [vmem:[%s952 + $0x40] sm:$0xff]
        %v956 = vld [vmem:[%s952 + $0x60] sm:$0xff]
        %v957 = vld [vmem:[%s952 + $0x80] sm:$0xff]
        %v958 = vld [vmem:[%s952 + $0xa0] sm:$0xff]
        %v959 = vld [vmem:[%s952 + $0xc0] sm:$0xff]
        %v960 = vld [vmem:[%s952 + $0xe0] sm:$0xff]
        %v961 = vperm.slane %v848, 4
        %v962 = vmul.f32 %v953, %v961
        %v963 = vmul.f32 %v954, %v961
        %v964 = vmul.f32 %v955, %v961
        %v965 = vmul.f32 %v956, %v961
        %v966 = vmul.f32 %v957, %v961
        %v967 = vmul.f32 %v958, %v961
        %v968 = vmul.f32 %v959, %v961
        %v969 = vmul.f32 %v960, %v961
        %v970 = vadd.f32 %v944, %v962
        %v971 = vadd.f32 %v945, %v963
        %v972 = vadd.f32 %v946, %v964
        %v973 = vadd.f32 %v947, %v965
        %v974 = vadd.f32 %v948, %v966
        %v975 = vadd.f32 %v949, %v967
        %v976 = vadd.f32 %v950, %v968
        %v977 = vadd.f32 %v951, %v969
        %v978 = vld [vmem:[%s926 + $0x1] sm:$0xff]
        %v979 = vld [vmem:[%s926 + $0x21] sm:$0xff]
        %v980 = vld [vmem:[%s926 + $0x41] sm:$0xff]
        %v981 = vld [vmem:[%s926 + $0x61] sm:$0xff]
        %v982 = vld [vmem:[%s926 + $0x81] sm:$0xff]
        %v983 = vld [vmem:[%s926 + $0xa1] sm:$0xff]
        %v984 = vld [vmem:[%s926 + $0xc1] sm:$0xff]
        %v985 = vld [vmem:[%s926 + $0xe1] sm:$0xff]
        %v986 = vperm.slane %v848, 5
        %v987 = vmul.f32 %v978, %v986
        %v988 = vmul.f32 %v979, %v986
        %v989 = vmul.f32 %v980, %v986
        %v990 = vmul.f32 %v981, %v986
        %v991 = vmul.f32 %v982, %v986
        %v992 = vmul.f32 %v983, %v986
        %v993 = vmul.f32 %v984, %v986
        %v994 = vmul.f32 %v985, %v986
        %v995 = vadd.f32 %v970, %v987
        %v996 = vadd.f32 %v971, %v988
        %v997 = vadd.f32 %v972, %v989
        %v998 = vadd.f32 %v973, %v990
        %v999 = vadd.f32 %v974, %v991
        %v1000 = vadd.f32 %v975, %v992
        %v1001 = vadd.f32 %v976, %v993
        %v1002 = vadd.f32 %v977, %v994
        %s1003 = scalar_lea.vmem [#allocation2], 32
        %v1004 = vld [vmem:[%s1003] sm:$0xff]
        %v1005 = vld [vmem:[%s1003 + $0x20] sm:$0xff]
        %v1006 = vld [vmem:[%s1003 + $0x40] sm:$0xff]
        %v1007 = vld [vmem:[%s1003 + $0x60] sm:$0xff]
        %v1008 = vld [vmem:[%s1003 + $0x80] sm:$0xff]
        %v1009 = vld [vmem:[%s1003 + $0xa0] sm:$0xff]
        %v1010 = vld [vmem:[%s1003 + $0xc0] sm:$0xff]
        %v1011 = vld [vmem:[%s1003 + $0xe0] sm:$0xff]
        %v1012 = vperm.slane %v848, 6
        %v1013 = vmul.f32 %v1004, %v1012
        %v1014 = vmul.f32 %v1005, %v1012
        %v1015 = vmul.f32 %v1006, %v1012
        %v1016 = vmul.f32 %v1007, %v1012
        %v1017 = vmul.f32 %v1008, %v1012
        %v1018 = vmul.f32 %v1009, %v1012
        %v1019 = vmul.f32 %v1010, %v1012
        %v1020 = vmul.f32 %v1011, %v1012
        %v1021 = vadd.f32 %v995, %v1013
        %v1022 = vadd.f32 %v996, %v1014
        %v1023 = vadd.f32 %v997, %v1015
        %v1024 = vadd.f32 %v998, %v1016
        %v1025 = vadd.f32 %v999, %v1017
        %v1026 = vadd.f32 %v1000, %v1018
        %v1027 = vadd.f32 %v1001, %v1019
        %v1028 = vadd.f32 %v1002, %v1020
        %s1029 = scalar_lea.vmem [#allocation2], 48
        %v1030 = vld [vmem:[%s1029] sm:$0xff]
        %v1031 = vld [vmem:[%s1029 + $0x20] sm:$0xff]
        %v1032 = vld [vmem:[%s1029 + $0x40] sm:$0xff]
        %v1033 = vld [vmem:[%s1029 + $0x60] sm:$0xff]
        %v1034 = vld [vmem:[%s1029 + $0x80] sm:$0xff]
        %v1035 = vld [vmem:[%s1029 + $0xa0] sm:$0xff]
        %v1036 = vld [vmem:[%s1029 + $0xc0] sm:$0xff]
        %v1037 = vld [vmem:[%s1029 + $0xe0] sm:$0xff]
        %v1038 = vperm.slane %v848, 7
        %v1039 = vmul.f32 %v1030, %v1038
        %v1040 = vmul.f32 %v1031, %v1038
        %v1041 = vmul.f32 %v1032, %v1038
        %v1042 = vmul.f32 %v1033, %v1038
        %v1043 = vmul.f32 %v1034, %v1038
        %v1044 = vmul.f32 %v1035, %v1038
        %v1045 = vmul.f32 %v1036, %v1038
        %v1046 = vmul.f32 %v1037, %v1038
        %v1047 = vadd.f32 %v1021, %v1039
        %v1048 = vadd.f32 %v1022, %v1040
        %v1049 = vadd.f32 %v1023, %v1041
        %v1050 = vadd.f32 %v1024, %v1042
        %v1051 = vadd.f32 %v1025, %v1043
        %v1052 = vadd.f32 %v1026, %v1044
        %v1053 = vadd.f32 %v1027, %v1045
        %v1054 = vadd.f32 %v1028, %v1046
        %v1055 = vld [vmem:[%s1003 + $0x1] sm:$0xff]
        %v1056 = vld [vmem:[%s1003 + $0x21] sm:$0xff]
        %v1057 = vld [vmem:[%s1003 + $0x41] sm:$0xff]
        %v1058 = vld [vmem:[%s1003 + $0x61] sm:$0xff]
        %v1059 = vld [vmem:[%s1003 + $0x81] sm:$0xff]
        %v1060 = vld [vmem:[%s1003 + $0xa1] sm:$0xff]
        %v1061 = vld [vmem:[%s1003 + $0xc1] sm:$0xff]
        %v1062 = vld [vmem:[%s1003 + $0xe1] sm:$0xff]
        %v1063 = vperm.slane %v849, 0
        %v1064 = vmul.f32 %v1055, %v1063
        %v1065 = vmul.f32 %v1056, %v1063
        %v1066 = vmul.f32 %v1057, %v1063
        %v1067 = vmul.f32 %v1058, %v1063
        %v1068 = vmul.f32 %v1059, %v1063
        %v1069 = vmul.f32 %v1060, %v1063
        %v1070 = vmul.f32 %v1061, %v1063
        %v1071 = vmul.f32 %v1062, %v1063
        %v1072 = vadd.f32 %v1047, %v1064
        %v1073 = vadd.f32 %v1048, %v1065
        %v1074 = vadd.f32 %v1049, %v1066
        %v1075 = vadd.f32 %v1050, %v1067
        %v1076 = vadd.f32 %v1051, %v1068
        %v1077 = vadd.f32 %v1052, %v1069
        %v1078 = vadd.f32 %v1053, %v1070
        %v1079 = vadd.f32 %v1054, %v1071
        %v1080 = vld [vmem:[#allocation2 + $0x8] sm:$0xff]
        %v1081 = vld [vmem:[#allocation2 + $0x10] sm:$0xff]
        %v1082 = vld [vmem:[#allocation2 + $0x18] sm:$0xff]
        %v1083 = vld [vmem:[#allocation2 + $0x28] sm:$0xff]
        %v1084 = vld [vmem:[#allocation2 + $0x30] sm:$0xff]
        %v1085 = vld [vmem:[#allocation2 + $0x38] sm:$0xff]
        %v1086 = vld [vmem:[#allocation2 + $0x48] sm:$0xff]
        %v1087 = vld [vmem:[#allocation2 + $0x50] sm:$0xff]
        %v1088 = vld [vmem:[#allocation2 + $0x58] sm:$0xff]
        %v1089 = vld [vmem:[#allocation2 + $0x68] sm:$0xff]
        %v1090 = vld [vmem:[#allocation2 + $0x70] sm:$0xff]
        %v1091 = vld [vmem:[#allocation2 + $0x78] sm:$0xff]
        %v1092 = vld [vmem:[#allocation2 + $0x88] sm:$0xff]
        %v1093 = vld [vmem:[#allocation2 + $0x90] sm:$0xff]
        %v1094 = vld [vmem:[#allocation2 + $0x98] sm:$0xff]
        %v1095 = vld [vmem:[#allocation2 + $0xa8] sm:$0xff]
        %v1096 = vld [vmem:[#allocation2 + $0xb0] sm:$0xff]
        %v1097 = vld [vmem:[#allocation2 + $0xb8] sm:$0xff]
        %v1098 = vld [vmem:[#allocation2 + $0xc8] sm:$0xff]
        %v1099 = vld [vmem:[#allocation2 + $0xd0] sm:$0xff]
        %v1100 = vld [vmem:[#allocation2 + $0xd8] sm:$0xff]
        %v1101 = vld [vmem:[#allocation2 + $0xe8] sm:$0xff]
        %v1102 = vld [vmem:[#allocation2 + $0xf0] sm:$0xff]
        %v1103 = vld [vmem:[#allocation2 + $0xf8] sm:$0xff]
        %v1104 = vld [vmem:[#allocation2 + $0x100] sm:$0xff]
        %v1105 = vld [vmem:[#allocation2 + $0x108] sm:$0xff]
        %v1106 = vld [vmem:[#allocation2 + $0x110] sm:$0xff]
        %v1107 = vld [vmem:[#allocation2 + $0x118] sm:$0xff]
        %v1108 = vld [vmem:[#allocation2 + $0x120] sm:$0xff]
        %v1109 = vld [vmem:[#allocation2 + $0x128] sm:$0xff]
        %v1110 = vld [vmem:[#allocation2 + $0x130] sm:$0xff]
        %v1111 = vld [vmem:[#allocation2 + $0x138] sm:$0xff]
        %v1112 = vld [vmem:[#allocation2 + $0x140] sm:$0xff]
        %v1113 = vld [vmem:[#allocation2 + $0x148] sm:$0xff]
        %v1114 = vld [vmem:[#allocation2 + $0x150] sm:$0xff]
        %v1115 = vld [vmem:[#allocation2 + $0x158] sm:$0xff]
        %v1116 = vld [vmem:[#allocation2 + $0x160] sm:$0xff]
        %v1117 = vld [vmem:[#allocation2 + $0x168] sm:$0xff]
        %v1118 = vld [vmem:[#allocation2 + $0x170] sm:$0xff]
        %v1119 = vld [vmem:[#allocation2 + $0x178] sm:$0xff]
        %v1120 = vld [vmem:[#allocation2 + $0x180] sm:$0xff]
        %v1121 = vld [vmem:[#allocation2 + $0x188] sm:$0xff]
        %v1122 = vld [vmem:[#allocation2 + $0x190] sm:$0xff]
        %v1123 = vld [vmem:[#allocation2 + $0x198] sm:$0xff]
        %v1124 = vld [vmem:[#allocation2 + $0x1a0] sm:$0xff]
        %v1125 = vld [vmem:[#allocation2 + $0x1a8] sm:$0xff]
        %v1126 = vld [vmem:[#allocation2 + $0x1b0] sm:$0xff]
        %v1127 = vld [vmem:[#allocation2 + $0x1b8] sm:$0xff]
        %v1128 = vld [vmem:[#allocation2 + $0x1c0] sm:$0xff]
        %v1129 = vld [vmem:[#allocation2 + $0x1c8] sm:$0xff]
        %v1130 = vld [vmem:[#allocation2 + $0x1d0] sm:$0xff]
        %v1131 = vld [vmem:[#allocation2 + $0x1d8] sm:$0xff]
        %v1132 = vld [vmem:[#allocation2 + $0x1e0] sm:$0xff]
        %v1133 = vld [vmem:[#allocation2 + $0x1e8] sm:$0xff]
        %v1134 = vld [vmem:[#allocation2 + $0x1f0] sm:$0xff]
        %v1135 = vld [vmem:[#allocation2 + $0x1f8] sm:$0xff]
        %v1136 = vld [vmem:[#allocation2 + $0x200] sm:$0xff]
        %v1137 = vld [vmem:[#allocation2 + $0x208] sm:$0xff]
        %v1138 = vld [vmem:[#allocation2 + $0x210] sm:$0xff]
        %v1139 = vld [vmem:[#allocation2 + $0x218] sm:$0xff]
        %v1140 = vld [vmem:[#allocation2 + $0x220] sm:$0xff]
        %v1141 = vld [vmem:[#allocation2 + $0x228] sm:$0xff]
        %v1142 = vld [vmem:[#allocation2 + $0x230] sm:$0xff]
        %v1143 = vld [vmem:[#allocation2 + $0x238] sm:$0xff]
        %v1144 = vld [vmem:[%s3] sm:$0xff]
        %v1145 = vld [vmem:[%s4] sm:$0x1]
        %v1147 = vperm.slane %v1145, 0
        %v1150 = vsel %vm766, %v850, 0
        %v1153 = vsel %vm766, %v1080, 0
        %v1156 = vsel %vm766, %v1081, 0
        %v1159 = vsel %vm766, %v1082, 0
        %v1162 = vsel %vm766, %v851, 0
        %v1165 = vsel %vm766, %v1083, 0
        %v1168 = vsel %vm766, %v1084, 0
        %v1171 = vsel %vm766, %v1085, 0
        %v1174 = vsel %vm766, %v852, 0
        %v1177 = vsel %vm766, %v1086, 0
        %v1180 = vsel %vm766, %v1087, 0
        %v1183 = vsel %vm766, %v1088, 0
        %v1186 = vsel %vm766, %v853, 0
        %v1189 = vsel %vm766, %v1089, 0
        %v1192 = vsel %vm766, %v1090, 0
        %v1195 = vsel %vm766, %v1091, 0
        %v1198 = vsel %vm766, %v854, 0
        %v1201 = vsel %vm766, %v1092, 0
        %v1204 = vsel %vm766, %v1093, 0
        %v1207 = vsel %vm766, %v1094, 0
        %v1210 = vsel %vm766, %v855, 0
        %v1213 = vsel %vm766, %v1095, 0
        %v1216 = vsel %vm766, %v1096, 0
        %v1219 = vsel %vm766, %v1097, 0
        %v1222 = vsel %vm766, %v856, 0
        %v1225 = vsel %vm766, %v1098, 0
        %v1228 = vsel %vm766, %v1099, 0
        %v1231 = vsel %vm766, %v1100, 0
        %v1234 = vsel %vm766, %v857, 0
        %v1237 = vsel %vm766, %v1101, 0
        %v1240 = vsel %vm766, %v1102, 0
        %v1243 = vsel %vm766, %v1103, 0
        %v1246 = vsel %vm766, %v1104, 0
        %v1249 = vsel %vm766, %v1105, 0
        %v1252 = vsel %vm766, %v1106, 0
        %v1255 = vsel %vm766, %v1107, 0
        %v1258 = vsel %vm766, %v1108, 0
        %v1261 = vsel %vm766, %v1109, 0
        %v1264 = vsel %vm766, %v1110, 0
        %v1267 = vsel %vm766, %v1111, 0
        %v1270 = vsel %vm766, %v1112, 0
        %v1273 = vsel %vm766, %v1113, 0
        %v1276 = vsel %vm766, %v1114, 0
        %v1279 = vsel %vm766, %v1115, 0
        %v1282 = vsel %vm766, %v1116, 0
        %v1285 = vsel %vm766, %v1117, 0
        %v1288 = vsel %vm766, %v1118, 0
        %v1291 = vsel %vm766, %v1119, 0
        %v1294 = vsel %vm766, %v1120, 0
        %v1297 = vsel %vm766, %v1121, 0
        %v1300 = vsel %vm766, %v1122, 0
        %v1303 = vsel %vm766, %v1123, 0
        %v1306 = vsel %vm766, %v1124, 0
        %v1309 = vsel %vm766, %v1125, 0
        %v1312 = vsel %vm766, %v1126, 0
        %v1315 = vsel %vm766, %v1127, 0
        %v1318 = vsel %vm766, %v1128, 0
        %v1321 = vsel %vm766, %v1129, 0
        %v1324 = vsel %vm766, %v1130, 0
        %v1327 = vsel %vm766, %v1131, 0
        %v1330 = vsel %vm766, %v1132, 0
        %v1333 = vsel %vm766, %v1133, 0
        %v1336 = vsel %vm766, %v1134, 0
        %v1339 = vsel %vm766, %v1135, 0
        %v1342 = vsel %vm766, %v1136, 0
        %v1345 = vsel %vm766, %v1137, 0
        %v1348 = vsel %vm766, %v1138, 0
        %v1351 = vsel %vm766, %v1139, 0
        %v1354 = vsel %vm766, %v1140, 0
        %v1357 = vsel %vm766, %v1141, 0
        %v1360 = vsel %vm766, %v1142, 0
        %v1363 = vsel %vm766, %v1143, 0
        %1365 = vmatpush.msra.mxu0 0.0
        %1366 = vmatpush.msra.mxu0 0.0
        %1367 = vmatpush.msra.mxu0 0.0
        %1368 = vmatpush.msra.mxu0 0.0
        %1369 = vmatpush.msra.mxu0 0.0
        %1370 = vmatpush.msra.mxu0 0.0
        %1371 = vmatpush.msra.mxu0 0.0
        %1372 = vmatpush.msra.mxu0 0.0
        %1373 = vmatpush.msra.mxu0 0.0
        %1374 = vmatpush.msra.mxu0 0.0
        %1375 = vmatpush.msra.mxu0 0.0
        %1376 = vmatpush.msra.mxu0 0.0
        %1377 = vmatpush.msra.mxu0 0.0
        %1378 = vmatpush.msra.mxu0 0.0
        %1379 = vmatpush.msra.mxu0 0.0
        %1380 = vmatpush.msra.mxu0 %v1144
        %1381 = vmatmul.f32.gmra.mxu0 %v1150
        %v1382 = vpop.f32.mrf.mxu0
        %v1383 = vadd.f32 %v1147, %v1382
        %1384 = vmatmul.f32.gmra.mxu0 %v1153
        %v1385 = vpop.f32.mrf.mxu0
        %v1386 = vadd.f32 %v1147, %v1385
        %1387 = vmatmul.f32.gmra.mxu0 %v1156
        %v1388 = vpop.f32.mrf.mxu0
        %v1389 = vadd.f32 %v1147, %v1388
        %1390 = vmatmul.f32.gmra.mxu0 %v1159
        %v1391 = vpop.f32.mrf.mxu0
        %v1392 = vadd.f32 %v1147, %v1391
        %1393 = vmatmul.f32.gmra.mxu0 %v1162
        %v1394 = vpop.f32.mrf.mxu0
        %v1395 = vadd.f32 %v1147, %v1394
        %1396 = vmatmul.f32.gmra.mxu0 %v1165
        %v1397 = vpop.f32.mrf.mxu0
        %v1398 = vadd.f32 %v1147, %v1397
        %1399 = vmatmul.f32.gmra.mxu0 %v1168
        %v1400 = vpop.f32.mrf.mxu0
        %v1401 = vadd.f32 %v1147, %v1400
        %1402 = vmatmul.f32.gmra.mxu0 %v1171
        %v1403 = vpop.f32.mrf.mxu0
        %v1404 = vadd.f32 %v1147, %v1403
        %1405 = vmatmul.f32.gmra.mxu0 %v1174
        %v1406 = vpop.f32.mrf.mxu0
        %v1407 = vadd.f32 %v1147, %v1406
        %1408 = vmatmul.f32.gmra.mxu0 %v1177
        %v1409 = vpop.f32.mrf.mxu0
        %v1410 = vadd.f32 %v1147, %v1409
        %1411 = vmatmul.f32.gmra.mxu0 %v1180
        %v1412 = vpop.f32.mrf.mxu0
        %v1413 = vadd.f32 %v1147, %v1412
        %1414 = vmatmul.f32.gmra.mxu0 %v1183
        %v1415 = vpop.f32.mrf.mxu0
        %v1416 = vadd.f32 %v1147, %v1415
        %1417 = vmatmul.f32.gmra.mxu0 %v1186
        %v1418 = vpop.f32.mrf.mxu0
        %v1419 = vadd.f32 %v1147, %v1418
        %1420 = vmatmul.f32.gmra.mxu0 %v1189
        %v1421 = vpop.f32.mrf.mxu0
        %v1422 = vadd.f32 %v1147, %v1421
        %1423 = vmatmul.f32.gmra.mxu0 %v1192
        %v1424 = vpop.f32.mrf.mxu0
        %v1425 = vadd.f32 %v1147, %v1424
        %1426 = vmatmul.f32.gmra.mxu0 %v1195
        %v1427 = vpop.f32.mrf.mxu0
        %v1428 = vadd.f32 %v1147, %v1427
        %1429 = vmatmul.f32.gmra.mxu0 %v1198
        %v1430 = vpop.f32.mrf.mxu0
        %v1431 = vadd.f32 %v1147, %v1430
        %1432 = vmatmul.f32.gmra.mxu0 %v1201
        %v1433 = vpop.f32.mrf.mxu0
        %v1434 = vadd.f32 %v1147, %v1433
        %1435 = vmatmul.f32.gmra.mxu0 %v1204
        %v1436 = vpop.f32.mrf.mxu0
        %v1437 = vadd.f32 %v1147, %v1436
        %1438 = vmatmul.f32.gmra.mxu0 %v1207
        %v1439 = vpop.f32.mrf.mxu0
        %v1440 = vadd.f32 %v1147, %v1439
        %1441 = vmatmul.f32.gmra.mxu0 %v1210
        %v1442 = vpop.f32.mrf.mxu0
        %v1443 = vadd.f32 %v1147, %v1442
        %1444 = vmatmul.f32.gmra.mxu0 %v1213
        %v1445 = vpop.f32.mrf.mxu0
        %v1446 = vadd.f32 %v1147, %v1445
        %1447 = vmatmul.f32.gmra.mxu0 %v1216
        %v1448 = vpop.f32.mrf.mxu0
        %v1449 = vadd.f32 %v1147, %v1448
        %1450 = vmatmul.f32.gmra.mxu0 %v1219
        %v1451 = vpop.f32.mrf.mxu0
        %v1452 = vadd.f32 %v1147, %v1451
        %1453 = vmatmul.f32.gmra.mxu0 %v1222
        %v1454 = vpop.f32.mrf.mxu0
        %v1455 = vadd.f32 %v1147, %v1454
        %1456 = vmatmul.f32.gmra.mxu0 %v1225
        %v1457 = vpop.f32.mrf.mxu0
        %v1458 = vadd.f32 %v1147, %v1457
        %1459 = vmatmul.f32.gmra.mxu0 %v1228
        %v1460 = vpop.f32.mrf.mxu0
        %v1461 = vadd.f32 %v1147, %v1460
        %1462 = vmatmul.f32.gmra.mxu0 %v1231
        %v1463 = vpop.f32.mrf.mxu0
        %v1464 = vadd.f32 %v1147, %v1463
        %1465 = vmatmul.f32.gmra.mxu0 %v1234
        %v1466 = vpop.f32.mrf.mxu0
        %v1467 = vadd.f32 %v1147, %v1466
        %1468 = vmatmul.f32.gmra.mxu0 %v1237
        %v1469 = vpop.f32.mrf.mxu0
        %v1470 = vadd.f32 %v1147, %v1469
        %1471 = vmatmul.f32.gmra.mxu0 %v1240
        %v1472 = vpop.f32.mrf.mxu0
        %v1473 = vadd.f32 %v1147, %v1472
        %1474 = vmatmul.f32.gmra.mxu0 %v1243
        %v1475 = vpop.f32.mrf.mxu0
        %v1476 = vadd.f32 %v1147, %v1475
        %1477 = vmatmul.f32.gmra.mxu0 %v1246
        %v1478 = vpop.f32.mrf.mxu0
        %v1479 = vadd.f32 %v1147, %v1478
        %1480 = vmatmul.f32.gmra.mxu0 %v1249
        %v1481 = vpop.f32.mrf.mxu0
        %v1482 = vadd.f32 %v1147, %v1481
        %1483 = vmatmul.f32.gmra.mxu0 %v1252
        %v1484 = vpop.f32.mrf.mxu0
        %v1485 = vadd.f32 %v1147, %v1484
        %1486 = vmatmul.f32.gmra.mxu0 %v1255
        %v1487 = vpop.f32.mrf.mxu0
        %v1488 = vadd.f32 %v1147, %v1487
        %1489 = vmatmul.f32.gmra.mxu0 %v1258
        %v1490 = vpop.f32.mrf.mxu0
        %v1491 = vadd.f32 %v1147, %v1490
        %1492 = vmatmul.f32.gmra.mxu0 %v1261
        %v1493 = vpop.f32.mrf.mxu0
        %v1494 = vadd.f32 %v1147, %v1493
        %1495 = vmatmul.f32.gmra.mxu0 %v1264
        %v1496 = vpop.f32.mrf.mxu0
        %v1497 = vadd.f32 %v1147, %v1496
        %1498 = vmatmul.f32.gmra.mxu0 %v1267
        %v1499 = vpop.f32.mrf.mxu0
        %v1500 = vadd.f32 %v1147, %v1499
        %1501 = vmatmul.f32.gmra.mxu0 %v1270
        %v1502 = vpop.f32.mrf.mxu0
        %v1503 = vadd.f32 %v1147, %v1502
        %1504 = vmatmul.f32.gmra.mxu0 %v1273
        %v1505 = vpop.f32.mrf.mxu0
        %v1506 = vadd.f32 %v1147, %v1505
        %1507 = vmatmul.f32.gmra.mxu0 %v1276
        %v1508 = vpop.f32.mrf.mxu0
        %v1509 = vadd.f32 %v1147, %v1508
        %1510 = vmatmul.f32.gmra.mxu0 %v1279
        %v1511 = vpop.f32.mrf.mxu0
        %v1512 = vadd.f32 %v1147, %v1511
        %1513 = vmatmul.f32.gmra.mxu0 %v1282
        %v1514 = vpop.f32.mrf.mxu0
        %v1515 = vadd.f32 %v1147, %v1514
        %1516 = vmatmul.f32.gmra.mxu0 %v1285
        %v1517 = vpop.f32.mrf.mxu0
        %v1518 = vadd.f32 %v1147, %v1517
        %1519 = vmatmul.f32.gmra.mxu0 %v1288
        %v1520 = vpop.f32.mrf.mxu0
        %v1521 = vadd.f32 %v1147, %v1520
        %1522 = vmatmul.f32.gmra.mxu0 %v1291
        %v1523 = vpop.f32.mrf.mxu0
        %v1524 = vadd.f32 %v1147, %v1523
        %1525 = vmatmul.f32.gmra.mxu0 %v1294
        %v1526 = vpop.f32.mrf.mxu0
        %v1527 = vadd.f32 %v1147, %v1526
        %1528 = vmatmul.f32.gmra.mxu0 %v1297
        %v1529 = vpop.f32.mrf.mxu0
        %v1530 = vadd.f32 %v1147, %v1529
        %1531 = vmatmul.f32.gmra.mxu0 %v1300
        %v1532 = vpop.f32.mrf.mxu0
        %v1533 = vadd.f32 %v1147, %v1532
        %1534 = vmatmul.f32.gmra.mxu0 %v1303
        %v1535 = vpop.f32.mrf.mxu0
        %v1536 = vadd.f32 %v1147, %v1535
        %1537 = vmatmul.f32.gmra.mxu0 %v1306
        %v1538 = vpop.f32.mrf.mxu0
        %v1539 = vadd.f32 %v1147, %v1538
        %1540 = vmatmul.f32.gmra.mxu0 %v1309
        %v1541 = vpop.f32.mrf.mxu0
        %v1542 = vadd.f32 %v1147, %v1541
        %1543 = vmatmul.f32.gmra.mxu0 %v1312
        %v1544 = vpop.f32.mrf.mxu0
        %v1545 = vadd.f32 %v1147, %v1544
        %1546 = vmatmul.f32.gmra.mxu0 %v1315
        %v1547 = vpop.f32.mrf.mxu0
        %v1548 = vadd.f32 %v1147, %v1547
        %1549 = vmatmul.f32.gmra.mxu0 %v1318
        %v1550 = vpop.f32.mrf.mxu0
        %v1551 = vadd.f32 %v1147, %v1550
        %1552 = vmatmul.f32.gmra.mxu0 %v1321
        %v1553 = vpop.f32.mrf.mxu0
        %v1554 = vadd.f32 %v1147, %v1553
        %1555 = vmatmul.f32.gmra.mxu0 %v1324
        %v1556 = vpop.f32.mrf.mxu0
        %v1557 = vadd.f32 %v1147, %v1556
        %1558 = vmatmul.f32.gmra.mxu0 %v1327
        %v1559 = vpop.f32.mrf.mxu0
        %v1560 = vadd.f32 %v1147, %v1559
        %1561 = vmatmul.f32.gmra.mxu0 %v1330
        %v1562 = vpop.f32.mrf.mxu0
        %v1563 = vadd.f32 %v1147, %v1562
        %1564 = vmatmul.f32.gmra.mxu0 %v1333
        %v1565 = vpop.f32.mrf.mxu0
        %v1566 = vadd.f32 %v1147, %v1565
        %1567 = vmatmul.f32.gmra.mxu0 %v1336
        %v1568 = vpop.f32.mrf.mxu0
        %v1569 = vadd.f32 %v1147, %v1568
        %1570 = vmatmul.f32.gmra.mxu0 %v1339
        %v1571 = vpop.f32.mrf.mxu0
        %v1572 = vadd.f32 %v1147, %v1571
        %1573 = vmatmul.f32.gmra.mxu0 %v1342
        %v1574 = vpop.f32.mrf.mxu0
        %v1575 = vadd.f32 %v1147, %v1574
        %1576 = vmatmul.f32.gmra.mxu0 %v1345
        %v1577 = vpop.f32.mrf.mxu0
        %v1578 = vadd.f32 %v1147, %v1577
        %1579 = vmatmul.f32.gmra.mxu0 %v1348
        %v1580 = vpop.f32.mrf.mxu0
        %v1581 = vadd.f32 %v1147, %v1580
        %1582 = vmatmul.f32.gmra.mxu0 %v1351
        %v1583 = vpop.f32.mrf.mxu0
        %v1584 = vadd.f32 %v1147, %v1583
        %1585 = vmatmul.f32.gmra.mxu0 %v1354
        %v1586 = vpop.f32.mrf.mxu0
        %v1587 = vadd.f32 %v1147, %v1586
        %1588 = vmatmul.f32.gmra.mxu0 %v1357
        %v1589 = vpop.f32.mrf.mxu0
        %v1590 = vadd.f32 %v1147, %v1589
        %1591 = vmatmul.f32.gmra.mxu0 %v1360
        %v1592 = vpop.f32.mrf.mxu0
        %v1593 = vadd.f32 %v1147, %v1592
        %1594 = vmatmul.f32.gmra.mxu0 %v1363
        %v1595 = vpop.f32.mrf.mxu0
        %v1596 = vadd.f32 %v1147, %v1595
        %1597 = vdwg.mxu0
        %v1598 = vadd.f32 %v1383, 3.0
        %v1599 = vadd.f32 %v1386, 3.0
        %v1600 = vadd.f32 %v1389, 3.0
        %v1601 = vadd.f32 %v1392, 3.0
        %v1602 = vadd.f32 %v1395, 3.0
        %v1603 = vadd.f32 %v1398, 3.0
        %v1604 = vadd.f32 %v1401, 3.0
        %v1605 = vadd.f32 %v1404, 3.0
        %v1606 = vadd.f32 %v1407, 3.0
        %v1607 = vadd.f32 %v1410, 3.0
        %v1608 = vadd.f32 %v1413, 3.0
        %v1609 = vadd.f32 %v1416, 3.0
        %v1610 = vadd.f32 %v1419, 3.0
        %v1611 = vadd.f32 %v1422, 3.0
        %v1612 = vadd.f32 %v1425, 3.0
        %v1613 = vadd.f32 %v1428, 3.0
        %v1614 = vadd.f32 %v1431, 3.0
        %v1615 = vadd.f32 %v1434, 3.0
        %v1616 = vadd.f32 %v1437, 3.0
        %v1617 = vadd.f32 %v1440, 3.0
        %v1618 = vadd.f32 %v1443, 3.0
        %v1619 = vadd.f32 %v1446, 3.0
        %v1620 = vadd.f32 %v1449, 3.0
        %v1621 = vadd.f32 %v1452, 3.0
        %v1622 = vadd.f32 %v1455, 3.0
        %v1623 = vadd.f32 %v1458, 3.0
        %v1624 = vadd.f32 %v1461, 3.0
        %v1625 = vadd.f32 %v1464, 3.0
        %v1626 = vadd.f32 %v1467, 3.0
        %v1627 = vadd.f32 %v1470, 3.0
        %v1628 = vadd.f32 %v1473, 3.0
        %v1629 = vadd.f32 %v1476, 3.0
        %v1630 = vadd.f32 %v1479, 3.0
        %v1631 = vadd.f32 %v1482, 3.0
        %v1632 = vadd.f32 %v1485, 3.0
        %v1633 = vadd.f32 %v1488, 3.0
        %v1634 = vadd.f32 %v1491, 3.0
        %v1635 = vadd.f32 %v1494, 3.0
        %v1636 = vadd.f32 %v1497, 3.0
        %v1637 = vadd.f32 %v1500, 3.0
        %v1638 = vadd.f32 %v1503, 3.0
        %v1639 = vadd.f32 %v1506, 3.0
        %v1640 = vadd.f32 %v1509, 3.0
        %v1641 = vadd.f32 %v1512, 3.0
        %v1642 = vadd.f32 %v1515, 3.0
        %v1643 = vadd.f32 %v1518, 3.0
        %v1644 = vadd.f32 %v1521, 3.0
        %v1645 = vadd.f32 %v1524, 3.0
        %v1646 = vadd.f32 %v1527, 3.0
        %v1647 = vadd.f32 %v1530, 3.0
        %v1648 = vadd.f32 %v1533, 3.0
        %v1649 = vadd.f32 %v1536, 3.0
        %v1650 = vadd.f32 %v1539, 3.0
        %v1651 = vadd.f32 %v1542, 3.0
        %v1652 = vadd.f32 %v1545, 3.0
        %v1653 = vadd.f32 %v1548, 3.0
        %v1654 = vadd.f32 %v1551, 3.0
        %v1655 = vadd.f32 %v1554, 3.0
        %v1656 = vadd.f32 %v1557, 3.0
        %v1657 = vadd.f32 %v1560, 3.0
        %v1658 = vadd.f32 %v1563, 3.0
        %v1659 = vadd.f32 %v1566, 3.0
        %v1660 = vadd.f32 %v1569, 3.0
        %v1661 = vadd.f32 %v1572, 3.0
        %v1662 = vadd.f32 %v1575, 3.0
        %v1663 = vadd.f32 %v1578, 3.0
        %v1664 = vadd.f32 %v1581, 3.0
        %v1665 = vadd.f32 %v1584, 3.0
        %v1666 = vadd.f32 %v1587, 3.0
        %v1667 = vadd.f32 %v1590, 3.0
        %v1668 = vadd.f32 %v1593, 3.0
        %v1669 = vadd.f32 %v1596, 3.0
        %v1670 = vmax.f32 %v1598, 0.0
        %v1671 = vmax.f32 %v1599, 0.0
        %v1672 = vmax.f32 %v1600, 0.0
        %v1673 = vmax.f32 %v1601, 0.0
        %v1674 = vmax.f32 %v1602, 0.0
        %v1675 = vmax.f32 %v1603, 0.0
        %v1676 = vmax.f32 %v1604, 0.0
        %v1677 = vmax.f32 %v1605, 0.0
        %v1678 = vmax.f32 %v1606, 0.0
        %v1679 = vmax.f32 %v1607, 0.0
        %v1680 = vmax.f32 %v1608, 0.0
        %v1681 = vmax.f32 %v1609, 0.0
        %v1682 = vmax.f32 %v1610, 0.0
        %v1683 = vmax.f32 %v1611, 0.0
        %v1684 = vmax.f32 %v1612, 0.0
        %v1685 = vmax.f32 %v1613, 0.0
        %v1686 = vmax.f32 %v1614, 0.0
        %v1687 = vmax.f32 %v1615, 0.0
        %v1688 = vmax.f32 %v1616, 0.0
        %v1689 = vmax.f32 %v1617, 0.0
        %v1690 = vmax.f32 %v1618, 0.0
        %v1691 = vmax.f32 %v1619, 0.0
        %v1692 = vmax.f32 %v1620, 0.0
        %v1693 = vmax.f32 %v1621, 0.0
        %v1694 = vmax.f32 %v1622, 0.0
        %v1695 = vmax.f32 %v1623, 0.0
        %v1696 = vmax.f32 %v1624, 0.0
        %v1697 = vmax.f32 %v1625, 0.0
        %v1698 = vmax.f32 %v1626, 0.0
        %v1699 = vmax.f32 %v1627, 0.0
        %v1700 = vmax.f32 %v1628, 0.0
        %v1701 = vmax.f32 %v1629, 0.0
        %v1702 = vmax.f32 %v1630, 0.0
        %v1703 = vmax.f32 %v1631, 0.0
        %v1704 = vmax.f32 %v1632, 0.0
        %v1705 = vmax.f32 %v1633, 0.0
        %v1706 = vmax.f32 %v1634, 0.0
        %v1707 = vmax.f32 %v1635, 0.0
        %v1708 = vmax.f32 %v1636, 0.0
        %v1709 = vmax.f32 %v1637, 0.0
        %v1710 = vmax.f32 %v1638, 0.0
        %v1711 = vmax.f32 %v1639, 0.0
        %v1712 = vmax.f32 %v1640, 0.0
        %v1713 = vmax.f32 %v1641, 0.0
        %v1714 = vmax.f32 %v1642, 0.0
        %v1715 = vmax.f32 %v1643, 0.0
        %v1716 = vmax.f32 %v1644, 0.0
        %v1717 = vmax.f32 %v1645, 0.0
        %v1718 = vmax.f32 %v1646, 0.0
        %v1719 = vmax.f32 %v1647, 0.0
        %v1720 = vmax.f32 %v1648, 0.0
        %v1721 = vmax.f32 %v1649, 0.0
        %v1722 = vmax.f32 %v1650, 0.0
        %v1723 = vmax.f32 %v1651, 0.0
        %v1724 = vmax.f32 %v1652, 0.0
        %v1725 = vmax.f32 %v1653, 0.0
        %v1726 = vmax.f32 %v1654, 0.0
        %v1727 = vmax.f32 %v1655, 0.0
        %v1728 = vmax.f32 %v1656, 0.0
        %v1729 = vmax.f32 %v1657, 0.0
        %v1730 = vmax.f32 %v1658, 0.0
        %v1731 = vmax.f32 %v1659, 0.0
        %v1732 = vmax.f32 %v1660, 0.0
        %v1733 = vmax.f32 %v1661, 0.0
        %v1734 = vmax.f32 %v1662, 0.0
        %v1735 = vmax.f32 %v1663, 0.0
        %v1736 = vmax.f32 %v1664, 0.0
        %v1737 = vmax.f32 %v1665, 0.0
        %v1738 = vmax.f32 %v1666, 0.0
        %v1739 = vmax.f32 %v1667, 0.0
        %v1740 = vmax.f32 %v1668, 0.0
        %v1741 = vmax.f32 %v1669, 0.0
        %v1742 = vmin.f32 %v1670, 6.0
        %v1743 = vmin.f32 %v1671, 6.0
        %v1744 = vmin.f32 %v1672, 6.0
        %v1745 = vmin.f32 %v1673, 6.0
        %v1746 = vmin.f32 %v1674, 6.0
        %v1747 = vmin.f32 %v1675, 6.0
        %v1748 = vmin.f32 %v1676, 6.0
        %v1749 = vmin.f32 %v1677, 6.0
        %v1750 = vmin.f32 %v1678, 6.0
        %v1751 = vmin.f32 %v1679, 6.0
        %v1752 = vmin.f32 %v1680, 6.0
        %v1753 = vmin.f32 %v1681, 6.0
        %v1754 = vmin.f32 %v1682, 6.0
        %v1755 = vmin.f32 %v1683, 6.0
        %v1756 = vmin.f32 %v1684, 6.0
        %v1757 = vmin.f32 %v1685, 6.0
        %v1758 = vmin.f32 %v1686, 6.0
        %v1759 = vmin.f32 %v1687, 6.0
        %v1760 = vmin.f32 %v1688, 6.0
        %v1761 = vmin.f32 %v1689, 6.0
        %v1762 = vmin.f32 %v1690, 6.0
        %v1763 = vmin.f32 %v1691, 6.0
        %v1764 = vmin.f32 %v1692, 6.0
        %v1765 = vmin.f32 %v1693, 6.0
        %v1766 = vmin.f32 %v1694, 6.0
        %v1767 = vmin.f32 %v1695, 6.0
        %v1768 = vmin.f32 %v1696, 6.0
        %v1769 = vmin.f32 %v1697, 6.0
        %v1770 = vmin.f32 %v1698, 6.0
        %v1771 = vmin.f32 %v1699, 6.0
        %v1772 = vmin.f32 %v1700, 6.0
        %v1773 = vmin.f32 %v1701, 6.0
        %v1774 = vmin.f32 %v1702, 6.0
        %v1775 = vmin.f32 %v1703, 6.0
        %v1776 = vmin.f32 %v1704, 6.0
        %v1777 = vmin.f32 %v1705, 6.0
        %v1778 = vmin.f32 %v1706, 6.0
        %v1779 = vmin.f32 %v1707, 6.0
        %v1780 = vmin.f32 %v1708, 6.0
        %v1781 = vmin.f32 %v1709, 6.0
        %v1782 = vmin.f32 %v1710, 6.0
        %v1783 = vmin.f32 %v1711, 6.0
        %v1784 = vmin.f32 %v1712, 6.0
        %v1785 = vmin.f32 %v1713, 6.0
        %v1786 = vmin.f32 %v1714, 6.0
        %v1787 = vmin.f32 %v1715, 6.0
        %v1788 = vmin.f32 %v1716, 6.0
        %v1789 = vmin.f32 %v1717, 6.0
        %v1790 = vmin.f32 %v1718, 6.0
        %v1791 = vmin.f32 %v1719, 6.0
        %v1792 = vmin.f32 %v1720, 6.0
        %v1793 = vmin.f32 %v1721, 6.0
        %v1794 = vmin.f32 %v1722, 6.0
        %v1795 = vmin.f32 %v1723, 6.0
        %v1796 = vmin.f32 %v1724, 6.0
        %v1797 = vmin.f32 %v1725, 6.0
        %v1798 = vmin.f32 %v1726, 6.0
        %v1799 = vmin.f32 %v1727, 6.0
        %v1800 = vmin.f32 %v1728, 6.0
        %v1801 = vmin.f32 %v1729, 6.0
        %v1802 = vmin.f32 %v1730, 6.0
        %v1803 = vmin.f32 %v1731, 6.0
        %v1804 = vmin.f32 %v1732, 6.0
        %v1805 = vmin.f32 %v1733, 6.0
        %v1806 = vmin.f32 %v1734, 6.0
        %v1807 = vmin.f32 %v1735, 6.0
        %v1808 = vmin.f32 %v1736, 6.0
        %v1809 = vmin.f32 %v1737, 6.0
        %v1810 = vmin.f32 %v1738, 6.0
        %v1811 = vmin.f32 %v1739, 6.0
        %v1812 = vmin.f32 %v1740, 6.0
        %v1813 = vmin.f32 %v1741, 6.0
        %v1814 = vmul.f32 %v1383, %v1742
        %v1815 = vmul.f32 %v1386, %v1743
        %v1816 = vmul.f32 %v1389, %v1744
        %v1817 = vmul.f32 %v1392, %v1745
        %v1818 = vmul.f32 %v1395, %v1746
        %v1819 = vmul.f32 %v1398, %v1747
        %v1820 = vmul.f32 %v1401, %v1748
        %v1821 = vmul.f32 %v1404, %v1749
        %v1822 = vmul.f32 %v1407, %v1750
        %v1823 = vmul.f32 %v1410, %v1751
        %v1824 = vmul.f32 %v1413, %v1752
        %v1825 = vmul.f32 %v1416, %v1753
        %v1826 = vmul.f32 %v1419, %v1754
        %v1827 = vmul.f32 %v1422, %v1755
        %v1828 = vmul.f32 %v1425, %v1756
        %v1829 = vmul.f32 %v1428, %v1757
        %v1830 = vmul.f32 %v1431, %v1758
        %v1831 = vmul.f32 %v1434, %v1759
        %v1832 = vmul.f32 %v1437, %v1760
        %v1833 = vmul.f32 %v1440, %v1761
        %v1834 = vmul.f32 %v1443, %v1762
        %v1835 = vmul.f32 %v1446, %v1763
        %v1836 = vmul.f32 %v1449, %v1764
        %v1837 = vmul.f32 %v1452, %v1765
        %v1838 = vmul.f32 %v1455, %v1766
        %v1839 = vmul.f32 %v1458, %v1767
        %v1840 = vmul.f32 %v1461, %v1768
        %v1841 = vmul.f32 %v1464, %v1769
        %v1842 = vmul.f32 %v1467, %v1770
        %v1843 = vmul.f32 %v1470, %v1771
        %v1844 = vmul.f32 %v1473, %v1772
        %v1845 = vmul.f32 %v1476, %v1773
        %v1846 = vmul.f32 %v1479, %v1774
        %v1847 = vmul.f32 %v1482, %v1775
        %v1848 = vmul.f32 %v1485, %v1776
        %v1849 = vmul.f32 %v1488, %v1777
        %v1850 = vmul.f32 %v1491, %v1778
        %v1851 = vmul.f32 %v1494, %v1779
        %v1852 = vmul.f32 %v1497, %v1780
        %v1853 = vmul.f32 %v1500, %v1781
        %v1854 = vmul.f32 %v1503, %v1782
        %v1855 = vmul.f32 %v1506, %v1783
        %v1856 = vmul.f32 %v1509, %v1784
        %v1857 = vmul.f32 %v1512, %v1785
        %v1858 = vmul.f32 %v1515, %v1786
        %v1859 = vmul.f32 %v1518, %v1787
        %v1860 = vmul.f32 %v1521, %v1788
        %v1861 = vmul.f32 %v1524, %v1789
        %v1862 = vmul.f32 %v1527, %v1790
        %v1863 = vmul.f32 %v1530, %v1791
        %v1864 = vmul.f32 %v1533, %v1792
        %v1865 = vmul.f32 %v1536, %v1793
        %v1866 = vmul.f32 %v1539, %v1794
        %v1867 = vmul.f32 %v1542, %v1795
        %v1868 = vmul.f32 %v1545, %v1796
        %v1869 = vmul.f32 %v1548, %v1797
        %v1870 = vmul.f32 %v1551, %v1798
        %v1871 = vmul.f32 %v1554, %v1799
        %v1872 = vmul.f32 %v1557, %v1800
        %v1873 = vmul.f32 %v1560, %v1801
        %v1874 = vmul.f32 %v1563, %v1802
        %v1875 = vmul.f32 %v1566, %v1803
        %v1876 = vmul.f32 %v1569, %v1804
        %v1877 = vmul.f32 %v1572, %v1805
        %v1878 = vmul.f32 %v1575, %v1806
        %v1879 = vmul.f32 %v1578, %v1807
        %v1880 = vmul.f32 %v1581, %v1808
        %v1881 = vmul.f32 %v1584, %v1809
        %v1882 = vmul.f32 %v1587, %v1810
        %v1883 = vmul.f32 %v1590, %v1811
        %v1884 = vmul.f32 %v1593, %v1812
        %v1885 = vmul.f32 %v1596, %v1813
        %v1886 = vmul.f32 %v1814, 0.16666667
        %v1887 = vmul.f32 %v1815, 0.16666667
        %v1888 = vmul.f32 %v1816, 0.16666667
        %v1889 = vmul.f32 %v1817, 0.16666667
        %v1890 = vmul.f32 %v1818, 0.16666667
        %v1891 = vmul.f32 %v1819, 0.16666667
        %v1892 = vmul.f32 %v1820, 0.16666667
        %v1893 = vmul.f32 %v1821, 0.16666667
        %v1894 = vmul.f32 %v1822, 0.16666667
        %v1895 = vmul.f32 %v1823, 0.16666667
        %v1896 = vmul.f32 %v1824, 0.16666667
        %v1897 = vmul.f32 %v1825, 0.16666667
        %v1898 = vmul.f32 %v1826, 0.16666667
        %v1899 = vmul.f32 %v1827, 0.16666667
        %v1900 = vmul.f32 %v1828, 0.16666667
        %v1901 = vmul.f32 %v1829, 0.16666667
        %v1902 = vmul.f32 %v1830, 0.16666667
        %v1903 = vmul.f32 %v1831, 0.16666667
        %v1904 = vmul.f32 %v1832, 0.16666667
        %v1905 = vmul.f32 %v1833, 0.16666667
        %v1906 = vmul.f32 %v1834, 0.16666667
        %v1907 = vmul.f32 %v1835, 0.16666667
        %v1908 = vmul.f32 %v1836, 0.16666667
        %v1909 = vmul.f32 %v1837, 0.16666667
        %v1910 = vmul.f32 %v1838, 0.16666667
        %v1911 = vmul.f32 %v1839, 0.16666667
        %v1912 = vmul.f32 %v1840, 0.16666667
        %v1913 = vmul.f32 %v1841, 0.16666667
        %v1914 = vmul.f32 %v1842, 0.16666667
        %v1915 = vmul.f32 %v1843, 0.16666667
        %v1916 = vmul.f32 %v1844, 0.16666667
        %v1917 = vmul.f32 %v1845, 0.16666667
        %v1918 = vmul.f32 %v1846, 0.16666667
        %v1919 = vmul.f32 %v1847, 0.16666667
        %v1920 = vmul.f32 %v1848, 0.16666667
        %v1921 = vmul.f32 %v1849, 0.16666667
        %v1922 = vmul.f32 %v1850, 0.16666667
        %v1923 = vmul.f32 %v1851, 0.16666667
        %v1924 = vmul.f32 %v1852, 0.16666667
        %v1925 = vmul.f32 %v1853, 0.16666667
        %v1926 = vmul.f32 %v1854, 0.16666667
        %v1927 = vmul.f32 %v1855, 0.16666667
        %v1928 = vmul.f32 %v1856, 0.16666667
        %v1929 = vmul.f32 %v1857, 0.16666667
        %v1930 = vmul.f32 %v1858, 0.16666667
        %v1931 = vmul.f32 %v1859, 0.16666667
        %v1932 = vmul.f32 %v1860, 0.16666667
        %v1933 = vmul.f32 %v1861, 0.16666667
        %v1934 = vmul.f32 %v1862, 0.16666667
        %v1935 = vmul.f32 %v1863, 0.16666667
        %v1936 = vmul.f32 %v1864, 0.16666667
        %v1937 = vmul.f32 %v1865, 0.16666667
        %v1938 = vmul.f32 %v1866, 0.16666667
        %v1939 = vmul.f32 %v1867, 0.16666667
        %v1940 = vmul.f32 %v1868, 0.16666667
        %v1941 = vmul.f32 %v1869, 0.16666667
        %v1942 = vmul.f32 %v1870, 0.16666667
        %v1943 = vmul.f32 %v1871, 0.16666667
        %v1944 = vmul.f32 %v1872, 0.16666667
        %v1945 = vmul.f32 %v1873, 0.16666667
        %v1946 = vmul.f32 %v1874, 0.16666667
        %v1947 = vmul.f32 %v1875, 0.16666667
        %v1948 = vmul.f32 %v1876, 0.16666667
        %v1949 = vmul.f32 %v1877, 0.16666667
        %v1950 = vmul.f32 %v1878, 0.16666667
        %v1951 = vmul.f32 %v1879, 0.16666667
        %v1952 = vmul.f32 %v1880, 0.16666667
        %v1953 = vmul.f32 %v1881, 0.16666667
        %v1954 = vmul.f32 %v1882, 0.16666667
        %v1955 = vmul.f32 %v1883, 0.16666667
        %v1956 = vmul.f32 %v1884, 0.16666667
        %v1957 = vmul.f32 %v1885, 0.16666667
        %vm1958 = vcmask 31744
        %1959 = vst.msk [vmem:[#allocation3] sm:$0xff] %vm1958, %v1886
        %1960 = vst.msk [vmem:[#allocation3 + $0x8] sm:$0xff] %vm1958, %v1887
        %1961 = vst.msk [vmem:[#allocation3 + $0x10] sm:$0xff] %vm1958, %v1888
        %1962 = vst.msk [vmem:[#allocation3 + $0x18] sm:$0xff] %vm1958, %v1889
        %1963 = vst.msk [vmem:[#allocation3 + $0x20] sm:$0xff] %vm1958, %v1890
        %1964 = vst.msk [vmem:[#allocation3 + $0x28] sm:$0xff] %vm1958, %v1891
        %1965 = vst.msk [vmem:[#allocation3 + $0x30] sm:$0xff] %vm1958, %v1892
        %1966 = vst.msk [vmem:[#allocation3 + $0x38] sm:$0xff] %vm1958, %v1893
        %1967 = vst.msk [vmem:[#allocation3 + $0x40] sm:$0xff] %vm1958, %v1894
        %1968 = vst.msk [vmem:[#allocation3 + $0x48] sm:$0xff] %vm1958, %v1895
        %1969 = vst.msk [vmem:[#allocation3 + $0x50] sm:$0xff] %vm1958, %v1896
        %1970 = vst.msk [vmem:[#allocation3 + $0x58] sm:$0xff] %vm1958, %v1897
        %1971 = vst.msk [vmem:[#allocation3 + $0x60] sm:$0xff] %vm1958, %v1898
        %1972 = vst.msk [vmem:[#allocation3 + $0x68] sm:$0xff] %vm1958, %v1899
        %1973 = vst.msk [vmem:[#allocation3 + $0x70] sm:$0xff] %vm1958, %v1900
        %1974 = vst.msk [vmem:[#allocation3 + $0x78] sm:$0xff] %vm1958, %v1901
        %1975 = vst.msk [vmem:[#allocation3 + $0x80] sm:$0xff] %vm1958, %v1902
        %1976 = vst.msk [vmem:[#allocation3 + $0x88] sm:$0xff] %vm1958, %v1903
        %1977 = vst.msk [vmem:[#allocation3 + $0x90] sm:$0xff] %vm1958, %v1904
        %1978 = vst.msk [vmem:[#allocation3 + $0x98] sm:$0xff] %vm1958, %v1905
        %1979 = vst.msk [vmem:[#allocation3 + $0xa0] sm:$0xff] %vm1958, %v1906
        %1980 = vst.msk [vmem:[#allocation3 + $0xa8] sm:$0xff] %vm1958, %v1907
        %1981 = vst.msk [vmem:[#allocation3 + $0xb0] sm:$0xff] %vm1958, %v1908
        %1982 = vst.msk [vmem:[#allocation3 + $0xb8] sm:$0xff] %vm1958, %v1909
        %1983 = vst.msk [vmem:[#allocation3 + $0xc0] sm:$0xff] %vm1958, %v1910
        %1984 = vst.msk [vmem:[#allocation3 + $0xc8] sm:$0xff] %vm1958, %v1911
        %1985 = vst.msk [vmem:[#allocation3 + $0xd0] sm:$0xff] %vm1958, %v1912
        %1986 = vst.msk [vmem:[#allocation3 + $0xd8] sm:$0xff] %vm1958, %v1913
        %1987 = vst.msk [vmem:[#allocation3 + $0xe0] sm:$0xff] %vm1958, %v1914
        %1988 = vst.msk [vmem:[#allocation3 + $0xe8] sm:$0xff] %vm1958, %v1915
        %1989 = vst.msk [vmem:[#allocation3 + $0xf0] sm:$0xff] %vm1958, %v1916
        %1990 = vst.msk [vmem:[#allocation3 + $0xf8] sm:$0xff] %vm1958, %v1917
        %1991 = vst.msk [vmem:[#allocation3 + $0x100] sm:$0xff] %vm1958, %v1918
        %1992 = vst.msk [vmem:[#allocation3 + $0x108] sm:$0xff] %vm1958, %v1919
        %1993 = vst.msk [vmem:[#allocation3 + $0x110] sm:$0xff] %vm1958, %v1920
        %1994 = vst.msk [vmem:[#allocation3 + $0x118] sm:$0xff] %vm1958, %v1921
        %1995 = vst.msk [vmem:[#allocation3 + $0x120] sm:$0xff] %vm1958, %v1922
        %1996 = vst.msk [vmem:[#allocation3 + $0x128] sm:$0xff] %vm1958, %v1923
        %1997 = vst.msk [vmem:[#allocation3 + $0x130] sm:$0xff] %vm1958, %v1924
        %1998 = vst.msk [vmem:[#allocation3 + $0x138] sm:$0xff] %vm1958, %v1925
        %1999 = vst.msk [vmem:[#allocation3 + $0x140] sm:$0xff] %vm1958, %v1926
        %2000 = vst.msk [vmem:[#allocation3 + $0x148] sm:$0xff] %vm1958, %v1927
        %2001 = vst.msk [vmem:[#allocation3 + $0x150] sm:$0xff] %vm1958, %v1928
        %2002 = vst.msk [vmem:[#allocation3 + $0x158] sm:$0xff] %vm1958, %v1929
        %2003 = vst.msk [vmem:[#allocation3 + $0x160] sm:$0xff] %vm1958, %v1930
        %2004 = vst.msk [vmem:[#allocation3 + $0x168] sm:$0xff] %vm1958, %v1931
        %2005 = vst.msk [vmem:[#allocation3 + $0x170] sm:$0xff] %vm1958, %v1932
        %2006 = vst.msk [vmem:[#allocation3 + $0x178] sm:$0xff] %vm1958, %v1933
        %2007 = vst.msk [vmem:[#allocation3 + $0x180] sm:$0xff] %vm1958, %v1934
        %2008 = vst.msk [vmem:[#allocation3 + $0x188] sm:$0xff] %vm1958, %v1935
        %2009 = vst.msk [vmem:[#allocation3 + $0x190] sm:$0xff] %vm1958, %v1936
        %2010 = vst.msk [vmem:[#allocation3 + $0x198] sm:$0xff] %vm1958, %v1937
        %2011 = vst.msk [vmem:[#allocation3 + $0x1a0] sm:$0xff] %vm1958, %v1938
        %2012 = vst.msk [vmem:[#allocation3 + $0x1a8] sm:$0xff] %vm1958, %v1939
        %2013 = vst.msk [vmem:[#allocation3 + $0x1b0] sm:$0xff] %vm1958, %v1940
        %2014 = vst.msk [vmem:[#allocation3 + $0x1b8] sm:$0xff] %vm1958, %v1941
        %2015 = vst.msk [vmem:[#allocation3 + $0x1c0] sm:$0xff] %vm1958, %v1942
        %2016 = vst.msk [vmem:[#allocation3 + $0x1c8] sm:$0xff] %vm1958, %v1943
        %2017 = vst.msk [vmem:[#allocation3 + $0x1d0] sm:$0xff] %vm1958, %v1944
        %2018 = vst.msk [vmem:[#allocation3 + $0x1d8] sm:$0xff] %vm1958, %v1945
        %2019 = vst.msk [vmem:[#allocation3 + $0x1e0] sm:$0xff] %vm1958, %v1946
        %2020 = vst.msk [vmem:[#allocation3 + $0x1e8] sm:$0xff] %vm1958, %v1947
        %2021 = vst.msk [vmem:[#allocation3 + $0x1f0] sm:$0xff] %vm1958, %v1948
        %2022 = vst.msk [vmem:[#allocation3 + $0x1f8] sm:$0xff] %vm1958, %v1949
        %2023 = vst.msk [vmem:[#allocation3 + $0x200] sm:$0xff] %vm1958, %v1950
        %2024 = vst.msk [vmem:[#allocation3 + $0x208] sm:$0xff] %vm1958, %v1951
        %2025 = vst.msk [vmem:[#allocation3 + $0x210] sm:$0xff] %vm1958, %v1952
        %2026 = vst.msk [vmem:[#allocation3 + $0x218] sm:$0xff] %vm1958, %v1953
        %2027 = vst.msk [vmem:[#allocation3 + $0x220] sm:$0xff] %vm1958, %v1954
        %2028 = vst.msk [vmem:[#allocation3 + $0x228] sm:$0xff] %vm1958, %v1955
        %2029 = vst.msk [vmem:[#allocation3 + $0x230] sm:$0xff] %vm1958, %v1956
        %2030 = vst.msk [vmem:[#allocation3 + $0x238] sm:$0xff] %vm1958, %v1957
        %vm2031 = vcmask 24576
        %2032 = vst.msk [vmem:[#allocation3] sm:$0x1] %vm2031, 0.0
        %2033 = vst.msk [vmem:[#allocation3 + $0x20] sm:$0x1] %vm2031, 0.0
        %2034 = vst.msk [vmem:[#allocation3 + $0x40] sm:$0x1] %vm2031, 0.0
        %2035 = vst.msk [vmem:[#allocation3 + $0x60] sm:$0x1] %vm2031, 0.0
        %2036 = vst.msk [vmem:[#allocation3 + $0x80] sm:$0x1] %vm2031, 0.0
        %2037 = vst.msk [vmem:[#allocation3 + $0xa0] sm:$0x1] %vm2031, 0.0
        %2038 = vst.msk [vmem:[#allocation3 + $0xc0] sm:$0x1] %vm2031, 0.0
        %2039 = vst.msk [vmem:[#allocation3 + $0xe0] sm:$0x1] %vm2031, 0.0
        %2040 = vst.msk [vmem:[#allocation3 + $0x100] sm:$0x1] %vm2031, 0.0
        %2041 = vst.msk [vmem:[#allocation3 + $0x120] sm:$0x1] %vm2031, 0.0
        %2042 = vst.msk [vmem:[#allocation3 + $0x140] sm:$0x1] %vm2031, 0.0
        %2043 = vst.msk [vmem:[#allocation3 + $0x160] sm:$0x1] %vm2031, 0.0
        %2044 = vst.msk [vmem:[#allocation3 + $0x180] sm:$0x1] %vm2031, 0.0
        %2045 = vst.msk [vmem:[#allocation3 + $0x1a0] sm:$0x1] %vm2031, 0.0
        %2046 = vst.msk [vmem:[#allocation3 + $0x1c0] sm:$0x1] %vm2031, 0.0
        %2047 = vst.msk [vmem:[#allocation3 + $0x1e0] sm:$0x1] %vm2031, 0.0
        %2048 = vst.msk [vmem:[#allocation3 + $0x200] sm:$0x1] %vm2031, 0.0
        %2049 = vst.msk [vmem:[#allocation3 + $0x220] sm:$0x1] %vm2031, 0.0
        %p2050 = scmp.eq.s32.totalorder %s25, 0
        // Predicated region
        $region147: #{shuffle_v2_downsampling.1} parent=137 // pred_check
          %p2051 = pneg %p2050
        $region148: #{shuffle_v2_downsampling.1} parent=137 // pred_check_branch
          %2053 = sbr.rel (%p2051) target = $region150
        $region149: #{shuffle_v2_downsampling.1} parent=137 // pred_region
          %2054 = vst.msk [vmem:[#allocation3] sm:$0xff] %vm1958, 0.0
          %2055 = vst.msk [vmem:[#allocation3 + $0x8] sm:$0xff] %vm1958, 0.0
          %2056 = vst.msk [vmem:[#allocation3 + $0x10] sm:$0xff] %vm1958, 0.0
          %2057 = vst.msk [vmem:[#allocation3 + $0x18] sm:$0xff] %vm1958, 0.0
        $region150: #{shuffle_v2_downsampling.1} parent=137 // pred_fallthru
          _
        %v2058 = vld [vmem:[%s5] sm:$0xff]
        %v2059 = vld [vmem:[%s5 + $0x8] sm:$0x1]
        %v2060 = vld [vmem:[#allocation3] sm:$0xff]
        %v2061 = vld [vmem:[#allocation3 + $0x20] sm:$0xff]
        %v2062 = vld [vmem:[#allocation3 + $0x40] sm:$0xff]
        %v2063 = vld [vmem:[#allocation3 + $0x60] sm:$0xff]
        %v2064 = vld [vmem:[#allocation3 + $0x80] sm:$0xff]
        %v2065 = vld [vmem:[#allocation3 + $0xa0] sm:$0xff]
        %v2066 = vld [vmem:[#allocation3 + $0xc0] sm:$0xff]
        %v2067 = vld [vmem:[#allocation3 + $0xe0] sm:$0xff]
        %v2068 = vperm.slane %v2058, 0
        %v2069 = vmul.f32 %v2060, %v2068
        %v2070 = vmul.f32 %v2061, %v2068
        %v2071 = vmul.f32 %v2062, %v2068
        %v2072 = vmul.f32 %v2063, %v2068
        %v2073 = vmul.f32 %v2064, %v2068
        %v2074 = vmul.f32 %v2065, %v2068
        %v2075 = vmul.f32 %v2066, %v2068
        %v2076 = vmul.f32 %v2067, %v2068
        %v2077 = vadd.f32 %v2069, 0.0
        %v2078 = vadd.f32 %v2070, 0.0
        %v2079 = vadd.f32 %v2071, 0.0
        %v2080 = vadd.f32 %v2072, 0.0
        %v2081 = vadd.f32 %v2073, 0.0
        %v2082 = vadd.f32 %v2074, 0.0
        %v2083 = vadd.f32 %v2075, 0.0
        %v2084 = vadd.f32 %v2076, 0.0
        %s2085 = scalar_lea.vmem [#allocation3], 16
        %v2086 = vld [vmem:[%s2085] sm:$0xff]
        %v2087 = vld [vmem:[%s2085 + $0x20] sm:$0xff]
        %v2088 = vld [vmem:[%s2085 + $0x40] sm:$0xff]
        %v2089 = vld [vmem:[%s2085 + $0x60] sm:$0xff]
        %v2090 = vld [vmem:[%s2085 + $0x80] sm:$0xff]
        %v2091 = vld [vmem:[%s2085 + $0xa0] sm:$0xff]
        %v2092 = vld [vmem:[%s2085 + $0xc0] sm:$0xff]
        %v2093 = vld [vmem:[%s2085 + $0xe0] sm:$0xff]
        %v2094 = vperm.slane %v2058, 1
        %v2095 = vmul.f32 %v2086, %v2094
        %v2096 = vmul.f32 %v2087, %v2094
        %v2097 = vmul.f32 %v2088, %v2094
        %v2098 = vmul.f32 %v2089, %v2094
        %v2099 = vmul.f32 %v2090, %v2094
        %v2100 = vmul.f32 %v2091, %v2094
        %v2101 = vmul.f32 %v2092, %v2094
        %v2102 = vmul.f32 %v2093, %v2094
        %v2103 = vadd.f32 %v2077, %v2095
        %v2104 = vadd.f32 %v2078, %v2096
        %v2105 = vadd.f32 %v2079, %v2097
        %v2106 = vadd.f32 %v2080, %v2098
        %v2107 = vadd.f32 %v2081, %v2099
        %v2108 = vadd.f32 %v2082, %v2100
        %v2109 = vadd.f32 %v2083, %v2101
        %v2110 = vadd.f32 %v2084, %v2102
        %v2111 = vld [vmem:[#allocation3 + $0x1] sm:$0xff]
        %v2112 = vld [vmem:[#allocation3 + $0x21] sm:$0xff]
        %v2113 = vld [vmem:[#allocation3 + $0x41] sm:$0xff]
        %v2114 = vld [vmem:[#allocation3 + $0x61] sm:$0xff]
        %v2115 = vld [vmem:[#allocation3 + $0x81] sm:$0xff]
        %v2116 = vld [vmem:[#allocation3 + $0xa1] sm:$0xff]
        %v2117 = vld [vmem:[#allocation3 + $0xc1] sm:$0xff]
        %v2118 = vld [vmem:[#allocation3 + $0xe1] sm:$0xff]
        %v2119 = vperm.slane %v2058, 2
        %v2120 = vmul.f32 %v2111, %v2119
        %v2121 = vmul.f32 %v2112, %v2119
        %v2122 = vmul.f32 %v2113, %v2119
        %v2123 = vmul.f32 %v2114, %v2119
        %v2124 = vmul.f32 %v2115, %v2119
        %v2125 = vmul.f32 %v2116, %v2119
        %v2126 = vmul.f32 %v2117, %v2119
        %v2127 = vmul.f32 %v2118, %v2119
        %v2128 = vadd.f32 %v2103, %v2120
        %v2129 = vadd.f32 %v2104, %v2121
        %v2130 = vadd.f32 %v2105, %v2122
        %v2131 = vadd.f32 %v2106, %v2123
        %v2132 = vadd.f32 %v2107, %v2124
        %v2133 = vadd.f32 %v2108, %v2125
        %v2134 = vadd.f32 %v2109, %v2126
        %v2135 = vadd.f32 %v2110, %v2127
        %s2136 = scalar_lea.vmem [#allocation3], 288
        %v2137 = vld [vmem:[%s2136] sm:$0xff]
        %v2138 = vld [vmem:[%s2136 + $0x20] sm:$0xff]
        %v2139 = vld [vmem:[%s2136 + $0x40] sm:$0xff]
        %v2140 = vld [vmem:[%s2136 + $0x60] sm:$0xff]
        %v2141 = vld [vmem:[%s2136 + $0x80] sm:$0xff]
        %v2142 = vld [vmem:[%s2136 + $0xa0] sm:$0xff]
        %v2143 = vld [vmem:[%s2136 + $0xc0] sm:$0xff]
        %v2144 = vld [vmem:[%s2136 + $0xe0] sm:$0xff]
        %v2145 = vperm.slane %v2058, 3
        %v2146 = vmul.f32 %v2137, %v2145
        %v2147 = vmul.f32 %v2138, %v2145
        %v2148 = vmul.f32 %v2139, %v2145
        %v2149 = vmul.f32 %v2140, %v2145
        %v2150 = vmul.f32 %v2141, %v2145
        %v2151 = vmul.f32 %v2142, %v2145
        %v2152 = vmul.f32 %v2143, %v2145
        %v2153 = vmul.f32 %v2144, %v2145
        %v2154 = vadd.f32 %v2128, %v2146
        %v2155 = vadd.f32 %v2129, %v2147
        %v2156 = vadd.f32 %v2130, %v2148
        %v2157 = vadd.f32 %v2131, %v2149
        %v2158 = vadd.f32 %v2132, %v2150
        %v2159 = vadd.f32 %v2133, %v2151
        %v2160 = vadd.f32 %v2134, %v2152
        %v2161 = vadd.f32 %v2135, %v2153
        %s2162 = scalar_lea.vmem [#allocation3], 304
        %v2163 = vld [vmem:[%s2162] sm:$0xff]
        %v2164 = vld [vmem:[%s2162 + $0x20] sm:$0xff]
        %v2165 = vld [vmem:[%s2162 + $0x40] sm:$0xff]
        %v2166 = vld [vmem:[%s2162 + $0x60] sm:$0xff]
        %v2167 = vld [vmem:[%s2162 + $0x80] sm:$0xff]
        %v2168 = vld [vmem:[%s2162 + $0xa0] sm:$0xff]
        %v2169 = vld [vmem:[%s2162 + $0xc0] sm:$0xff]
        %v2170 = vld [vmem:[%s2162 + $0xe0] sm:$0xff]
        %v2171 = vperm.slane %v2058, 4
        %v2172 = vmul.f32 %v2163, %v2171
        %v2173 = vmul.f32 %v2164, %v2171
        %v2174 = vmul.f32 %v2165, %v2171
        %v2175 = vmul.f32 %v2166, %v2171
        %v2176 = vmul.f32 %v2167, %v2171
        %v2177 = vmul.f32 %v2168, %v2171
        %v2178 = vmul.f32 %v2169, %v2171
        %v2179 = vmul.f32 %v2170, %v2171
        %v2180 = vadd.f32 %v2154, %v2172
        %v2181 = vadd.f32 %v2155, %v2173
        %v2182 = vadd.f32 %v2156, %v2174
        %v2183 = vadd.f32 %v2157, %v2175
        %v2184 = vadd.f32 %v2158, %v2176
        %v2185 = vadd.f32 %v2159, %v2177
        %v2186 = vadd.f32 %v2160, %v2178
        %v2187 = vadd.f32 %v2161, %v2179
        %v2188 = vld [vmem:[%s2136 + $0x1] sm:$0xff]
        %v2189 = vld [vmem:[%s2136 + $0x21] sm:$0xff]
        %v2190 = vld [vmem:[%s2136 + $0x41] sm:$0xff]
        %v2191 = vld [vmem:[%s2136 + $0x61] sm:$0xff]
        %v2192 = vld [vmem:[%s2136 + $0x81] sm:$0xff]
        %v2193 = vld [vmem:[%s2136 + $0xa1] sm:$0xff]
        %v2194 = vld [vmem:[%s2136 + $0xc1] sm:$0xff]
        %v2195 = vld [vmem:[%s2136 + $0xe1] sm:$0xff]
        %v2196 = vperm.slane %v2058, 5
        %v2197 = vmul.f32 %v2188, %v2196
        %v2198 = vmul.f32 %v2189, %v2196
        %v2199 = vmul.f32 %v2190, %v2196
        %v2200 = vmul.f32 %v2191, %v2196
        %v2201 = vmul.f32 %v2192, %v2196
        %v2202 = vmul.f32 %v2193, %v2196
        %v2203 = vmul.f32 %v2194, %v2196
        %v2204 = vmul.f32 %v2195, %v2196
        %v2205 = vadd.f32 %v2180, %v2197
        %v2206 = vadd.f32 %v2181, %v2198
        %v2207 = vadd.f32 %v2182, %v2199
        %v2208 = vadd.f32 %v2183, %v2200
        %v2209 = vadd.f32 %v2184, %v2201
        %v2210 = vadd.f32 %v2185, %v2202
        %v2211 = vadd.f32 %v2186, %v2203
        %v2212 = vadd.f32 %v2187, %v2204
        %s2213 = scalar_lea.vmem [#allocation3], 32
        %v2214 = vld [vmem:[%s2213] sm:$0xff]
        %v2215 = vld [vmem:[%s2213 + $0x20] sm:$0xff]
        %v2216 = vld [vmem:[%s2213 + $0x40] sm:$0xff]
        %v2217 = vld [vmem:[%s2213 + $0x60] sm:$0xff]
        %v2218 = vld [vmem:[%s2213 + $0x80] sm:$0xff]
        %v2219 = vld [vmem:[%s2213 + $0xa0] sm:$0xff]
        %v2220 = vld [vmem:[%s2213 + $0xc0] sm:$0xff]
        %v2221 = vld [vmem:[%s2213 + $0xe0] sm:$0xff]
        %v2222 = vperm.slane %v2058, 6
        %v2223 = vmul.f32 %v2214, %v2222
        %v2224 = vmul.f32 %v2215, %v2222
        %v2225 = vmul.f32 %v2216, %v2222
        %v2226 = vmul.f32 %v2217, %v2222
        %v2227 = vmul.f32 %v2218, %v2222
        %v2228 = vmul.f32 %v2219, %v2222
        %v2229 = vmul.f32 %v2220, %v2222
        %v2230 = vmul.f32 %v2221, %v2222
        %v2231 = vadd.f32 %v2205, %v2223
        %v2232 = vadd.f32 %v2206, %v2224
        %v2233 = vadd.f32 %v2207, %v2225
        %v2234 = vadd.f32 %v2208, %v2226
        %v2235 = vadd.f32 %v2209, %v2227
        %v2236 = vadd.f32 %v2210, %v2228
        %v2237 = vadd.f32 %v2211, %v2229
        %v2238 = vadd.f32 %v2212, %v2230
        %s2239 = scalar_lea.vmem [#allocation3], 48
        %v2240 = vld [vmem:[%s2239] sm:$0xff]
        %v2241 = vld [vmem:[%s2239 + $0x20] sm:$0xff]
        %v2242 = vld [vmem:[%s2239 + $0x40] sm:$0xff]
        %v2243 = vld [vmem:[%s2239 + $0x60] sm:$0xff]
        %v2244 = vld [vmem:[%s2239 + $0x80] sm:$0xff]
        %v2245 = vld [vmem:[%s2239 + $0xa0] sm:$0xff]
        %v2246 = vld [vmem:[%s2239 + $0xc0] sm:$0xff]
        %v2247 = vld [vmem:[%s2239 + $0xe0] sm:$0xff]
        %v2248 = vperm.slane %v2058, 7
        %v2249 = vmul.f32 %v2240, %v2248
        %v2250 = vmul.f32 %v2241, %v2248
        %v2251 = vmul.f32 %v2242, %v2248
        %v2252 = vmul.f32 %v2243, %v2248
        %v2253 = vmul.f32 %v2244, %v2248
        %v2254 = vmul.f32 %v2245, %v2248
        %v2255 = vmul.f32 %v2246, %v2248
        %v2256 = vmul.f32 %v2247, %v2248
        %v2257 = vadd.f32 %v2231, %v2249
        %v2258 = vadd.f32 %v2232, %v2250
        %v2259 = vadd.f32 %v2233, %v2251
        %v2260 = vadd.f32 %v2234, %v2252
        %v2261 = vadd.f32 %v2235, %v2253
        %v2262 = vadd.f32 %v2236, %v2254
        %v2263 = vadd.f32 %v2237, %v2255
        %v2264 = vadd.f32 %v2238, %v2256
        %v2265 = vld [vmem:[%s2213 + $0x1] sm:$0xff]
        %v2266 = vld [vmem:[%s2213 + $0x21] sm:$0xff]
        %v2267 = vld [vmem:[%s2213 + $0x41] sm:$0xff]
        %v2268 = vld [vmem:[%s2213 + $0x61] sm:$0xff]
        %v2269 = vld [vmem:[%s2213 + $0x81] sm:$0xff]
        %v2270 = vld [vmem:[%s2213 + $0xa1] sm:$0xff]
        %v2271 = vld [vmem:[%s2213 + $0xc1] sm:$0xff]
        %v2272 = vld [vmem:[%s2213 + $0xe1] sm:$0xff]
        %v2273 = vperm.slane %v2059, 0
        %v2274 = vmul.f32 %v2265, %v2273
        %v2275 = vmul.f32 %v2266, %v2273
        %v2276 = vmul.f32 %v2267, %v2273
        %v2277 = vmul.f32 %v2268, %v2273
        %v2278 = vmul.f32 %v2269, %v2273
        %v2279 = vmul.f32 %v2270, %v2273
        %v2280 = vmul.f32 %v2271, %v2273
        %v2281 = vmul.f32 %v2272, %v2273
        %v2282 = vadd.f32 %v2257, %v2274
        %v2283 = vadd.f32 %v2258, %v2275
        %v2284 = vadd.f32 %v2259, %v2276
        %v2285 = vadd.f32 %v2260, %v2277
        %v2286 = vadd.f32 %v2261, %v2278
        %v2287 = vadd.f32 %v2262, %v2279
        %v2288 = vadd.f32 %v2263, %v2280
        %v2289 = vadd.f32 %v2264, %v2281
        %v2290 = vld [vmem:[%s6] sm:$0xff]
        %v2291 = vld [vmem:[%s6 + $0x8] sm:$0xff]
        %v2292 = vld [vmem:[%s7] sm:$0xff]
        %v2293 = vld [vmem:[%s7 + $0x8] sm:$0xff]
        %v2295 = vsel %vm1958, %v2292, 0
        %v2298 = vsel %vm1958, %v2293, 0
        %v2301 = vsel %vm1958, %v2282, 0
        %v2304 = vsel %vm1958, %v2283, 0
        %v2307 = vsel %vm1958, %v2284, 0
        %v2310 = vsel %vm1958, %v2285, 0
        %v2313 = vsel %vm1958, %v2286, 0
        %v2316 = vsel %vm1958, %v2287, 0
        %v2319 = vsel %vm1958, %v2288, 0
        %v2322 = vsel %vm1958, %v2289, 0
        %2324 = vmatpush.xpose.msra.mxu0 0.0
        %2325 = vmatpush.xpose.msra.mxu0 0.0
        %2326 = vmatpush.xpose.msra.mxu0 0.0
        %2327 = vmatpush.xpose.msra.mxu0 0.0
        %2328 = vmatpush.xpose.msra.mxu0 0.0
        %2329 = vmatpush.xpose.msra.mxu0 0.0
        %2330 = vmatpush.xpose.msra.mxu0 0.0
        %2331 = vmatpush.xpose.msra.mxu0 0.0
        %2332 = vmatpush.xpose.msra.mxu0 %v2322
        %2333 = vmatpush.xpose.msra.mxu0 %v2319
        %2334 = vmatpush.xpose.msra.mxu0 %v2316
        %2335 = vmatpush.xpose.msra.mxu0 %v2313
        %2336 = vmatpush.xpose.msra.mxu0 %v2310
        %2337 = vmatpush.xpose.msra.mxu0 %v2307
        %2338 = vmatpush.xpose.msra.mxu0 %v2304
        %2339 = vmatpush.xpose.msra.mxu0 %v2301
        %2340 = vmatmul.f32.gmra.mxu0 %v2295
        %v2341 = vpop.f32.mrf.mxu0
        %v2342 = vadd.f32 0.0, %v2341
        %2343 = vmatmul.f32.gmra.mxu0 %v2298
        %v2344 = vpop.f32.mrf.mxu0
        %v2345 = vadd.f32 0.0, %v2344
        %2346 = vdwg.mxu0
        %v2348 = vsel %vm766, %v2290, 0
        %v2351 = vsel %vm766, %v2291, 0
        %v2354 = vsel %vm766, %v1072, 0
        %v2357 = vsel %vm766, %v1073, 0
        %v2360 = vsel %vm766, %v1074, 0
        %v2363 = vsel %vm766, %v1075, 0
        %v2366 = vsel %vm766, %v1076, 0
        %v2369 = vsel %vm766, %v1077, 0
        %v2372 = vsel %vm766, %v1078, 0
        %v2375 = vsel %vm766, %v1079, 0
        %2377 = vmatpush.xpose.msra.mxu0 0.0
        %2378 = vmatpush.xpose.msra.mxu0 0.0
        %2379 = vmatpush.xpose.msra.mxu0 0.0
        %2380 = vmatpush.xpose.msra.mxu0 0.0
        %2381 = vmatpush.xpose.msra.mxu0 0.0
        %2382 = vmatpush.xpose.msra.mxu0 0.0
        %2383 = vmatpush.xpose.msra.mxu0 0.0
        %2384 = vmatpush.xpose.msra.mxu0 0.0
        %2385 = vmatpush.xpose.msra.mxu0 %v2375
        %2386 = vmatpush.xpose.msra.mxu0 %v2372
        %2387 = vmatpush.xpose.msra.mxu0 %v2369
        %2388 = vmatpush.xpose.msra.mxu0 %v2366
        %2389 = vmatpush.xpose.msra.mxu0 %v2363
        %2390 = vmatpush.xpose.msra.mxu0 %v2360
        %2391 = vmatpush.xpose.msra.mxu0 %v2357
        %2392 = vmatpush.xpose.msra.mxu0 %v2354
        %2393 = vmatmul.f32.gmra.mxu0 %v2348
        %v2394 = vpop.f32.mrf.mxu0
        %v2395 = vadd.f32 %v2342, %v2394
        %2396 = vmatmul.f32.gmra.mxu0 %v2351
        %v2397 = vpop.f32.mrf.mxu0
        %v2398 = vadd.f32 %v2345, %v2397
        %2399 = vdwg.mxu0
        %v2400 = vld [vmem:[%s8] sm:$0xff]
        %v2401 = vld [vmem:[%s8 + $0x8] sm:$0xff]
        %2403 = vset.pattern.permute.xlu0 0
        %2404 = vperm.xlu0 %2403, %v2400
        %v2405 = vpop.permute.xlu0 %2404
        %2408 = vset.pattern.permute.xlu0 0
        %2409 = vperm.xlu0 %2408, %v2401
        %v2410 = vpop.permute.xlu0 %2409
        %v2412 = vadd.f32 %v2395, %v2405
        %v2413 = vadd.f32 %v2398, %v2410
        %v2414 = vadd.f32 %v2412, 3.0
        %v2415 = vadd.f32 %v2413, 3.0
        %v2416 = vmax.f32 %v2414, 0.0
        %v2417 = vmax.f32 %v2415, 0.0
        %v2418 = vmin.f32 %v2416, 6.0
        %v2419 = vmin.f32 %v2417, 6.0
        %v2420 = vmul.f32 %v2412, %v2418
        %v2421 = vmul.f32 %v2413, %v2419
        %v2422 = vmul.f32 %v2420, 0.16666667
        %v2423 = vmul.f32 %v2421, 0.16666667
        %vm2424 = vcmask 523264
        %2425 = vst.msk [vmem:[%s701] sm:$0xff] %vm2424, %v2422
        %2426 = vst.msk [vmem:[%s701 + $0x8] sm:$0xff] %vm2424, %v2423
        %p2427 = scmp.lt.s32.totalorder %s24, 1
        %s2428 = scalar_select %p2427, %s24, 1
        %p2429 = scmp.lt.s32.totalorder %s25, 0
        %s2430 = scalar_select %p2429, %s25, 0
        %s2431 = smul.addr %s2428, 2
        %s2432 = sadd.s32 %s2430, %s2431
        %s2433 = smul.addr %s2432, 8
        %s2434 = scalar_lea.vmem %s9, %s2433
        // Predicated region
        $region151: #{shuffle_v2_downsampling.1} parent=137 // pred_check
          %p2435 = pneg %p259
        $region152: #{shuffle_v2_downsampling.1} parent=137 // pred_check_branch
          %2437 = sbr.rel (%p2435) target = $region154
        $region153: #{shuffle_v2_downsampling.1} parent=137 // pred_region
          _
        $region154: #{shuffle_v2_downsampling.1} parent=137 // pred_fallthru
          _
      $region138: #{shuffle_v2_downsampling.1} parent=5 // pred_fallthru
        _
      %p2438 = scmp.le.s32.totalorder 2, %s15
      // Predicated region
      $region155: #{shuffle_v2_downsampling.1} parent=5 // pred_check
        %p2439 = pneg %p2438
      $region156: #{shuffle_v2_downsampling.1} parent=5 // pred_check_branch
        %2441 = sbr.rel (%p2439) target = $region158
      $region157: #{shuffle_v2_downsampling.1} parent=5 // pred_region
        %s2442 = ssub.s32 %s15, 2
        // Predicated region
        $region159: #{shuffle_v2_downsampling.1} parent=157 // pred_check
          %p2443 = pneg %p265
        $region160: #{shuffle_v2_downsampling.1} parent=157 // pred_check_branch
          %2445 = sbr.rel (%p2443) target = $region162
        $region161: #{shuffle_v2_downsampling.1} parent=157 // pred_region
          %p2446 = scmp.lt.s32.totalorder %s26, 1
          %s2447 = scalar_select %p2446, %s26, 1
          %p2448 = scmp.lt.s32.totalorder %s27, 0
          %s2449 = scalar_select %p2448, %s27, 0
          %s2450 = smul.addr %s2447, 2
          %s2451 = sadd.s32 %s2449, %s2450
          %s2452 = smul.addr %s2451, 8
          %s2453 = scalar_lea.vmem %s9, %s2452
        $region162: #{shuffle_v2_downsampling.1} parent=157 // pred_fallthru
          _
      $region158: #{shuffle_v2_downsampling.1} parent=5 // pred_fallthru
        _
    $region6: #{shuffle_v2_downsampling.1} parent=1 // loop_footer
      %s19 = sadd.s32 1, %s15
    $region7: #{shuffle_v2_downsampling.1} parent=1 // loop_footer_branch
      %14 = sbr.rel target = $region3
    $region8: #{shuffle_v2_downsampling.1} parent=1 // loop_exit
      _

</llo_original>
